<compile_context>
chip_gen: v7x
topology: tpu7x:2x2x1
jax: 0.10.0
libtpu: 0.0.40
codegen_flags: <defaults>
</compile_context>

<pallas_src>
import functools
import math

import jax
import jax.numpy as jnp
import numpy as np
from jax.experimental import pallas as pl
from jax.experimental.pallas import tpu as pltpu


def _gelu_tanh(x):
    c = math.sqrt(2.0 / math.pi)
    return 0.5 * x * (1.0 + jnp.tanh(c * (x + 0.044715 * x * x * x)))


# ---------------------------------------------------------------------------
# Kernels
# ---------------------------------------------------------------------------
def _linear_kernel(x_ref, w_ref, b_ref, o_ref):
    o_ref[...] = (jnp.dot(x_ref[...], w_ref[...],
                          preferred_element_type=jnp.float32) + b_ref[...])


def _mha_kernel(x_ref, wq_ref, wk_ref, wv_ref, bq_ref, bk_ref, bv_ref, o_ref,
                *, num_heads, scale):
    x = x_ref[0, 0]                                            # (L, H)
    q = jnp.dot(x, wq_ref[0], preferred_element_type=jnp.float32) + bq_ref[0]
    k = jnp.dot(x, wk_ref[0], preferred_element_type=jnp.float32) + bk_ref[0]
    v = jnp.dot(x, wv_ref[0], preferred_element_type=jnp.float32) + bv_ref[0]
    H = x.shape[1]
    hd = H // num_heads
    ctx = []
    for h in range(num_heads):                                 # static unroll
        qh = q[:, h * hd:(h + 1) * hd]
        kh = k[:, h * hd:(h + 1) * hd]
        vh = v[:, h * hd:(h + 1) * hd]
        s = jnp.dot(qh, kh.T, preferred_element_type=jnp.float32) * scale
        s = s - jnp.max(s, axis=-1, keepdims=True)
        e = jnp.exp(s)
        p = e / jnp.sum(e, axis=-1, keepdims=True)
        ctx.append(jnp.dot(p, vh, preferred_element_type=jnp.float32))
    o_ref[0, 0] = jnp.concatenate(ctx, axis=-1)                # single dense store


def _dense_residual_ln_kernel(x_ref, res_ref, w_ref, b_ref, g_ref, beta_ref,
                              o_ref, *, eps):
    x = x_ref[0]                                               # (S, H)
    h = jnp.dot(x, w_ref[...], preferred_element_type=jnp.float32) + b_ref[...]
    h = h + res_ref[0]
    m = jnp.mean(h, axis=-1, keepdims=True)
    c = h - m
    var = jnp.mean(c * c, axis=-1, keepdims=True)
    o_ref[0] = c * jax.lax.rsqrt(var + eps) * g_ref[...] + beta_ref[...]


def _ffn_kernel(x_ref, w1_ref, b1_ref, w2_ref, b2_ref, g_ref, beta_ref,
                o_ref, *, eps):
    x = x_ref[0]                                               # (S, H)
    inter = jnp.dot(x, w1_ref[...], preferred_element_type=jnp.float32) + b1_ref[...]
    inter = _gelu_tanh(inter)
    h = jnp.dot(inter, w2_ref[...], preferred_element_type=jnp.float32) + b2_ref[...]
    h = h + x
    m = jnp.mean(h, axis=-1, keepdims=True)
    c = h - m
    var = jnp.mean(c * c, axis=-1, keepdims=True)
    o_ref[0] = c * jax.lax.rsqrt(var + eps) * g_ref[...] + beta_ref[...]


# ---------------------------------------------------------------------------
# pallas_call wrappers
# ---------------------------------------------------------------------------
def linear_pallas(x, w, b):
    M, K = x.shape
    N = w.shape[1]
    return pl.pallas_call(
        _linear_kernel,
        out_shape=jax.ShapeDtypeStruct((M, N), jnp.float32),
        grid=(1,),
        in_specs=[pl.BlockSpec((M, K), lambda i: (0, 0)),
                  pl.BlockSpec((K, N), lambda i: (0, 0)),
                  pl.BlockSpec((1, N), lambda i: (0, 0))],
        out_specs=pl.BlockSpec((M, N), lambda i: (0, 0)),
        compiler_params=pltpu.CompilerParams(dimension_semantics=("arbitrary",)),
    )(x, w, b.reshape(1, N))


def mha_pallas(x, wq, wk, wv, bq, bk, bv, *, num_heads):
    # x: (B, G, L, H); weights: (G, H, H); biases: (G, 1, H)
    B, G, L, H = x.shape
    hd = H // num_heads
    kernel = functools.partial(_mha_kernel, num_heads=num_heads,
                               scale=1.0 / math.sqrt(hd))
    return pl.pallas_call(
        kernel,
        out_shape=jax.ShapeDtypeStruct((B, G, L, H), jnp.float32),
        grid=(G, B),
        in_specs=[
            pl.BlockSpec((1, 1, L, H), lambda g, b_: (b_, g, 0, 0)),
            pl.BlockSpec((1, H, H), lambda g, b_: (g, 0, 0)),
            pl.BlockSpec((1, H, H), lambda g, b_: (g, 0, 0)),
            pl.BlockSpec((1, H, H), lambda g, b_: (g, 0, 0)),
            pl.BlockSpec((1, 1, H), lambda g, b_: (g, 0, 0)),
            pl.BlockSpec((1, 1, H), lambda g, b_: (g, 0, 0)),
            pl.BlockSpec((1, 1, H), lambda g, b_: (g, 0, 0)),
        ],
        out_specs=pl.BlockSpec((1, 1, L, H), lambda g, b_: (b_, g, 0, 0)),
        compiler_params=pltpu.CompilerParams(
            dimension_semantics=("parallel", "parallel")),
    )(x, wq, wk, wv, bq, bk, bv)


def dense_residual_ln_pallas(x, residual, w, b, gamma, beta, eps):
    B, S, H = x.shape
    kernel = functools.partial(_dense_residual_ln_kernel, eps=eps)
    return pl.pallas_call(
        kernel,
        out_shape=jax.ShapeDtypeStruct((B, S, H), jnp.float32),
        grid=(B,),
        in_specs=[
            pl.BlockSpec((1, S, H), lambda b_: (b_, 0, 0)),
            pl.BlockSpec((1, S, H), lambda b_: (b_, 0, 0)),
            pl.BlockSpec((H, H), lambda b_: (0, 0)),
            pl.BlockSpec((1, H), lambda b_: (0, 0)),
            pl.BlockSpec((1, H), lambda b_: (0, 0)),
            pl.BlockSpec((1, H), lambda b_: (0, 0)),
        ],
        out_specs=pl.BlockSpec((1, S, H), lambda b_: (b_, 0, 0)),
        compiler_params=pltpu.CompilerParams(dimension_semantics=("parallel",)),
    )(x, residual, w, b.reshape(1, H), gamma.reshape(1, H), beta.reshape(1, H))


def ffn_pallas(x, w1, b1, w2, b2, gamma, beta, eps):
    B, S, H = x.shape
    I = w1.shape[1]
    kernel = functools.partial(_ffn_kernel, eps=eps)
    return pl.pallas_call(
        kernel,
        out_shape=jax.ShapeDtypeStruct((B, S, H), jnp.float32),
        grid=(B,),
        in_specs=[
            pl.BlockSpec((1, S, H), lambda b_: (b_, 0, 0)),
            pl.BlockSpec((H, I), lambda b_: (0, 0)),
            pl.BlockSpec((1, I), lambda b_: (0, 0)),
            pl.BlockSpec((I, H), lambda b_: (0, 0)),
            pl.BlockSpec((1, H), lambda b_: (0, 0)),
            pl.BlockSpec((1, H), lambda b_: (0, 0)),
            pl.BlockSpec((1, H), lambda b_: (0, 0)),
        ],
        out_specs=pl.BlockSpec((1, S, H), lambda b_: (b_, 0, 0)),
        compiler_params=pltpu.CompilerParams(dimension_semantics=("parallel",)),
    )(x, w1, b1.reshape(1, I), w2, b2.reshape(1, H),
      gamma.reshape(1, H), beta.reshape(1, H))


# ---------------------------------------------------------------------------
# Full AntiLayerSegment forward (Pallas kernels + thin glue)
# ---------------------------------------------------------------------------
def anti_layer_segment(hidden_states, p, *, num_heads, segments, segment_size, eps):
    B, S, H = hidden_states.shape
    L = segment_size + 1
    assert S == 1 + segments * L

    # Blord = Linear(hidden[:, 0])
    blord = linear_pallas(hidden_states[:, 0, :], p['w_blord'], p['b_blord'])  # (B,H)

    # Segments are contiguous back-to-back slices starting at index 1:
    # hidden[:, 1 + i*L : 1 + (i+1)*L]  ->  one reshape, no gather / one-hot.
    x_seg = hidden_states[:, 1:1 + segments * L].reshape(B, segments, L, H)
    seg_ctx = mha_pallas(
        x_seg, p['wq'], p['wk'], p['wv'],
        p['bq'].reshape(segments, 1, H),
        p['bk'].reshape(segments, 1, H),
        p['bv'].reshape(segments, 1, H),
        num_heads=num_heads)                                   # (B, segments, L, H)

    # lords attention over [Blord, first token of each segment context]
    lords_in = jnp.concatenate([blord[:, None, :], seg_ctx[:, :, 0, :]], axis=1)
    lords_ctx = mha_pallas(
        lords_in[:, None],                                     # (B, 1, segs+1, H)
        p['lwq'][None], p['lwk'][None], p['lwv'][None],
        p['lbq'].reshape(1, 1, H),
        p['lbk'].reshape(1, 1, H),
        p['lbv'].reshape(1, 1, H),
        num_heads=num_heads)[:, 0]                             # (B, segs+1, H)

    # scatter lord tokens back to segment starts, rebuild the full sequence
    seg_full = seg_ctx.at[:, :, 0, :].set(lords_ctx[:, 1:, :])
    self_outputs = jnp.concatenate(
        [lords_ctx[:, 0:1, :], seg_full.reshape(B, segments * L, H)], axis=1)

    # AntiSelfOutput: dense + residual(hidden_states) + LayerNorm (fused)
    attn_out = dense_residual_ln_pallas(self_outputs, hidden_states,
                                        p['w_so'], p['b_so'],
                                        p['ln1_w'], p['ln1_b'], eps)

    # feed_forward: intermediate (GELU) + output dense + residual + LayerNorm (fused)
    layer_out = ffn_pallas(attn_out, p['w_i'], p['b_i'], p['w_o'], p['b_o'],
                           p['ln2_w'], p['ln2_b'], eps)
    return layer_out, self_outputs


# ---------------------------------------------------------------------------
# Pure-JAX reference (mirrors the torch module, highest matmul precision)
# ---------------------------------------------------------------------------
def reference(hidden_states, p, *, num_heads, segments, segment_size, eps):
    HIGH = jax.lax.Precision.HIGHEST
    B, S, H = hidden_states.shape
    hd = H // num_heads
    L = segment_size + 1

    def linear(x, w, b):
        return jnp.dot(x, w, precision=HIGH) + b

    def layer_norm(x, g, b):
        m = jnp.mean(x, axis=-1, keepdims=True)
        v = jnp.mean((x - m) ** 2, axis=-1, keepdims=True)
        return (x - m) * jax.lax.rsqrt(v + eps) * g + b

    def mha(x, wq, bq, wk, bk, wv, bv):
        Bx, Lx, _ = x.shape
        split = lambda t: t.reshape(Bx, Lx, num_heads, hd).transpose(0, 2, 1, 3)
        q, k, v = split(linear(x, wq, bq)), split(linear(x, wk, bk)), split(linear(x, wv, bv))
        s = jnp.einsum('bhqd,bhkd->bhqk', q, k, precision=HIGH) / math.sqrt(hd)
        pr = jax.nn.softmax(s, axis=-1)
        ctx = jnp.einsum('bhqk,bhkd->bhqd', pr, v, precision=HIGH)
        return ctx.transpose(0, 2, 1, 3).reshape(Bx, Lx, H)

    blord = linear(hidden_states[:, 0], p['w_blord'], p['b_blord'])
    seg_outs = []
    for i in range(segments):
        xs = hidden_states[:, 1 + i * L: 1 + (i + 1) * L]
        seg_outs.append(mha(xs, p['wq'][i], p['bq'][i], p['wk'][i], p['bk'][i],
                            p['wv'][i], p['bv'][i]))
    lords_in = jnp.concatenate([blord[:, None]] + [c[:, 0:1] for c in seg_outs], axis=1)
    lords_out = mha(lords_in, p['lwq'], p['lbq'], p['lwk'], p['lbk'],
                    p['lwv'], p['lbv'])
    pieces = [lords_out[:, 0:1]]
    for i in range(segments):
        pieces.append(lords_out[:, i + 1:i + 2])
        pieces.append(seg_outs[i][:, 1:])
    self_out = jnp.concatenate(pieces, axis=1)
    attn_out = layer_norm(linear(self_out, p['w_so'], p['b_so']) + hidden_states,
                          p['ln1_w'], p['ln1_b'])
    inter = _gelu_tanh(linear(attn_out, p['w_i'], p['b_i']))
    layer_out = layer_norm(linear(inter, p['w_o'], p['b_o']) + attn_out,
                           p['ln2_w'], p['ln2_b'])
    return layer_out, self_out


if __name__ == "__main__":
    # Small synthetic config mirroring AntiLayerSegment shapes.
    B = 2
    hidden_size = 32
    num_heads = 4
    intermediate_size = 128        # 4 * hidden_size
    segments = 2
    segment_size = 7
    L = segment_size + 1
    S = 1 + segments * L           # 17
    eps = 1e-12

    H, I = hidden_size, intermediate_size
    ks = iter(jax.random.split(jax.random.PRNGKey(0), 40))

    def rnd(shape, s):
        return s * jax.random.normal(next(ks), shape, jnp.float32)

    hidden_states = rnd((B, S, H), 1.0)
    p = dict(
        w_blord=rnd((H, H), 0.15), b_blord=rnd((H,), 0.05),
        wq=rnd((segments, H, H), 0.15), bq=rnd((segments, H), 0.05),
        wk=rnd((segments, H, H), 0.15), bk=rnd((segments, H), 0.05),
        wv=rnd((segments, H, H), 0.15), bv=rnd((segments, H), 0.05),
        lwq=rnd((H, H), 0.15), lbq=rnd((H,), 0.05),
        lwk=rnd((H, H), 0.15), lbk=rnd((H,), 0.05),
        lwv=rnd((H, H), 0.15), lbv=rnd((H,), 0.05),
        w_so=rnd((H, H), 0.15), b_so=rnd((H,), 0.05),
        ln1_w=1.0 + rnd((H,), 0.1), ln1_b=rnd((H,), 0.05),
        w_i=rnd((H, I), 0.15), b_i=rnd((I,), 0.05),
        w_o=rnd((I, H), 0.15), b_o=rnd((H,), 0.05),
        ln2_w=1.0 + rnd((H,), 0.1), ln2_b=rnd((H,), 0.05),
    )

    fwd = jax.jit(functools.partial(anti_layer_segment, num_heads=num_heads,
                                    segments=segments, segment_size=segment_size,
                                    eps=eps))
    layer_out, self_out = fwd(hidden_states, p)
    layer_out = jax.block_until_ready(layer_out)
    self_out = jax.block_until_ready(self_out)

    ref_layer, ref_self = reference(hidden_states, p, num_heads=num_heads,
                                    segments=segments, segment_size=segment_size,
                                    eps=eps)

    # Tolerance absorbs MXU f32 multi-pass vs HIGHEST-precision XLA differences;
    # structural errors would be O(1).
    np.testing.assert_allclose(np.asarray(self_out), np.asarray(ref_self),
                               rtol=1e-2, atol=1e-2)
    np.testing.assert_allclose(np.asarray(layer_out), np.asarray(ref_layer),
                               rtol=1e-2, atol=1e-2)
    print("KERNEL_OK")
</pallas_src>

<mosaic_0001>
module attributes {stable_mosaic.version = 11 : i64} {
  func.func @_mha_kernel(%arg0: i32, %arg1: i32, %arg2: memref<1x1x8x32xf32, #tpu.memory_space<vmem>>, %arg3: memref<1x32x32xf32, #tpu.memory_space<vmem>>, %arg4: memref<1x32x32xf32, #tpu.memory_space<vmem>>, %arg5: memref<1x32x32xf32, #tpu.memory_space<vmem>>, %arg6: memref<1x1x32xf32, #tpu.memory_space<vmem>>, %arg7: memref<1x1x32xf32, #tpu.memory_space<vmem>>, %arg8: memref<1x1x32xf32, #tpu.memory_space<vmem>>, %arg9: memref<1x1x8x32xf32, #tpu.memory_space<vmem>>) attributes {dimension_semantics = [#tpu.dimension_semantics<parallel>, #tpu.dimension_semantics<parallel>], iteration_bounds = array<i64: 2, 2>, scalar_prefetch = 0 : i64, scratch_operands = 0 : i64, tpu.core_type = #tpu.core_type<tc>, window_params = [{transform_indices = @transform_0, window_bounds = array<i64: 1, 1, 8, 32>}, {transform_indices = @transform_1, window_bounds = array<i64: 1, 32, 32>}, {transform_indices = @transform_2, window_bounds = array<i64: 1, 32, 32>}, {transform_indices = @transform_3, window_bounds = array<i64: 1, 32, 32>}, {transform_indices = @transform_4, window_bounds = array<i64: 1, 1, 32>}, {transform_indices = @transform_5, window_bounds = array<i64: 1, 1, 32>}, {transform_indices = @transform_6, window_bounds = array<i64: 1, 1, 32>}, {transform_indices = @transform_7, window_bounds = array<i64: 1, 1, 8, 32>}]} {
    %c0 = arith.constant 0 : index
    %c0_0 = arith.constant 0 : index
    %c0_1 = arith.constant 0 : index
    %c0_2 = arith.constant 0 : index
    %0 = vector.load %arg2[%c0, %c0_0, %c0_1, %c0_2] : memref<1x1x8x32xf32, #tpu.memory_space<vmem>>, vector<1x1x8x32xf32>
    %1 = vector.shape_cast %0 : vector<1x1x8x32xf32> to vector<8x32xf32>
    %c0_3 = arith.constant 0 : index
    %c0_4 = arith.constant 0 : index
    %c0_5 = arith.constant 0 : index
    %2 = vector.load %arg3[%c0_3, %c0_4, %c0_5] : memref<1x32x32xf32, #tpu.memory_space<vmem>>, vector<1x32x32xf32>
    %3 = vector.shape_cast %2 : vector<1x32x32xf32> to vector<32x32xf32>
    %cst = arith.constant dense<0.000000e+00> : vector<8x32xf32>
    %4 = tpu.matmul %1, %3, %cst {dimension_numbers = #tpu.dot_dimension_numbers<[1], [0], [0], [1], [0, 0, 1, 1], [], []>} : vector<8x32xf32>, vector<32x32xf32>, vector<8x32xf32> -> vector<8x32xf32>
    %c0_6 = arith.constant 0 : index
    %c0_7 = arith.constant 0 : index
    %c0_8 = arith.constant 0 : index
    %5 = vector.load %arg6[%c0_6, %c0_7, %c0_8] : memref<1x1x32xf32, #tpu.memory_space<vmem>>, vector<1x1x32xf32>
    %6 = vector.shape_cast %5 : vector<1x1x32xf32> to vector<1x32xf32>
    %7 = vector.broadcast %6 : vector<1x32xf32> to vector<8x32xf32>
    %8 = arith.addf %4, %7 : vector<8x32xf32>
    %c0_9 = arith.constant 0 : index
    %c0_10 = arith.constant 0 : index
    %c0_11 = arith.constant 0 : index
    %9 = vector.load %arg4[%c0_9, %c0_10, %c0_11] : memref<1x32x32xf32, #tpu.memory_space<vmem>>, vector<1x32x32xf32>
    %10 = vector.shape_cast %9 : vector<1x32x32xf32> to vector<32x32xf32>
    %cst_12 = arith.constant dense<0.000000e+00> : vector<8x32xf32>
    %11 = tpu.matmul %1, %10, %cst_12 {dimension_numbers = #tpu.dot_dimension_numbers<[1], [0], [0], [1], [0, 0, 1, 1], [], []>} : vector<8x32xf32>, vector<32x32xf32>, vector<8x32xf32> -> vector<8x32xf32>
    %c0_13 = arith.constant 0 : index
    %c0_14 = arith.constant 0 : index
    %c0_15 = arith.constant 0 : index
    %12 = vector.load %arg7[%c0_13, %c0_14, %c0_15] : memref<1x1x32xf32, #tpu.memory_space<vmem>>, vector<1x1x32xf32>
    %13 = vector.shape_cast %12 : vector<1x1x32xf32> to vector<1x32xf32>
    %14 = vector.broadcast %13 : vector<1x32xf32> to vector<8x32xf32>
    %15 = arith.addf %11, %14 : vector<8x32xf32>
    %c0_16 = arith.constant 0 : index
    %c0_17 = arith.constant 0 : index
    %c0_18 = arith.constant 0 : index
    %16 = vector.load %arg5[%c0_16, %c0_17, %c0_18] : memref<1x32x32xf32, #tpu.memory_space<vmem>>, vector<1x32x32xf32>
    %17 = vector.shape_cast %16 : vector<1x32x32xf32> to vector<32x32xf32>
    %cst_19 = arith.constant dense<0.000000e+00> : vector<8x32xf32>
    %18 = tpu.matmul %1, %17, %cst_19 {dimension_numbers = #tpu.dot_dimension_numbers<[1], [0], [0], [1], [0, 0, 1, 1], [], []>} : vector<8x32xf32>, vector<32x32xf32>, vector<8x32xf32> -> vector<8x32xf32>
    %c0_20 = arith.constant 0 : index
    %c0_21 = arith.constant 0 : index
    %c0_22 = arith.constant 0 : index
    %19 = vector.load %arg8[%c0_20, %c0_21, %c0_22] : memref<1x1x32xf32, #tpu.memory_space<vmem>>, vector<1x1x32xf32>
    %20 = vector.shape_cast %19 : vector<1x1x32xf32> to vector<1x32xf32>
    %21 = vector.broadcast %20 : vector<1x32xf32> to vector<8x32xf32>
    %22 = arith.addf %18, %21 : vector<8x32xf32>
    %23 = vector.extract_strided_slice %8 {offsets = [0, 0], sizes = [8, 8], strides = [1, 1]} : vector<8x32xf32> to vector<8x8xf32>
    %24 = vector.extract_strided_slice %15 {offsets = [0, 0], sizes = [8, 8], strides = [1, 1]} : vector<8x32xf32> to vector<8x8xf32>
    %25 = vector.extract_strided_slice %22 {offsets = [0, 0], sizes = [8, 8], strides = [1, 1]} : vector<8x32xf32> to vector<8x8xf32>
    %26 = tpu.transpose %24, [1, 0] : vector<8x8xf32> -> vector<8x8xf32>
    %cst_23 = arith.constant dense<0.000000e+00> : vector<8x8xf32>
    %27 = tpu.matmul %23, %26, %cst_23 {dimension_numbers = #tpu.dot_dimension_numbers<[1], [0], [0], [1], [0, 0, 1, 1], [], []>} : vector<8x8xf32>, vector<8x8xf32>, vector<8x8xf32> -> vector<8x8xf32>
    %cst_24 = arith.constant 0.353553385 : f32
    %28 = vector.broadcast %cst_24 : f32 to vector<8x8xf32>
    %29 = arith.mulf %27, %28 : vector<8x8xf32>
    %cst_25 = arith.constant dense<0xFF800000> : vector<8xf32>
    %30 = vector.multi_reduction <maximumf>, %29, %cst_25 [1] : vector<8x8xf32> to vector<8xf32>
    %31 = vector.shape_cast %30 : vector<8xf32> to vector<8x1xf32>
    %32 = vector.broadcast %31 : vector<8x1xf32> to vector<8x8xf32>
    %33 = arith.subf %29, %32 : vector<8x8xf32>
    %34 = math.exp %33 : vector<8x8xf32>
    %cst_26 = arith.constant dense<0.000000e+00> : vector<8xf32>
    %35 = vector.multi_reduction <add>, %34, %cst_26 [1] : vector<8x8xf32> to vector<8xf32>
    %36 = vector.shape_cast %35 : vector<8xf32> to vector<8x1xf32>
    %37 = vector.broadcast %36 : vector<8x1xf32> to vector<8x8xf32>
    %38 = arith.divf %34, %37 : vector<8x8xf32>
    %cst_27 = arith.constant dense<0.000000e+00> : vector<8x8xf32>
    %39 = tpu.matmul %38, %25, %cst_27 {dimension_numbers = #tpu.dot_dimension_numbers<[1], [0], [0], [1], [0, 0, 1, 1], [], []>} : vector<8x8xf32>, vector<8x8xf32>, vector<8x8xf32> -> vector<8x8xf32>
    %40 = vector.extract_strided_slice %8 {offsets = [0, 8], sizes = [8, 8], strides = [1, 1]} : vector<8x32xf32> to vector<8x8xf32>
    %41 = vector.extract_strided_slice %15 {offsets = [0, 8], sizes = [8, 8], strides = [1, 1]} : vector<8x32xf32> to vector<8x8xf32>
    %42 = vector.extract_strided_slice %22 {offsets = [0, 8], sizes = [8, 8], strides = [1, 1]} : vector<8x32xf32> to vector<8x8xf32>
    %43 = tpu.transpose %41, [1, 0] : vector<8x8xf32> -> vector<8x8xf32>
    %cst_28 = arith.constant dense<0.000000e+00> : vector<8x8xf32>
    %44 = tpu.matmul %40, %43, %cst_28 {dimension_numbers = #tpu.dot_dimension_numbers<[1], [0], [0], [1], [0, 0, 1, 1], [], []>} : vector<8x8xf32>, vector<8x8xf32>, vector<8x8xf32> -> vector<8x8xf32>
    %cst_29 = arith.constant 0.353553385 : f32
    %45 = vector.broadcast %cst_29 : f32 to vector<8x8xf32>
    %46 = arith.mulf %44, %45 : vector<8x8xf32>
    %cst_30 = arith.constant dense<0xFF800000> : vector<8xf32>
    %47 = vector.multi_reduction <maximumf>, %46, %cst_30 [1] : vector<8x8xf32> to vector<8xf32>
    %48 = vector.shape_cast %47 : vector<8xf32> to vector<8x1xf32>
    %49 = vector.broadcast %48 : vector<8x1xf32> to vector<8x8xf32>
    %50 = arith.subf %46, %49 : vector<8x8xf32>
    %51 = math.exp %50 : vector<8x8xf32>
    %cst_31 = arith.constant dense<0.000000e+00> : vector<8xf32>
    %52 = vector.multi_reduction <add>, %51, %cst_31 [1] : vector<8x8xf32> to vector<8xf32>
    %53 = vector.shape_cast %52 : vector<8xf32> to vector<8x1xf32>
    %54 = vector.broadcast %53 : vector<8x1xf32> to vector<8x8xf32>
    %55 = arith.divf %51, %54 : vector<8x8xf32>
    %cst_32 = arith.constant dense<0.000000e+00> : vector<8x8xf32>
    %56 = tpu.matmul %55, %42, %cst_32 {dimension_numbers = #tpu.dot_dimension_numbers<[1], [0], [0], [1], [0, 0, 1, 1], [], []>} : vector<8x8xf32>, vector<8x8xf32>, vector<8x8xf32> -> vector<8x8xf32>
    %57 = vector.extract_strided_slice %8 {offsets = [0, 16], sizes = [8, 8], strides = [1, 1]} : vector<8x32xf32> to vector<8x8xf32>
    %58 = vector.extract_strided_slice %15 {offsets = [0, 16], sizes = [8, 8], strides = [1, 1]} : vector<8x32xf32> to vector<8x8xf32>
    %59 = vector.extract_strided_slice %22 {offsets = [0, 16], sizes = [8, 8], strides = [1, 1]} : vector<8x32xf32> to vector<8x8xf32>
    %60 = tpu.transpose %58, [1, 0] : vector<8x8xf32> -> vector<8x8xf32>
    %cst_33 = arith.constant dense<0.000000e+00> : vector<8x8xf32>
    %61 = tpu.matmul %57, %60, %cst_33 {dimension_numbers = #tpu.dot_dimension_numbers<[1], [0], [0], [1], [0, 0, 1, 1], [], []>} : vector<8x8xf32>, vector<8x8xf32>, vector<8x8xf32> -> vector<8x8xf32>
    %cst_34 = arith.constant 0.353553385 : f32
    %62 = vector.broadcast %cst_34 : f32 to vector<8x8xf32>
    %63 = arith.mulf %61, %62 : vector<8x8xf32>
    %cst_35 = arith.constant dense<0xFF800000> : vector<8xf32>
    %64 = vector.multi_reduction <maximumf>, %63, %cst_35 [1] : vector<8x8xf32> to vector<8xf32>
    %65 = vector.shape_cast %64 : vector<8xf32> to vector<8x1xf32>
    %66 = vector.broadcast %65 : vector<8x1xf32> to vector<8x8xf32>
    %67 = arith.subf %63, %66 : vector<8x8xf32>
    %68 = math.exp %67 : vector<8x8xf32>
    %cst_36 = arith.constant dense<0.000000e+00> : vector<8xf32>
    %69 = vector.multi_reduction <add>, %68, %cst_36 [1] : vector<8x8xf32> to vector<8xf32>
    %70 = vector.shape_cast %69 : vector<8xf32> to vector<8x1xf32>
    %71 = vector.broadcast %70 : vector<8x1xf32> to vector<8x8xf32>
    %72 = arith.divf %68, %71 : vector<8x8xf32>
    %cst_37 = arith.constant dense<0.000000e+00> : vector<8x8xf32>
    %73 = tpu.matmul %72, %59, %cst_37 {dimension_numbers = #tpu.dot_dimension_numbers<[1], [0], [0], [1], [0, 0, 1, 1], [], []>} : vector<8x8xf32>, vector<8x8xf32>, vector<8x8xf32> -> vector<8x8xf32>
    %74 = vector.extract_strided_slice %8 {offsets = [0, 24], sizes = [8, 8], strides = [1, 1]} : vector<8x32xf32> to vector<8x8xf32>
    %75 = vector.extract_strided_slice %15 {offsets = [0, 24], sizes = [8, 8], strides = [1, 1]} : vector<8x32xf32> to vector<8x8xf32>
    %76 = vector.extract_strided_slice %22 {offsets = [0, 24], sizes = [8, 8], strides = [1, 1]} : vector<8x32xf32> to vector<8x8xf32>
    %77 = tpu.transpose %75, [1, 0] : vector<8x8xf32> -> vector<8x8xf32>
    %cst_38 = arith.constant dense<0.000000e+00> : vector<8x8xf32>
    %78 = tpu.matmul %74, %77, %cst_38 {dimension_numbers = #tpu.dot_dimension_numbers<[1], [0], [0], [1], [0, 0, 1, 1], [], []>} : vector<8x8xf32>, vector<8x8xf32>, vector<8x8xf32> -> vector<8x8xf32>
    %cst_39 = arith.constant 0.353553385 : f32
    %79 = vector.broadcast %cst_39 : f32 to vector<8x8xf32>
    %80 = arith.mulf %78, %79 : vector<8x8xf32>
    %cst_40 = arith.constant dense<0xFF800000> : vector<8xf32>
    %81 = vector.multi_reduction <maximumf>, %80, %cst_40 [1] : vector<8x8xf32> to vector<8xf32>
    %82 = vector.shape_cast %81 : vector<8xf32> to vector<8x1xf32>
    %83 = vector.broadcast %82 : vector<8x1xf32> to vector<8x8xf32>
    %84 = arith.subf %80, %83 : vector<8x8xf32>
    %85 = math.exp %84 : vector<8x8xf32>
    %cst_41 = arith.constant dense<0.000000e+00> : vector<8xf32>
    %86 = vector.multi_reduction <add>, %85, %cst_41 [1] : vector<8x8xf32> to vector<8xf32>
    %87 = vector.shape_cast %86 : vector<8xf32> to vector<8x1xf32>
    %88 = vector.broadcast %87 : vector<8x1xf32> to vector<8x8xf32>
    %89 = arith.divf %85, %88 : vector<8x8xf32>
    %cst_42 = arith.constant dense<0.000000e+00> : vector<8x8xf32>
    %90 = tpu.matmul %89, %76, %cst_42 {dimension_numbers = #tpu.dot_dimension_numbers<[1], [0], [0], [1], [0, 0, 1, 1], [], []>} : vector<8x8xf32>, vector<8x8xf32>, vector<8x8xf32> -> vector<8x8xf32>
    %91 = tpu.concatenate %39, %56, %73, %90 in 1 : vector<8x8xf32>, vector<8x8xf32>, vector<8x8xf32>, vector<8x8xf32> -> vector<8x32xf32>
    %c0_43 = arith.constant 0 : index
    %c0_44 = arith.constant 0 : index
    %c0_45 = arith.constant 0 : index
    %c0_46 = arith.constant 0 : index
    %92 = vector.load %arg9[%c0_43, %c0_44, %c0_45, %c0_46] : memref<1x1x8x32xf32, #tpu.memory_space<vmem>>, vector<1x1x8x32xf32>
    %93 = vector.shape_cast %92 : vector<1x1x8x32xf32> to vector<8x32xf32>
    %94 = vector.shape_cast %91 : vector<8x32xf32> to vector<1x1x8x32xf32>
    tpu.vector_store %arg9[%c0_43, %c0_44, %c0_45, %c0_46], %94 {strides = array<i32>} : memref<1x1x8x32xf32, #tpu.memory_space<vmem>>, vector<1x1x8x32xf32>,
    return
  }
  func.func @transform_0(%arg0: i32, %arg1: i32) -> (i32, i32, i32, i32) {
    %c0_i32 = arith.constant 0 : i32
    %c0_i32_0 = arith.constant 0 : i32
    %c0_i32_1 = arith.constant 0 : i32
    return %arg1, %arg0, %c0_i32, %c0_i32_0 : i32, i32, i32, i32
  }
  func.func @transform_1(%arg0: i32, %arg1: i32) -> (i32, i32, i32) {
    %c0_i32 = arith.constant 0 : i32
    %c0_i32_0 = arith.constant 0 : i32
    %c0_i32_1 = arith.constant 0 : i32
    return %arg0, %c0_i32, %c0_i32_0 : i32, i32, i32
  }
  func.func @transform_2(%arg0: i32, %arg1: i32) -> (i32, i32, i32) {
    %c0_i32 = arith.constant 0 : i32
    %c0_i32_0 = arith.constant 0 : i32
    %c0_i32_1 = arith.constant 0 : i32
    return %arg0, %c0_i32, %c0_i32_0 : i32, i32, i32
  }
  func.func @transform_3(%arg0: i32, %arg1: i32) -> (i32, i32, i32) {
    %c0_i32 = arith.constant 0 : i32
    %c0_i32_0 = arith.constant 0 : i32
    %c0_i32_1 = arith.constant 0 : i32
    return %arg0, %c0_i32, %c0_i32_0 : i32, i32, i32
  }
  func.func @transform_4(%arg0: i32, %arg1: i32) -> (i32, i32, i32) {
    %c0_i32 = arith.constant 0 : i32
    %c0_i32_0 = arith.constant 0 : i32
    %c0_i32_1 = arith.constant 0 : i32
    return %arg0, %c0_i32, %c0_i32_0 : i32, i32, i32
  }
  func.func @transform_5(%arg0: i32, %arg1: i32) -> (i32, i32, i32) {
    %c0_i32 = arith.constant 0 : i32
    %c0_i32_0 = arith.constant 0 : i32
    %c0_i32_1 = arith.constant 0 : i32
    return %arg0, %c0_i32, %c0_i32_0 : i32, i32, i32
  }
  func.func @transform_6(%arg0: i32, %arg1: i32) -> (i32, i32, i32) {
    %c0_i32 = arith.constant 0 : i32
    %c0_i32_0 = arith.constant 0 : i32
    %c0_i32_1 = arith.constant 0 : i32
    return %arg0, %c0_i32, %c0_i32_0 : i32, i32, i32
  }
  func.func @transform_7(%arg0: i32, %arg1: i32) -> (i32, i32, i32, i32) {
    %c0_i32 = arith.constant 0 : i32
    %c0_i32_0 = arith.constant 0 : i32
    %c0_i32_1 = arith.constant 0 : i32
    return %arg1, %arg0, %c0_i32, %c0_i32_0 : i32, i32, i32, i32
  }
}

module attributes {stable_mosaic.version = 11 : i64} {
  func.func @_linear_kernel(%arg0: i32, %arg1: memref<2x32xf32, #tpu.memory_space<vmem>>, %arg2: memref<32x32xf32, #tpu.memory_space<vmem>>, %arg3: memref<1x32xf32, #tpu.memory_space<vmem>>, %arg4: memref<2x32xf32, #tpu.memory_space<vmem>>) attributes {dimension_semantics = [#tpu.dimension_semantics<arbitrary>], iteration_bounds = array<i64: 1>, scalar_prefetch = 0 : i64, scratch_operands = 0 : i64, tpu.core_type = #tpu.core_type<tc>, window_params = [{pipeline_mode = #tpu.pipeline_mode<synchronous>, transform_indices = @transform_0, window_bounds = array<i64: 2, 32>}, {pipeline_mode = #tpu.pipeline_mode<synchronous>, transform_indices = @transform_1, window_bounds = array<i64: 32, 32>}, {pipeline_mode = #tpu.pipeline_mode<synchronous>, transform_indices = @transform_2, window_bounds = array<i64: 1, 32>}, {pipeline_mode = #tpu.pipeline_mode<synchronous>, transform_indices = @transform_3, window_bounds = array<i64: 2, 32>}]} {
    %c0 = arith.constant 0 : index
    %c0_0 = arith.constant 0 : index
    %0 = vector.load %arg1[%c0, %c0_0] : memref<2x32xf32, #tpu.memory_space<vmem>>, vector<2x32xf32>
    %c0_1 = arith.constant 0 : index
    %c0_2 = arith.constant 0 : index
    %1 = vector.load %arg2[%c0_1, %c0_2] : memref<32x32xf32, #tpu.memory_space<vmem>>, vector<32x32xf32>
    %cst = arith.constant dense<0.000000e+00> : vector<2x32xf32>
    %2 = tpu.matmul %0, %1, %cst {dimension_numbers = #tpu.dot_dimension_numbers<[1], [0], [0], [1], [0, 0, 1, 1], [], []>} : vector<2x32xf32>, vector<32x32xf32>, vector<2x32xf32> -> vector<2x32xf32>
    %c0_3 = arith.constant 0 : index
    %c0_4 = arith.constant 0 : index
    %3 = vector.load %arg3[%c0_3, %c0_4] : memref<1x32xf32, #tpu.memory_space<vmem>>, vector<1x32xf32>
    %4 = vector.broadcast %3 : vector<1x32xf32> to vector<2x32xf32>
    %5 = arith.addf %2, %4 : vector<2x32xf32>
    %c0_5 = arith.constant 0 : index
    %c0_6 = arith.constant 0 : index
    %6 = vector.load %arg4[%c0_5, %c0_6] : memref<2x32xf32, #tpu.memory_space<vmem>>, vector<2x32xf32>
    tpu.vector_store %arg4[%c0_5, %c0_6], %5 {strides = array<i32>} : memref<2x32xf32, #tpu.memory_space<vmem>>, vector<2x32xf32>,
    return
  }
  func.func @transform_0(%arg0: i32) -> (i32, i32) {
    %c0_i32 = arith.constant 0 : i32
    %c0_i32_0 = arith.constant 0 : i32
    %c0_i32_1 = arith.constant 0 : i32
    return %c0_i32, %c0_i32_0 : i32, i32
  }
  func.func @transform_1(%arg0: i32) -> (i32, i32) {
    %c0_i32 = arith.constant 0 : i32
    %c0_i32_0 = arith.constant 0 : i32
    %c0_i32_1 = arith.constant 0 : i32
    return %c0_i32, %c0_i32_0 : i32, i32
  }
  func.func @transform_2(%arg0: i32) -> (i32, i32) {
    %c0_i32 = arith.constant 0 : i32
    %c0_i32_0 = arith.constant 0 : i32
    %c0_i32_1 = arith.constant 0 : i32
    return %c0_i32, %c0_i32_0 : i32, i32
  }
  func.func @transform_3(%arg0: i32) -> (i32, i32) {
    %c0_i32 = arith.constant 0 : i32
    %c0_i32_0 = arith.constant 0 : i32
    %c0_i32_1 = arith.constant 0 : i32
    return %c0_i32, %c0_i32_0 : i32, i32
  }
}

module attributes {stable_mosaic.version = 11 : i64} {
  func.func @_mha_kernel(%arg0: i32, %arg1: i32, %arg2: memref<1x1x3x32xf32, #tpu.memory_space<vmem>>, %arg3: memref<1x32x32xf32, #tpu.memory_space<vmem>>, %arg4: memref<1x32x32xf32, #tpu.memory_space<vmem>>, %arg5: memref<1x32x32xf32, #tpu.memory_space<vmem>>, %arg6: memref<1x1x32xf32, #tpu.memory_space<vmem>>, %arg7: memref<1x1x32xf32, #tpu.memory_space<vmem>>, %arg8: memref<1x1x32xf32, #tpu.memory_space<vmem>>, %arg9: memref<1x1x3x32xf32, #tpu.memory_space<vmem>>) attributes {dimension_semantics = [#tpu.dimension_semantics<parallel>, #tpu.dimension_semantics<parallel>], iteration_bounds = array<i64: 1, 2>, scalar_prefetch = 0 : i64, scratch_operands = 0 : i64, tpu.core_type = #tpu.core_type<tc>, window_params = [{transform_indices = @transform_0, window_bounds = array<i64: 1, 1, 3, 32>}, {transform_indices = @transform_1, window_bounds = array<i64: 1, 32, 32>}, {transform_indices = @transform_2, window_bounds = array<i64: 1, 32, 32>}, {transform_indices = @transform_3, window_bounds = array<i64: 1, 32, 32>}, {transform_indices = @transform_4, window_bounds = array<i64: 1, 1, 32>}, {transform_indices = @transform_5, window_bounds = array<i64: 1, 1, 32>}, {transform_indices = @transform_6, window_bounds = array<i64: 1, 1, 32>}, {transform_indices = @transform_7, window_bounds = array<i64: 1, 1, 3, 32>}]} {
    %c0 = arith.constant 0 : index
    %c0_0 = arith.constant 0 : index
    %c0_1 = arith.constant 0 : index
    %c0_2 = arith.constant 0 : index
    %0 = vector.load %arg2[%c0, %c0_0, %c0_1, %c0_2] : memref<1x1x3x32xf32, #tpu.memory_space<vmem>>, vector<1x1x3x32xf32>
    %1 = vector.shape_cast %0 : vector<1x1x3x32xf32> to vector<3x32xf32>
    %c0_3 = arith.constant 0 : index
    %c0_4 = arith.constant 0 : index
    %c0_5 = arith.constant 0 : index
    %2 = vector.load %arg3[%c0_3, %c0_4, %c0_5] : memref<1x32x32xf32, #tpu.memory_space<vmem>>, vector<1x32x32xf32>
    %3 = vector.shape_cast %2 : vector<1x32x32xf32> to vector<32x32xf32>
    %cst = arith.constant dense<0.000000e+00> : vector<3x32xf32>
    %4 = tpu.matmul %1, %3, %cst {dimension_numbers = #tpu.dot_dimension_numbers<[1], [0], [0], [1], [0, 0, 1, 1], [], []>} : vector<3x32xf32>, vector<32x32xf32>, vector<3x32xf32> -> vector<3x32xf32>
    %c0_6 = arith.constant 0 : index
    %c0_7 = arith.constant 0 : index
    %c0_8 = arith.constant 0 : index
    %5 = vector.load %arg6[%c0_6, %c0_7, %c0_8] : memref<1x1x32xf32, #tpu.memory_space<vmem>>, vector<1x1x32xf32>
    %6 = vector.shape_cast %5 : vector<1x1x32xf32> to vector<1x32xf32>
    %7 = vector.broadcast %6 : vector<1x32xf32> to vector<3x32xf32>
    %8 = arith.addf %4, %7 : vector<3x32xf32>
    %c0_9 = arith.constant 0 : index
    %c0_10 = arith.constant 0 : index
    %c0_11 = arith.constant 0 : index
    %9 = vector.load %arg4[%c0_9, %c0_10, %c0_11] : memref<1x32x32xf32, #tpu.memory_space<vmem>>, vector<1x32x32xf32>
    %10 = vector.shape_cast %9 : vector<1x32x32xf32> to vector<32x32xf32>
    %cst_12 = arith.constant dense<0.000000e+00> : vector<3x32xf32>
    %11 = tpu.matmul %1, %10, %cst_12 {dimension_numbers = #tpu.dot_dimension_numbers<[1], [0], [0], [1], [0, 0, 1, 1], [], []>} : vector<3x32xf32>, vector<32x32xf32>, vector<3x32xf32> -> vector<3x32xf32>
    %c0_13 = arith.constant 0 : index
    %c0_14 = arith.constant 0 : index
    %c0_15 = arith.constant 0 : index
    %12 = vector.load %arg7[%c0_13, %c0_14, %c0_15] : memref<1x1x32xf32, #tpu.memory_space<vmem>>, vector<1x1x32xf32>
    %13 = vector.shape_cast %12 : vector<1x1x32xf32> to vector<1x32xf32>
    %14 = vector.broadcast %13 : vector<1x32xf32> to vector<3x32xf32>
    %15 = arith.addf %11, %14 : vector<3x32xf32>
    %c0_16 = arith.constant 0 : index
    %c0_17 = arith.constant 0 : index
    %c0_18 = arith.constant 0 : index
    %16 = vector.load %arg5[%c0_16, %c0_17, %c0_18] : memref<1x32x32xf32, #tpu.memory_space<vmem>>, vector<1x32x32xf32>
    %17 = vector.shape_cast %16 : vector<1x32x32xf32> to vector<32x32xf32>
    %cst_19 = arith.constant dense<0.000000e+00> : vector<3x32xf32>
    %18 = tpu.matmul %1, %17, %cst_19 {dimension_numbers = #tpu.dot_dimension_numbers<[1], [0], [0], [1], [0, 0, 1, 1], [], []>} : vector<3x32xf32>, vector<32x32xf32>, vector<3x32xf32> -> vector<3x32xf32>
    %c0_20 = arith.constant 0 : index
    %c0_21 = arith.constant 0 : index
    %c0_22 = arith.constant 0 : index
    %19 = vector.load %arg8[%c0_20, %c0_21, %c0_22] : memref<1x1x32xf32, #tpu.memory_space<vmem>>, vector<1x1x32xf32>
    %20 = vector.shape_cast %19 : vector<1x1x32xf32> to vector<1x32xf32>
    %21 = vector.broadcast %20 : vector<1x32xf32> to vector<3x32xf32>
    %22 = arith.addf %18, %21 : vector<3x32xf32>
    %23 = vector.extract_strided_slice %8 {offsets = [0, 0], sizes = [3, 8], strides = [1, 1]} : vector<3x32xf32> to vector<3x8xf32>
    %24 = vector.extract_strided_slice %15 {offsets = [0, 0], sizes = [3, 8], strides = [1, 1]} : vector<3x32xf32> to vector<3x8xf32>
    %25 = vector.extract_strided_slice %22 {offsets = [0, 0], sizes = [3, 8], strides = [1, 1]} : vector<3x32xf32> to vector<3x8xf32>
    %26 = tpu.transpose %24, [1, 0] : vector<3x8xf32> -> vector<8x3xf32>
    %cst_23 = arith.constant dense<0.000000e+00> : vector<3x3xf32>
    %27 = tpu.matmul %23, %26, %cst_23 {dimension_numbers = #tpu.dot_dimension_numbers<[1], [0], [0], [1], [0, 0, 1, 1], [], []>} : vector<3x8xf32>, vector<8x3xf32>, vector<3x3xf32> -> vector<3x3xf32>
    %cst_24 = arith.constant 0.353553385 : f32
    %28 = vector.broadcast %cst_24 : f32 to vector<3x3xf32>
    %29 = arith.mulf %27, %28 : vector<3x3xf32>
    %cst_25 = arith.constant dense<0xFF800000> : vector<3xf32>
    %30 = vector.multi_reduction <maximumf>, %29, %cst_25 [1] : vector<3x3xf32> to vector<3xf32>
    %31 = vector.shape_cast %30 : vector<3xf32> to vector<3x1xf32>
    %32 = vector.broadcast %31 : vector<3x1xf32> to vector<3x3xf32>
    %33 = arith.subf %29, %32 : vector<3x3xf32>
    %34 = math.exp %33 : vector<3x3xf32>
    %cst_26 = arith.constant dense<0.000000e+00> : vector<3xf32>
    %35 = vector.multi_reduction <add>, %34, %cst_26 [1] : vector<3x3xf32> to vector<3xf32>
    %36 = vector.shape_cast %35 : vector<3xf32> to vector<3x1xf32>
    %37 = vector.broadcast %36 : vector<3x1xf32> to vector<3x3xf32>
    %38 = arith.divf %34, %37 : vector<3x3xf32>
    %cst_27 = arith.constant dense<0.000000e+00> : vector<3x8xf32>
    %39 = tpu.matmul %38, %25, %cst_27 {dimension_numbers = #tpu.dot_dimension_numbers<[1], [0], [0], [1], [0, 0, 1, 1], [], []>} : vector<3x3xf32>, vector<3x8xf32>, vector<3x8xf32> -> vector<3x8xf32>
    %40 = vector.extract_strided_slice %8 {offsets = [0, 8], sizes = [3, 8], strides = [1, 1]} : vector<3x32xf32> to vector<3x8xf32>
    %41 = vector.extract_strided_slice %15 {offsets = [0, 8], sizes = [3, 8], strides = [1, 1]} : vector<3x32xf32> to vector<3x8xf32>
    %42 = vector.extract_strided_slice %22 {offsets = [0, 8], sizes = [3, 8], strides = [1, 1]} : vector<3x32xf32> to vector<3x8xf32>
    %43 = tpu.transpose %41, [1, 0] : vector<3x8xf32> -> vector<8x3xf32>
    %cst_28 = arith.constant dense<0.000000e+00> : vector<3x3xf32>
    %44 = tpu.matmul %40, %43, %cst_28 {dimension_numbers = #tpu.dot_dimension_numbers<[1], [0], [0], [1], [0, 0, 1, 1], [], []>} : vector<3x8xf32>, vector<8x3xf32>, vector<3x3xf32> -> vector<3x3xf32>
    %cst_29 = arith.constant 0.353553385 : f32
    %45 = vector.broadcast %cst_29 : f32 to vector<3x3xf32>
    %46 = arith.mulf %44, %45 : vector<3x3xf32>
    %cst_30 = arith.constant dense<0xFF800000> : vector<3xf32>
    %47 = vector.multi_reduction <maximumf>, %46, %cst_30 [1] : vector<3x3xf32> to vector<3xf32>
    %48 = vector.shape_cast %47 : vector<3xf32> to vector<3x1xf32>
    %49 = vector.broadcast %48 : vector<3x1xf32> to vector<3x3xf32>
    %50 = arith.subf %46, %49 : vector<3x3xf32>
    %51 = math.exp %50 : vector<3x3xf32>
    %cst_31 = arith.constant dense<0.000000e+00> : vector<3xf32>
    %52 = vector.multi_reduction <add>, %51, %cst_31 [1] : vector<3x3xf32> to vector<3xf32>
    %53 = vector.shape_cast %52 : vector<3xf32> to vector<3x1xf32>
    %54 = vector.broadcast %53 : vector<3x1xf32> to vector<3x3xf32>
    %55 = arith.divf %51, %54 : vector<3x3xf32>
    %cst_32 = arith.constant dense<0.000000e+00> : vector<3x8xf32>
    %56 = tpu.matmul %55, %42, %cst_32 {dimension_numbers = #tpu.dot_dimension_numbers<[1], [0], [0], [1], [0, 0, 1, 1], [], []>} : vector<3x3xf32>, vector<3x8xf32>, vector<3x8xf32> -> vector<3x8xf32>
    %57 = vector.extract_strided_slice %8 {offsets = [0, 16], sizes = [3, 8], strides = [1, 1]} : vector<3x32xf32> to vector<3x8xf32>
    %58 = vector.extract_strided_slice %15 {offsets = [0, 16], sizes = [3, 8], strides = [1, 1]} : vector<3x32xf32> to vector<3x8xf32>
    %59 = vector.extract_strided_slice %22 {offsets = [0, 16], sizes = [3, 8], strides = [1, 1]} : vector<3x32xf32> to vector<3x8xf32>
    %60 = tpu.transpose %58, [1, 0] : vector<3x8xf32> -> vector<8x3xf32>
    %cst_33 = arith.constant dense<0.000000e+00> : vector<3x3xf32>
    %61 = tpu.matmul %57, %60, %cst_33 {dimension_numbers = #tpu.dot_dimension_numbers<[1], [0], [0], [1], [0, 0, 1, 1], [], []>} : vector<3x8xf32>, vector<8x3xf32>, vector<3x3xf32> -> vector<3x3xf32>
    %cst_34 = arith.constant 0.353553385 : f32
    %62 = vector.broadcast %cst_34 : f32 to vector<3x3xf32>
    %63 = arith.mulf %61, %62 : vector<3x3xf32>
    %cst_35 = arith.constant dense<0xFF800000> : vector<3xf32>
    %64 = vector.multi_reduction <maximumf>, %63, %cst_35 [1] : vector<3x3xf32> to vector<3xf32>
    %65 = vector.shape_cast %64 : vector<3xf32> to vector<3x1xf32>
    %66 = vector.broadcast %65 : vector<3x1xf32> to vector<3x3xf32>
    %67 = arith.subf %63, %66 : vector<3x3xf32>
    %68 = math.exp %67 : vector<3x3xf32>
    %cst_36 = arith.constant dense<0.000000e+00> : vector<3xf32>
    %69 = vector.multi_reduction <add>, %68, %cst_36 [1] : vector<3x3xf32> to vector<3xf32>
    %70 = vector.shape_cast %69 : vector<3xf32> to vector<3x1xf32>
    %71 = vector.broadcast %70 : vector<3x1xf32> to vector<3x3xf32>
    %72 = arith.divf %68, %71 : vector<3x3xf32>
    %cst_37 = arith.constant dense<0.000000e+00> : vector<3x8xf32>
    %73 = tpu.matmul %72, %59, %cst_37 {dimension_numbers = #tpu.dot_dimension_numbers<[1], [0], [0], [1], [0, 0, 1, 1], [], []>} : vector<3x3xf32>, vector<3x8xf32>, vector<3x8xf32> -> vector<3x8xf32>
    %74 = vector.extract_strided_slice %8 {offsets = [0, 24], sizes = [3, 8], strides = [1, 1]} : vector<3x32xf32> to vector<3x8xf32>
    %75 = vector.extract_strided_slice %15 {offsets = [0, 24], sizes = [3, 8], strides = [1, 1]} : vector<3x32xf32> to vector<3x8xf32>
    %76 = vector.extract_strided_slice %22 {offsets = [0, 24], sizes = [3, 8], strides = [1, 1]} : vector<3x32xf32> to vector<3x8xf32>
    %77 = tpu.transpose %75, [1, 0] : vector<3x8xf32> -> vector<8x3xf32>
    %cst_38 = arith.constant dense<0.000000e+00> : vector<3x3xf32>
    %78 = tpu.matmul %74, %77, %cst_38 {dimension_numbers = #tpu.dot_dimension_numbers<[1], [0], [0], [1], [0, 0, 1, 1], [], []>} : vector<3x8xf32>, vector<8x3xf32>, vector<3x3xf32> -> vector<3x3xf32>
    %cst_39 = arith.constant 0.353553385 : f32
    %79 = vector.broadcast %cst_39 : f32 to vector<3x3xf32>
    %80 = arith.mulf %78, %79 : vector<3x3xf32>
    %cst_40 = arith.constant dense<0xFF800000> : vector<3xf32>
    %81 = vector.multi_reduction <maximumf>, %80, %cst_40 [1] : vector<3x3xf32> to vector<3xf32>
    %82 = vector.shape_cast %81 : vector<3xf32> to vector<3x1xf32>
    %83 = vector.broadcast %82 : vector<3x1xf32> to vector<3x3xf32>
    %84 = arith.subf %80, %83 : vector<3x3xf32>
    %85 = math.exp %84 : vector<3x3xf32>
    %cst_41 = arith.constant dense<0.000000e+00> : vector<3xf32>
    %86 = vector.multi_reduction <add>, %85, %cst_41 [1] : vector<3x3xf32> to vector<3xf32>
    %87 = vector.shape_cast %86 : vector<3xf32> to vector<3x1xf32>
    %88 = vector.broadcast %87 : vector<3x1xf32> to vector<3x3xf32>
    %89 = arith.divf %85, %88 : vector<3x3xf32>
    %cst_42 = arith.constant dense<0.000000e+00> : vector<3x8xf32>
    %90 = tpu.matmul %89, %76, %cst_42 {dimension_numbers = #tpu.dot_dimension_numbers<[1], [0], [0], [1], [0, 0, 1, 1], [], []>} : vector<3x3xf32>, vector<3x8xf32>, vector<3x8xf32> -> vector<3x8xf32>
    %91 = tpu.concatenate %39, %56, %73, %90 in 1 : vector<3x8xf32>, vector<3x8xf32>, vector<3x8xf32>, vector<3x8xf32> -> vector<3x32xf32>
    %c0_43 = arith.constant 0 : index
    %c0_44 = arith.constant 0 : index
    %c0_45 = arith.constant 0 : index
    %c0_46 = arith.constant 0 : index
    %92 = vector.load %arg9[%c0_43, %c0_44, %c0_45, %c0_46] : memref<1x1x3x32xf32, #tpu.memory_space<vmem>>, vector<1x1x3x32xf32>
    %93 = vector.shape_cast %92 : vector<1x1x3x32xf32> to vector<3x32xf32>
    %94 = vector.shape_cast %91 : vector<3x32xf32> to vector<1x1x3x32xf32>
    tpu.vector_store %arg9[%c0_43, %c0_44, %c0_45, %c0_46], %94 {strides = array<i32>} : memref<1x1x3x32xf32, #tpu.memory_space<vmem>>, vector<1x1x3x32xf32>,
    return
  }
  func.func @transform_0(%arg0: i32, %arg1: i32) -> (i32, i32, i32, i32) {
    %c0_i32 = arith.constant 0 : i32
    %c0_i32_0 = arith.constant 0 : i32
    %c0_i32_1 = arith.constant 0 : i32
    return %arg1, %arg0, %c0_i32, %c0_i32_0 : i32, i32, i32, i32
  }
  func.func @transform_1(%arg0: i32, %arg1: i32) -> (i32, i32, i32) {
    %c0_i32 = arith.constant 0 : i32
    %c0_i32_0 = arith.constant 0 : i32
    %c0_i32_1 = arith.constant 0 : i32
    return %arg0, %c0_i32, %c0_i32_0 : i32, i32, i32
  }
  func.func @transform_2(%arg0: i32, %arg1: i32) -> (i32, i32, i32) {
    %c0_i32 = arith.constant 0 : i32
    %c0_i32_0 = arith.constant 0 : i32
    %c0_i32_1 = arith.constant 0 : i32
    return %arg0, %c0_i32, %c0_i32_0 : i32, i32, i32
  }
  func.func @transform_3(%arg0: i32, %arg1: i32) -> (i32, i32, i32) {
    %c0_i32 = arith.constant 0 : i32
    %c0_i32_0 = arith.constant 0 : i32
    %c0_i32_1 = arith.constant 0 : i32
    return %arg0, %c0_i32, %c0_i32_0 : i32, i32, i32
  }
  func.func @transform_4(%arg0: i32, %arg1: i32) -> (i32, i32, i32) {
    %c0_i32 = arith.constant 0 : i32
    %c0_i32_0 = arith.constant 0 : i32
    %c0_i32_1 = arith.constant 0 : i32
    return %arg0, %c0_i32, %c0_i32_0 : i32, i32, i32
  }
  func.func @transform_5(%arg0: i32, %arg1: i32) -> (i32, i32, i32) {
    %c0_i32 = arith.constant 0 : i32
    %c0_i32_0 = arith.constant 0 : i32
    %c0_i32_1 = arith.constant 0 : i32
    return %arg0, %c0_i32, %c0_i32_0 : i32, i32, i32
  }
  func.func @transform_6(%arg0: i32, %arg1: i32) -> (i32, i32, i32) {
    %c0_i32 = arith.constant 0 : i32
    %c0_i32_0 = arith.constant 0 : i32
    %c0_i32_1 = arith.constant 0 : i32
    return %arg0, %c0_i32, %c0_i32_0 : i32, i32, i32
  }
  func.func @transform_7(%arg0: i32, %arg1: i32) -> (i32, i32, i32, i32) {
    %c0_i32 = arith.constant 0 : i32
    %c0_i32_0 = arith.constant 0 : i32
    %c0_i32_1 = arith.constant 0 : i32
    return %arg1, %arg0, %c0_i32, %c0_i32_0 : i32, i32, i32, i32
  }
}

module attributes {stable_mosaic.version = 11 : i64} {
  func.func @_dense_residual_ln_kernel(%arg0: i32, %arg1: memref<1x17x32xf32, #tpu.memory_space<vmem>>, %arg2: memref<1x17x32xf32, #tpu.memory_space<vmem>>, %arg3: memref<32x32xf32, #tpu.memory_space<vmem>>, %arg4: memref<1x32xf32, #tpu.memory_space<vmem>>, %arg5: memref<1x32xf32, #tpu.memory_space<vmem>>, %arg6: memref<1x32xf32, #tpu.memory_space<vmem>>, %arg7: memref<1x17x32xf32, #tpu.memory_space<vmem>>) attributes {dimension_semantics = [#tpu.dimension_semantics<parallel>], iteration_bounds = array<i64: 2>, scalar_prefetch = 0 : i64, scratch_operands = 0 : i64, tpu.core_type = #tpu.core_type<tc>, window_params = [{transform_indices = @transform_0, window_bounds = array<i64: 1, 17, 32>}, {transform_indices = @transform_1, window_bounds = array<i64: 1, 17, 32>}, {pipeline_mode = #tpu.pipeline_mode<synchronous>, transform_indices = @transform_2, window_bounds = array<i64: 32, 32>}, {pipeline_mode = #tpu.pipeline_mode<synchronous>, transform_indices = @transform_3, window_bounds = array<i64: 1, 32>}, {pipeline_mode = #tpu.pipeline_mode<synchronous>, transform_indices = @transform_4, window_bounds = array<i64: 1, 32>}, {pipeline_mode = #tpu.pipeline_mode<synchronous>, transform_indices = @transform_5, window_bounds = array<i64: 1, 32>}, {transform_indices = @transform_6, window_bounds = array<i64: 1, 17, 32>}]} {
    %c0 = arith.constant 0 : index
    %c0_0 = arith.constant 0 : index
    %c0_1 = arith.constant 0 : index
    %0 = vector.load %arg1[%c0, %c0_0, %c0_1] : memref<1x17x32xf32, #tpu.memory_space<vmem>>, vector<1x17x32xf32>
    %1 = vector.shape_cast %0 : vector<1x17x32xf32> to vector<17x32xf32>
    %c0_2 = arith.constant 0 : index
    %c0_3 = arith.constant 0 : index
    %2 = vector.load %arg3[%c0_2, %c0_3] : memref<32x32xf32, #tpu.memory_space<vmem>>, vector<32x32xf32>
    %cst = arith.constant dense<0.000000e+00> : vector<17x32xf32>
    %3 = tpu.matmul %1, %2, %cst {dimension_numbers = #tpu.dot_dimension_numbers<[1], [0], [0], [1], [0, 0, 1, 1], [], []>} : vector<17x32xf32>, vector<32x32xf32>, vector<17x32xf32> -> vector<17x32xf32>
    %c0_4 = arith.constant 0 : index
    %c0_5 = arith.constant 0 : index
    %4 = vector.load %arg4[%c0_4, %c0_5] : memref<1x32xf32, #tpu.memory_space<vmem>>, vector<1x32xf32>
    %5 = vector.broadcast %4 : vector<1x32xf32> to vector<17x32xf32>
    %6 = arith.addf %3, %5 : vector<17x32xf32>
    %c0_6 = arith.constant 0 : index
    %c0_7 = arith.constant 0 : index
    %c0_8 = arith.constant 0 : index
    %7 = vector.load %arg2[%c0_6, %c0_7, %c0_8] : memref<1x17x32xf32, #tpu.memory_space<vmem>>, vector<1x17x32xf32>
    %8 = vector.shape_cast %7 : vector<1x17x32xf32> to vector<17x32xf32>
    %9 = arith.addf %6, %8 : vector<17x32xf32>
    %cst_9 = arith.constant dense<0.000000e+00> : vector<17xf32>
    %10 = vector.multi_reduction <add>, %9, %cst_9 [1] : vector<17x32xf32> to vector<17xf32>
    %11 = vector.shape_cast %10 : vector<17xf32> to vector<17x1xf32>
    %cst_10 = arith.constant 3.200000e+01 : f32
    %12 = vector.broadcast %cst_10 : f32 to vector<17x1xf32>
    %13 = arith.divf %11, %12 : vector<17x1xf32>
    %14 = vector.broadcast %13 : vector<17x1xf32> to vector<17x32xf32>
    %15 = arith.subf %9, %14 : vector<17x32xf32>
    %16 = arith.mulf %15, %15 : vector<17x32xf32>
    %cst_11 = arith.constant dense<0.000000e+00> : vector<17xf32>
    %17 = vector.multi_reduction <add>, %16, %cst_11 [1] : vector<17x32xf32> to vector<17xf32>
    %18 = vector.shape_cast %17 : vector<17xf32> to vector<17x1xf32>
    %cst_12 = arith.constant 3.200000e+01 : f32
    %19 = vector.broadcast %cst_12 : f32 to vector<17x1xf32>
    %20 = arith.divf %18, %19 : vector<17x1xf32>
    %cst_13 = arith.constant 9.99999996E-13 : f32
    %21 = vector.broadcast %cst_13 : f32 to vector<17x1xf32>
    %22 = arith.addf %20, %21 : vector<17x1xf32>
    %23 = math.rsqrt %22 : vector<17x1xf32>
    %24 = vector.broadcast %23 : vector<17x1xf32> to vector<17x32xf32>
    %25 = arith.mulf %15, %24 : vector<17x32xf32>
    %c0_14 = arith.constant 0 : index
    %c0_15 = arith.constant 0 : index
    %26 = vector.load %arg5[%c0_14, %c0_15] : memref<1x32xf32, #tpu.memory_space<vmem>>, vector<1x32xf32>
    %27 = vector.broadcast %26 : vector<1x32xf32> to vector<17x32xf32>
    %28 = arith.mulf %25, %27 : vector<17x32xf32>
    %c0_16 = arith.constant 0 : index
    %c0_17 = arith.constant 0 : index
    %29 = vector.load %arg6[%c0_16, %c0_17] : memref<1x32xf32, #tpu.memory_space<vmem>>, vector<1x32xf32>
    %30 = vector.broadcast %29 : vector<1x32xf32> to vector<17x32xf32>
    %31 = arith.addf %28, %30 : vector<17x32xf32>
    %c0_18 = arith.constant 0 : index
    %c0_19 = arith.constant 0 : index
    %c0_20 = arith.constant 0 : index
    %32 = vector.load %arg7[%c0_18, %c0_19, %c0_20] : memref<1x17x32xf32, #tpu.memory_space<vmem>>, vector<1x17x32xf32>
    %33 = vector.shape_cast %32 : vector<1x17x32xf32> to vector<17x32xf32>
    %34 = vector.shape_cast %31 : vector<17x32xf32> to vector<1x17x32xf32>
    tpu.vector_store %arg7[%c0_18, %c0_19, %c0_20], %34 {strides = array<i32>} : memref<1x17x32xf32, #tpu.memory_space<vmem>>, vector<1x17x32xf32>,
    return
  }
  func.func @transform_0(%arg0: i32) -> (i32, i32, i32) {
    %c0_i32 = arith.constant 0 : i32
    %c0_i32_0 = arith.constant 0 : i32
    %c0_i32_1 = arith.constant 0 : i32
    return %arg0, %c0_i32, %c0_i32_0 : i32, i32, i32
  }
  func.func @transform_1(%arg0: i32) -> (i32, i32, i32) {
    %c0_i32 = arith.constant 0 : i32
    %c0_i32_0 = arith.constant 0 : i32
    %c0_i32_1 = arith.constant 0 : i32
    return %arg0, %c0_i32, %c0_i32_0 : i32, i32, i32
  }
  func.func @transform_2(%arg0: i32) -> (i32, i32) {
    %c0_i32 = arith.constant 0 : i32
    %c0_i32_0 = arith.constant 0 : i32
    %c0_i32_1 = arith.constant 0 : i32
    return %c0_i32, %c0_i32_0 : i32, i32
  }
  func.func @transform_3(%arg0: i32) -> (i32, i32) {
    %c0_i32 = arith.constant 0 : i32
    %c0_i32_0 = arith.constant 0 : i32
    %c0_i32_1 = arith.constant 0 : i32
    return %c0_i32, %c0_i32_0 : i32, i32
  }
  func.func @transform_4(%arg0: i32) -> (i32, i32) {
    %c0_i32 = arith.constant 0 : i32
    %c0_i32_0 = arith.constant 0 : i32
    %c0_i32_1 = arith.constant 0 : i32
    return %c0_i32, %c0_i32_0 : i32, i32
  }
  func.func @transform_5(%arg0: i32) -> (i32, i32) {
    %c0_i32 = arith.constant 0 : i32
    %c0_i32_0 = arith.constant 0 : i32
    %c0_i32_1 = arith.constant 0 : i32
    return %c0_i32, %c0_i32_0 : i32, i32
  }
  func.func @transform_6(%arg0: i32) -> (i32, i32, i32) {
    %c0_i32 = arith.constant 0 : i32
    %c0_i32_0 = arith.constant 0 : i32
    %c0_i32_1 = arith.constant 0 : i32
    return %arg0, %c0_i32, %c0_i32_0 : i32, i32, i32
  }
}

module attributes {stable_mosaic.version = 11 : i64} {
  func.func @_ffn_kernel(%arg0: i32, %arg1: memref<1x17x32xf32, #tpu.memory_space<vmem>>, %arg2: memref<32x128xf32, #tpu.memory_space<vmem>>, %arg3: memref<1x128xf32, #tpu.memory_space<vmem>>, %arg4: memref<128x32xf32, #tpu.memory_space<vmem>>, %arg5: memref<1x32xf32, #tpu.memory_space<vmem>>, %arg6: memref<1x32xf32, #tpu.memory_space<vmem>>, %arg7: memref<1x32xf32, #tpu.memory_space<vmem>>, %arg8: memref<1x17x32xf32, #tpu.memory_space<vmem>>) attributes {dimension_semantics = [#tpu.dimension_semantics<parallel>], iteration_bounds = array<i64: 2>, scalar_prefetch = 0 : i64, scratch_operands = 0 : i64, tpu.core_type = #tpu.core_type<tc>, window_params = [{transform_indices = @transform_0, window_bounds = array<i64: 1, 17, 32>}, {pipeline_mode = #tpu.pipeline_mode<synchronous>, transform_indices = @transform_1, window_bounds = array<i64: 32, 128>}, {pipeline_mode = #tpu.pipeline_mode<synchronous>, transform_indices = @transform_2, window_bounds = array<i64: 1, 128>}, {pipeline_mode = #tpu.pipeline_mode<synchronous>, transform_indices = @transform_3, window_bounds = array<i64: 128, 32>}, {pipeline_mode = #tpu.pipeline_mode<synchronous>, transform_indices = @transform_4, window_bounds = array<i64: 1, 32>}, {pipeline_mode = #tpu.pipeline_mode<synchronous>, transform_indices = @transform_5, window_bounds = array<i64: 1, 32>}, {pipeline_mode = #tpu.pipeline_mode<synchronous>, transform_indices = @transform_6, window_bounds = array<i64: 1, 32>}, {transform_indices = @transform_7, window_bounds = array<i64: 1, 17, 32>}]} {
    %c0 = arith.constant 0 : index
    %c0_0 = arith.constant 0 : index
    %c0_1 = arith.constant 0 : index
    %0 = vector.load %arg1[%c0, %c0_0, %c0_1] : memref<1x17x32xf32, #tpu.memory_space<vmem>>, vector<1x17x32xf32>
    %1 = vector.shape_cast %0 : vector<1x17x32xf32> to vector<17x32xf32>
    %c0_2 = arith.constant 0 : index
    %c0_3 = arith.constant 0 : index
    %2 = vector.load %arg2[%c0_2, %c0_3] : memref<32x128xf32, #tpu.memory_space<vmem>>, vector<32x128xf32>
    %cst = arith.constant dense<0.000000e+00> : vector<17x128xf32>
    %3 = tpu.matmul %1, %2, %cst {dimension_numbers = #tpu.dot_dimension_numbers<[1], [0], [0], [1], [0, 0, 1, 1], [], []>} : vector<17x32xf32>, vector<32x128xf32>, vector<17x128xf32> -> vector<17x128xf32>
    %c0_4 = arith.constant 0 : index
    %c0_5 = arith.constant 0 : index
    %4 = vector.load %arg3[%c0_4, %c0_5] : memref<1x128xf32, #tpu.memory_space<vmem>>, vector<1x128xf32>
    %5 = vector.broadcast %4 : vector<1x128xf32> to vector<17x128xf32>
    %6 = arith.addf %3, %5 : vector<17x128xf32>
    %cst_6 = arith.constant 5.000000e-01 : f32
    %7 = vector.broadcast %cst_6 : f32 to vector<17x128xf32>
    %8 = arith.mulf %7, %6 : vector<17x128xf32>
    %cst_7 = arith.constant 4.471500e-02 : f32
    %9 = vector.broadcast %cst_7 : f32 to vector<17x128xf32>
    %10 = arith.mulf %9, %6 : vector<17x128xf32>
    %11 = arith.mulf %10, %6 : vector<17x128xf32>
    %12 = arith.mulf %11, %6 : vector<17x128xf32>
    %13 = arith.addf %6, %12 : vector<17x128xf32>
    %cst_8 = arith.constant 0.797884583 : f32
    %14 = vector.broadcast %cst_8 : f32 to vector<17x128xf32>
    %15 = arith.mulf %14, %13 : vector<17x128xf32>
    %16 = math.tanh %15 : vector<17x128xf32>
    %cst_9 = arith.constant 1.000000e+00 : f32
    %17 = vector.broadcast %cst_9 : f32 to vector<17x128xf32>
    %18 = arith.addf %17, %16 : vector<17x128xf32>
    %19 = arith.mulf %8, %18 : vector<17x128xf32>
    %c0_10 = arith.constant 0 : index
    %c0_11 = arith.constant 0 : index
    %20 = vector.load %arg4[%c0_10, %c0_11] : memref<128x32xf32, #tpu.memory_space<vmem>>, vector<128x32xf32>
    %cst_12 = arith.constant dense<0.000000e+00> : vector<17x32xf32>
    %21 = tpu.matmul %19, %20, %cst_12 {dimension_numbers = #tpu.dot_dimension_numbers<[1], [0], [0], [1], [0, 0, 1, 1], [], []>} : vector<17x128xf32>, vector<128x32xf32>, vector<17x32xf32> -> vector<17x32xf32>
    %c0_13 = arith.constant 0 : index
    %c0_14 = arith.constant 0 : index
    %22 = vector.load %arg5[%c0_13, %c0_14] : memref<1x32xf32, #tpu.memory_space<vmem>>, vector<1x32xf32>
    %23 = vector.broadcast %22 : vector<1x32xf32> to vector<17x32xf32>
    %24 = arith.addf %21, %23 : vector<17x32xf32>
    %25 = arith.addf %24, %1 : vector<17x32xf32>
    %cst_15 = arith.constant dense<0.000000e+00> : vector<17xf32>
    %26 = vector.multi_reduction <add>, %25, %cst_15 [1] : vector<17x32xf32> to vector<17xf32>
    %27 = vector.shape_cast %26 : vector<17xf32> to vector<17x1xf32>
    %cst_16 = arith.constant 3.200000e+01 : f32
    %28 = vector.broadcast %cst_16 : f32 to vector<17x1xf32>
    %29 = arith.divf %27, %28 : vector<17x1xf32>
    %30 = vector.broadcast %29 : vector<17x1xf32> to vector<17x32xf32>
    %31 = arith.subf %25, %30 : vector<17x32xf32>
    %32 = arith.mulf %31, %31 : vector<17x32xf32>
    %cst_17 = arith.constant dense<0.000000e+00> : vector<17xf32>
    %33 = vector.multi_reduction <add>, %32, %cst_17 [1] : vector<17x32xf32> to vector<17xf32>
    %34 = vector.shape_cast %33 : vector<17xf32> to vector<17x1xf32>
    %cst_18 = arith.constant 3.200000e+01 : f32
    %35 = vector.broadcast %cst_18 : f32 to vector<17x1xf32>
    %36 = arith.divf %34, %35 : vector<17x1xf32>
    %cst_19 = arith.constant 9.99999996E-13 : f32
    %37 = vector.broadcast %cst_19 : f32 to vector<17x1xf32>
    %38 = arith.addf %36, %37 : vector<17x1xf32>
    %39 = math.rsqrt %38 : vector<17x1xf32>
    %40 = vector.broadcast %39 : vector<17x1xf32> to vector<17x32xf32>
    %41 = arith.mulf %31, %40 : vector<17x32xf32>
    %c0_20 = arith.constant 0 : index
    %c0_21 = arith.constant 0 : index
    %42 = vector.load %arg6[%c0_20, %c0_21] : memref<1x32xf32, #tpu.memory_space<vmem>>, vector<1x32xf32>
    %43 = vector.broadcast %42 : vector<1x32xf32> to vector<17x32xf32>
    %44 = arith.mulf %41, %43 : vector<17x32xf32>
    %c0_22 = arith.constant 0 : index
    %c0_23 = arith.constant 0 : index
    %45 = vector.load %arg7[%c0_22, %c0_23] : memref<1x32xf32, #tpu.memory_space<vmem>>, vector<1x32xf32>
    %46 = vector.broadcast %45 : vector<1x32xf32> to vector<17x32xf32>
    %47 = arith.addf %44, %46 : vector<17x32xf32>
    %c0_24 = arith.constant 0 : index
    %c0_25 = arith.constant 0 : index
    %c0_26 = arith.constant 0 : index
    %48 = vector.load %arg8[%c0_24, %c0_25, %c0_26] : memref<1x17x32xf32, #tpu.memory_space<vmem>>, vector<1x17x32xf32>
    %49 = vector.shape_cast %48 : vector<1x17x32xf32> to vector<17x32xf32>
    %50 = vector.shape_cast %47 : vector<17x32xf32> to vector<1x17x32xf32>
    tpu.vector_store %arg8[%c0_24, %c0_25, %c0_26], %50 {strides = array<i32>} : memref<1x17x32xf32, #tpu.memory_space<vmem>>, vector<1x17x32xf32>,
    return
  }
  func.func @transform_0(%arg0: i32) -> (i32, i32, i32) {
    %c0_i32 = arith.constant 0 : i32
    %c0_i32_0 = arith.constant 0 : i32
    %c0_i32_1 = arith.constant 0 : i32
    return %arg0, %c0_i32, %c0_i32_0 : i32, i32, i32
  }
  func.func @transform_1(%arg0: i32) -> (i32, i32) {
    %c0_i32 = arith.constant 0 : i32
    %c0_i32_0 = arith.constant 0 : i32
    %c0_i32_1 = arith.constant 0 : i32
    return %c0_i32, %c0_i32_0 : i32, i32
  }
  func.func @transform_2(%arg0: i32) -> (i32, i32) {
    %c0_i32 = arith.constant 0 : i32
    %c0_i32_0 = arith.constant 0 : i32
    %c0_i32_1 = arith.constant 0 : i32
    return %c0_i32, %c0_i32_0 : i32, i32
  }
  func.func @transform_3(%arg0: i32) -> (i32, i32) {
    %c0_i32 = arith.constant 0 : i32
    %c0_i32_0 = arith.constant 0 : i32
    %c0_i32_1 = arith.constant 0 : i32
    return %c0_i32, %c0_i32_0 : i32, i32
  }
  func.func @transform_4(%arg0: i32) -> (i32, i32) {
    %c0_i32 = arith.constant 0 : i32
    %c0_i32_0 = arith.constant 0 : i32
    %c0_i32_1 = arith.constant 0 : i32
    return %c0_i32, %c0_i32_0 : i32, i32
  }
  func.func @transform_5(%arg0: i32) -> (i32, i32) {
    %c0_i32 = arith.constant 0 : i32
    %c0_i32_0 = arith.constant 0 : i32
    %c0_i32_1 = arith.constant 0 : i32
    return %c0_i32, %c0_i32_0 : i32, i32
  }
  func.func @transform_6(%arg0: i32) -> (i32, i32) {
    %c0_i32 = arith.constant 0 : i32
    %c0_i32_0 = arith.constant 0 : i32
    %c0_i32_1 = arith.constant 0 : i32
    return %c0_i32, %c0_i32_0 : i32, i32
  }
  func.func @transform_7(%arg0: i32) -> (i32, i32, i32) {
    %c0_i32 = arith.constant 0 : i32
    %c0_i32_0 = arith.constant 0 : i32
    %c0_i32_1 = arith.constant 0 : i32
    return %arg0, %c0_i32, %c0_i32_0 : i32, i32, i32
  }
}

</mosaic_0001>

<llo_original>
// kernel: anti_layer_segment.5
$region0: #{anti_layer_segment.5}
  #allocation0 [shape = 'u32[]', space=smem, size = 0x4, offset = 0x4, fixed_abs, tag = 'smem constant byte address 0x4 - core index']
  #allocation1 [shape = 'u32[144,128]{1,0:T(1,128)}', space=vmem, size = 0x12000, scoped, tag = 'internal scratch']
  %s0 = inlined_call_operand.vmem [shape: f32[2,32], index: 0, kind: input, shape index: {}]
  %s1 = inlined_call_operand.hbm [shape: f32[32,32], index: 1, kind: input, shape index: {}]
  %s2 = inlined_call_operand.vmem [shape: f32[1,32], index: 2, kind: input, shape index: {}]
  %s3 = inlined_call_operand.vmem [shape: f32[2,32], index: 3, kind: output, shape index: {}]
  %s4 = sld [smem:[#allocation0]]
  $region26: #{anti_layer_segment.5} parent=0
    _
  %s6 = ssub.s32 1, %s4
  %s7 = scalar_select 0, %s6, %s4
  $region1: #{anti_layer_segment.5} parent=0
    #allocation2 [shape = 'u8[16384]{0}', space=vmem, size = 0x4000, scoped, tag = 'input window, operand 1, single buffered']
    #allocation3 [shape = 's32[1]{0}', space=sflag, size = 0x4, scoped, tag = 'scoped memory for anti_layer_segment.5']
    %8 = vsyncpa [#allocation3], 0
    // Predicated region
    $region2: #{anti_layer_segment.5} parent=1 // pred_check
      _
    $region3: #{anti_layer_segment.5} parent=1 // pred_check_branch
      %10 = sbr.rel (0) target = $region5
    $region4: #{anti_layer_segment.5} parent=1 // pred_region
      _
    $region5: #{anti_layer_segment.5} parent=1 // pred_fallthru
      _
    // Predicated region
    $region6: #{anti_layer_segment.5} parent=1 // pred_check
      _
    $region7: #{anti_layer_segment.5} parent=1 // pred_check_branch
      %12 = sbr.rel (0) target = $region9
    $region8: #{anti_layer_segment.5} parent=1 // pred_region
      %s14 = ssub.s32 512, 512
      %15 = vsyncadd [#allocation3], %s14
      %s16 = sshll.u32 [#allocation2], 4
      %s17 = int_to_ptr.vmem [resolvable:$true] %s16
      %22 = dma.hbm_to_vmem [thread:$0]  %s1, 512, %s17, [#allocation3], 128, 128, 8
    $region9: #{anti_layer_segment.5} parent=1 // pred_fallthru
      _
    // Predicated region
    $region10: #{anti_layer_segment.5} parent=1 // pred_check
      _
    $region11: #{anti_layer_segment.5} parent=1 // pred_check_branch
      %24 = sbr.rel (0) target = $region13
    $region12: #{anti_layer_segment.5} parent=1 // pred_region
      _
    $region13: #{anti_layer_segment.5} parent=1 // pred_fallthru
      _
    // Predicated region
    $region14: #{anti_layer_segment.5} parent=1 // pred_check
      _
    $region15: #{anti_layer_segment.5} parent=1 // pred_check_branch
      %26 = sbr.rel (0) target = $region17
    $region16: #{anti_layer_segment.5} parent=1 // pred_region
      %27 = dma.done [#allocation3], 512
    $region17: #{anti_layer_segment.5} parent=1 // pred_fallthru
      _
    %v28 = vld [vmem:[%s0] sm:$0x3]
    %v29 = vld [vmem:[#allocation2] sm:$0xff]
    %v30 = vld [vmem:[#allocation2 + $0x8] sm:$0xff]
    %v31 = vld [vmem:[#allocation2 + $0x10] sm:$0xff]
    %v32 = vld [vmem:[#allocation2 + $0x18] sm:$0xff]
    %v33 = vld [vmem:[%s2] sm:$0x1]
    %v35 = vlaneseq
    %v36 = vshrl.u32 %v35, 7
    %v37 = vsub.s32 0, %v36
    %v38 = vrot.slane %v33, %v37
    %vm40 = vcmask 261120
    %v42 = vsel %vm40, %v28, 0
    %44 = vmatprep.subr.mxu0 0.0
    %45 = vmatpush1.msra.mxu0 %v29
    %46 = vmatprep.subr.mxu0 0.0
    %47 = vmatpush1.msra.mxu0 %v30
    %48 = vmatprep.subr.mxu0 0.0
    %49 = vmatpush1.msra.mxu0 %v31
    %50 = vmatprep.subr.mxu0 0.0
    %51 = vmatpush1.msra.mxu0 %v32
    %52 = vmatprep.subr.mxu0 0.0
    %53 = vmatpush1.msra.mxu0 0.0
    %54 = vmatprep.subr.mxu0 0.0
    %55 = vmatpush1.msra.mxu0 0.0
    %56 = vmatprep.subr.mxu0 0.0
    %57 = vmatpush1.msra.mxu0 0.0
    %58 = vmatprep.subr.mxu0 0.0
    %59 = vmatpush1.msra.mxu0 0.0
    %60 = vmatprep.subr.mxu0 0.0
    %61 = vmatpush1.msra.mxu0 0.0
    %62 = vmatprep.subr.mxu0 0.0
    %63 = vmatpush1.msra.mxu0 0.0
    %64 = vmatprep.subr.mxu0 0.0
    %65 = vmatpush1.msra.mxu0 0.0
    %66 = vmatprep.subr.mxu0 0.0
    %67 = vmatpush1.msra.mxu0 0.0
    %68 = vmatprep.subr.mxu0 0.0
    %69 = vmatpush1.msra.mxu0 0.0
    %70 = vmatprep.subr.mxu0 0.0
    %71 = vmatpush1.msra.mxu0 0.0
    %72 = vmatprep.subr.mxu0 0.0
    %73 = vmatpush1.msra.mxu0 0.0
    %74 = vmatprep.subr.mxu0 0.0
    %75 = vmatpush1.msra.mxu0 0.0
    %76 = vmatprep.subr.mxu0 0.0
    %77 = vmatpush1.msra.mxu0 0.0
    %78 = vmatprep.subr.mxu0 0.0
    %79 = vmatpush1.msra.mxu0 0.0
    %80 = vmatprep.subr.mxu0 0.0
    %81 = vmatpush1.msra.mxu0 0.0
    %82 = vmatprep.subr.mxu0 0.0
    %83 = vmatpush1.msra.mxu0 0.0
    %84 = vmatprep.subr.mxu0 0.0
    %85 = vmatpush1.msra.mxu0 0.0
    %86 = vmatprep.subr.mxu0 0.0
    %87 = vmatpush1.msra.mxu0 0.0
    %88 = vmatprep.subr.mxu0 0.0
    %89 = vmatpush1.msra.mxu0 0.0
    %90 = vmatprep.subr.mxu0 0.0
    %91 = vmatpush1.msra.mxu0 0.0
    %92 = vmatprep.subr.mxu0 0.0
    %93 = vmatpush1.msra.mxu0 0.0
    %94 = vmatprep.subr.mxu0 0.0
    %95 = vmatpush1.msra.mxu0 0.0
    %96 = vmatprep.subr.mxu0 0.0
    %97 = vmatpush1.msra.mxu0 0.0
    %98 = vmatprep.subr.mxu0 0.0
    %99 = vmatpush1.msra.mxu0 0.0
    %100 = vmatprep.subr.mxu0 0.0
    %101 = vmatpush1.msra.mxu0 0.0
    %102 = vmatprep.subr.mxu0 0.0
    %103 = vmatpush1.msra.mxu0 0.0
    %104 = vmatprep.subr.mxu0 0.0
    %105 = vmatpush1.msra.mxu0 0.0
    %106 = vmatprep.subr.mxu0 0.0
    %107 = vmatpush1.msra.mxu0 0.0
    %108 = vmatprep.mubr.f32.mxu0 0.0
    %109 = vmatmul.mubr.f32.gmra.mrb[0].mxu0 %v42
    %v110 = vpop.f32.mrb[0].mxu0
    %v111 = vadd.f32 %v38, %v110
    %v112 = vpop.f32.mrb[0].mxu0
    %113 = vdwg.mxu0
    %vm114 = vcmask 254976
    %115 = vst.msk [vmem:[%s3] sm:$0x3] %vm114, %v111
    // Predicated region
    $region18: #{anti_layer_segment.5} parent=1 // pred_check
      _
    $region19: #{anti_layer_segment.5} parent=1 // pred_check_branch
      %117 = sbr.rel (0) target = $region21
    $region20: #{anti_layer_segment.5} parent=1 // pred_region
      _
    $region21: #{anti_layer_segment.5} parent=1 // pred_fallthru
      _
    // Predicated region
    $region22: #{anti_layer_segment.5} parent=1 // pred_check
      _
    $region23: #{anti_layer_segment.5} parent=1 // pred_check_branch
      %119 = sbr.rel (0) target = $region25
    $region24: #{anti_layer_segment.5} parent=1 // pred_region
      _
    $region25: #{anti_layer_segment.5} parent=1 // pred_fallthru
      _
    %120 = vsyncpa [#allocation3], 1

// kernel: anti_layer_segment.6
$region0: #{anti_layer_segment.6}
  #allocation0 [shape = 'u32[]', space=smem, size = 0x4, offset = 0x4, fixed_abs, tag = 'smem constant byte address 0x4 - core index']
  #allocation1 [shape = 'u32[144,128]{1,0:T(1,128)}', space=vmem, size = 0x12000, scoped, tag = 'internal scratch']
  %s0 = inlined_call_operand.vmem [shape: f32[2,2,8,32], index: 0, kind: input, shape index: {}]
  %s1 = inlined_call_operand.vmem [shape: f32[2,32,32], index: 1, kind: input, shape index: {}]
  %s2 = inlined_call_operand.vmem [shape: f32[2,32,32], index: 2, kind: input, shape index: {}]
  %s3 = inlined_call_operand.vmem [shape: f32[2,32,32], index: 3, kind: input, shape index: {}]
  %s4 = inlined_call_operand.vmem [shape: f32[2,1,32], index: 4, kind: input, shape index: {}]
  %s5 = inlined_call_operand.vmem [shape: f32[2,1,32], index: 5, kind: input, shape index: {}]
  %s6 = inlined_call_operand.vmem [shape: f32[2,1,32], index: 6, kind: input, shape index: {}]
  %s7 = inlined_call_operand.vmem [shape: f32[2,2,8,32], index: 7, kind: output, shape index: {}]
  %s8 = sld [smem:[#allocation0]]
  $region61: #{anti_layer_segment.6} parent=0
    _
  %s10 = ssub.s32 1, %s8
  %s11 = scalar_select 0, %s10, %s8
  loop: start=0, step=1, limit=6
  $region2: #{anti_layer_segment.6} parent=0 // loop_pre_header
    _
  $region3: #{anti_layer_segment.6} parent=0 // loop_header
    %s13 = sphi 0, %s17
    %p14 = scmp.ge.s32.totalorder %s13, 6
    %s20 = sphi 0, %s32
    %s21 = sphi 0, %s28
    %s22 = sphi 0, %s20
    %s23 = sphi 0, %s21
    %s24 = sphi 0, %s22
    %s25 = sphi 0, %s23
    %s37 = sphi 0, %s39
    %s40 = sphi 0, %s37
    %s41 = sphi 0, %s40
    %s57 = sphi 0, %s41
    %s63 = sphi 0, %s65
    %s66 = sphi 0, %s63
    %s67 = sphi 0, %s66
    %s83 = sphi 0, %s67
    %s89 = sphi 0, %s91
    %s92 = sphi 0, %s89
    %s93 = sphi 0, %s92
    %s109 = sphi 0, %s93
    %s115 = sphi 0, %s117
    %s118 = sphi 0, %s115
    %s119 = sphi 0, %s118
    %s135 = sphi 0, %s119
    %s141 = sphi 0, %s143
    %s144 = sphi 0, %s141
    %s145 = sphi 0, %s144
    %s161 = sphi 0, %s145
    %s167 = sphi 0, %s169
    %s170 = sphi 0, %s167
    %s171 = sphi 0, %s170
    %s187 = sphi 0, %s171
    %s193 = sphi 0, %s195
    %s196 = sphi 0, %s193
    %s197 = sphi 0, %s196
    %s213 = sphi 0, %s197
    %s221 = sphi 0, %s223
    %s224 = sphi 0, %s221
    %s225 = sphi 0, %s224
    %s241 = sphi 0, %s225
  $region4: #{anti_layer_segment.6} parent=0 // loop_header_branch
    %16 = sbr.rel (%p14) target = $region8
  $region5: #{anti_layer_segment.6} parent=0 // loop_body
    %s18 = ssub.s32 %s13, 1
    %s19 = ssub.s32 %s13, 2
    %s26 = sadd.s32 1, %s21
    %p27 = scmp.ge.s32.totalorder %s26, 2
    %s28 = scalar_select %p27, 0, %s26
    %s29 = sadd.s32 1, %s20
    %s30 = scalar_select %p27, %s29, %s20
    %p31 = scmp.ge.s32.totalorder %s30, 2
    %s32 = scalar_select %p31, 0, %s30
    %s33 = ssub.s32 %s21, %s28
    %s34 = ssub.s32 %s20, %s32
    %s35 = sor.u32 %s33, %s34
    %p36 = scmp.eq.s32.totalorder %s35, 0
    %s38 = sadd.s32 %s37, 1
    %s39 = scalar_select %p36, %s37, %s38
    %p42 = pneg %p36
    %p43 = scmp.eq.s32.totalorder %s13, 3
    %p44 = por %p42, %p43
    %p45 = scmp.ne.s32.totalorder %s37, %s40
    %p46 = scmp.eq.s32.totalorder %s13, 0
    %p47 = por %p45, %p46
    %p48 = scmp.ne.s32.totalorder %s37, %s40
    %p49 = scmp.eq.s32.totalorder %s18, 3
    %p50 = por %p48, %p49
    %p51 = scmp.ne.s32.totalorder %s40, %s41
    %p52 = scmp.eq.s32.totalorder %s18, 0
    %p53 = por %p51, %p52
    %p54 = scmp.ne.s32.totalorder %s40, %s41
    %p55 = scmp.eq.s32.totalorder %s19, 3
    %p56 = por %p54, %p55
    %p58 = scmp.ne.s32.totalorder %s41, %s57
    %p59 = scmp.eq.s32.totalorder %s19, 0
    %p60 = por %p58, %p59
    %s61 = ssub.s32 %s20, %s32
    %p62 = scmp.eq.s32.totalorder %s61, 0
    %s64 = sadd.s32 %s63, 1
    %s65 = scalar_select %p62, %s63, %s64
    %p68 = pneg %p62
    %p69 = scmp.eq.s32.totalorder %s13, 3
    %p70 = por %p68, %p69
    %p71 = scmp.ne.s32.totalorder %s63, %s66
    %p72 = scmp.eq.s32.totalorder %s13, 0
    %p73 = por %p71, %p72
    %p74 = scmp.ne.s32.totalorder %s63, %s66
    %p75 = scmp.eq.s32.totalorder %s18, 3
    %p76 = por %p74, %p75
    %p77 = scmp.ne.s32.totalorder %s66, %s67
    %p78 = scmp.eq.s32.totalorder %s18, 0
    %p79 = por %p77, %p78
    %p80 = scmp.ne.s32.totalorder %s66, %s67
    %p81 = scmp.eq.s32.totalorder %s19, 3
    %p82 = por %p80, %p81
    %p84 = scmp.ne.s32.totalorder %s67, %s83
    %p85 = scmp.eq.s32.totalorder %s19, 0
    %p86 = por %p84, %p85
    %s87 = ssub.s32 %s20, %s32
    %p88 = scmp.eq.s32.totalorder %s87, 0
    %s90 = sadd.s32 %s89, 1
    %s91 = scalar_select %p88, %s89, %s90
    %p94 = pneg %p88
    %p95 = scmp.eq.s32.totalorder %s13, 3
    %p96 = por %p94, %p95
    %p97 = scmp.ne.s32.totalorder %s89, %s92
    %p98 = scmp.eq.s32.totalorder %s13, 0
    %p99 = por %p97, %p98
    %p100 = scmp.ne.s32.totalorder %s89, %s92
    %p101 = scmp.eq.s32.totalorder %s18, 3
    %p102 = por %p100, %p101
    %p103 = scmp.ne.s32.totalorder %s92, %s93
    %p104 = scmp.eq.s32.totalorder %s18, 0
    %p105 = por %p103, %p104
    %p106 = scmp.ne.s32.totalorder %s92, %s93
    %p107 = scmp.eq.s32.totalorder %s19, 3
    %p108 = por %p106, %p107
    %p110 = scmp.ne.s32.totalorder %s93, %s109
    %p111 = scmp.eq.s32.totalorder %s19, 0
    %p112 = por %p110, %p111
    %s113 = ssub.s32 %s20, %s32
    %p114 = scmp.eq.s32.totalorder %s113, 0
    %s116 = sadd.s32 %s115, 1
    %s117 = scalar_select %p114, %s115, %s116
    %p120 = pneg %p114
    %p121 = scmp.eq.s32.totalorder %s13, 3
    %p122 = por %p120, %p121
    %p123 = scmp.ne.s32.totalorder %s115, %s118
    %p124 = scmp.eq.s32.totalorder %s13, 0
    %p125 = por %p123, %p124
    %p126 = scmp.ne.s32.totalorder %s115, %s118
    %p127 = scmp.eq.s32.totalorder %s18, 3
    %p128 = por %p126, %p127
    %p129 = scmp.ne.s32.totalorder %s118, %s119
    %p130 = scmp.eq.s32.totalorder %s18, 0
    %p131 = por %p129, %p130
    %p132 = scmp.ne.s32.totalorder %s118, %s119
    %p133 = scmp.eq.s32.totalorder %s19, 3
    %p134 = por %p132, %p133
    %p136 = scmp.ne.s32.totalorder %s119, %s135
    %p137 = scmp.eq.s32.totalorder %s19, 0
    %p138 = por %p136, %p137
    %s139 = ssub.s32 %s20, %s32
    %p140 = scmp.eq.s32.totalorder %s139, 0
    %s142 = sadd.s32 %s141, 1
    %s143 = scalar_select %p140, %s141, %s142
    %p146 = pneg %p140
    %p147 = scmp.eq.s32.totalorder %s13, 3
    %p148 = por %p146, %p147
    %p149 = scmp.ne.s32.totalorder %s141, %s144
    %p150 = scmp.eq.s32.totalorder %s13, 0
    %p151 = por %p149, %p150
    %p152 = scmp.ne.s32.totalorder %s141, %s144
    %p153 = scmp.eq.s32.totalorder %s18, 3
    %p154 = por %p152, %p153
    %p155 = scmp.ne.s32.totalorder %s144, %s145
    %p156 = scmp.eq.s32.totalorder %s18, 0
    %p157 = por %p155, %p156
    %p158 = scmp.ne.s32.totalorder %s144, %s145
    %p159 = scmp.eq.s32.totalorder %s19, 3
    %p160 = por %p158, %p159
    %p162 = scmp.ne.s32.totalorder %s145, %s161
    %p163 = scmp.eq.s32.totalorder %s19, 0
    %p164 = por %p162, %p163
    %s165 = ssub.s32 %s20, %s32
    %p166 = scmp.eq.s32.totalorder %s165, 0
    %s168 = sadd.s32 %s167, 1
    %s169 = scalar_select %p166, %s167, %s168
    %p172 = pneg %p166
    %p173 = scmp.eq.s32.totalorder %s13, 3
    %p174 = por %p172, %p173
    %p175 = scmp.ne.s32.totalorder %s167, %s170
    %p176 = scmp.eq.s32.totalorder %s13, 0
    %p177 = por %p175, %p176
    %p178 = scmp.ne.s32.totalorder %s167, %s170
    %p179 = scmp.eq.s32.totalorder %s18, 3
    %p180 = por %p178, %p179
    %p181 = scmp.ne.s32.totalorder %s170, %s171
    %p182 = scmp.eq.s32.totalorder %s18, 0
    %p183 = por %p181, %p182
    %p184 = scmp.ne.s32.totalorder %s170, %s171
    %p185 = scmp.eq.s32.totalorder %s19, 3
    %p186 = por %p184, %p185
    %p188 = scmp.ne.s32.totalorder %s171, %s187
    %p189 = scmp.eq.s32.totalorder %s19, 0
    %p190 = por %p188, %p189
    %s191 = ssub.s32 %s20, %s32
    %p192 = scmp.eq.s32.totalorder %s191, 0
    %s194 = sadd.s32 %s193, 1
    %s195 = scalar_select %p192, %s193, %s194
    %p198 = pneg %p192
    %p199 = scmp.eq.s32.totalorder %s13, 3
    %p200 = por %p198, %p199
    %p201 = scmp.ne.s32.totalorder %s193, %s196
    %p202 = scmp.eq.s32.totalorder %s13, 0
    %p203 = por %p201, %p202
    %p204 = scmp.ne.s32.totalorder %s193, %s196
    %p205 = scmp.eq.s32.totalorder %s18, 3
    %p206 = por %p204, %p205
    %p207 = scmp.ne.s32.totalorder %s196, %s197
    %p208 = scmp.eq.s32.totalorder %s18, 0
    %p209 = por %p207, %p208
    %p210 = scmp.ne.s32.totalorder %s196, %s197
    %p211 = scmp.eq.s32.totalorder %s19, 3
    %p212 = por %p210, %p211
    %p214 = scmp.ne.s32.totalorder %s197, %s213
    %p215 = scmp.eq.s32.totalorder %s19, 0
    %p216 = por %p214, %p215
    %s217 = ssub.s32 %s21, %s28
    %s218 = ssub.s32 %s20, %s32
    %s219 = sor.u32 %s217, %s218
    %p220 = scmp.eq.s32.totalorder %s219, 0
    %s222 = sadd.s32 %s221, 1
    %s223 = scalar_select %p220, %s221, %s222
    %p226 = pneg %p220
    %p227 = scmp.eq.s32.totalorder %s13, 3
    %p228 = por %p226, %p227
    %p229 = scmp.ne.s32.totalorder %s221, %s224
    %p230 = scmp.eq.s32.totalorder %s13, 0
    %p231 = por %p229, %p230
    %p232 = scmp.ne.s32.totalorder %s221, %s224
    %p233 = scmp.eq.s32.totalorder %s18, 3
    %p234 = por %p232, %p233
    %p235 = scmp.ne.s32.totalorder %s224, %s225
    %p236 = scmp.eq.s32.totalorder %s18, 0
    %p237 = por %p235, %p236
    %p238 = scmp.ne.s32.totalorder %s224, %s225
    %p239 = scmp.eq.s32.totalorder %s19, 3
    %p240 = por %p238, %p239
    %p242 = scmp.ne.s32.totalorder %s225, %s241
    %p243 = scmp.eq.s32.totalorder %s19, 0
    %p244 = por %p242, %p243
    %p245 = scmp.le.s32.totalorder 1, %s13
    %p246 = scmp.lt.s32.totalorder %s13, 5
    %p247 = pnand %p245, %p246
    %p248 = pneg %p247
    // Predicated region
    $region9: #{anti_layer_segment.6} parent=5 // pred_check
      _
    $region10: #{anti_layer_segment.6} parent=5 // pred_check_branch
      %250 = sbr.rel (%p247) target = $region12
    $region11: #{anti_layer_segment.6} parent=5 // pred_region
      %s251 = ssub.s32 %s13, 1
    $region12: #{anti_layer_segment.6} parent=5 // pred_fallthru
      _
    %p252 = scmp.lt.s32.totalorder %s13, 4
    // Predicated region
    $region13: #{anti_layer_segment.6} parent=5 // pred_check
      %p253 = pneg %p252
    $region14: #{anti_layer_segment.6} parent=5 // pred_check_branch
      %255 = sbr.rel (%p253) target = $region16
    $region15: #{anti_layer_segment.6} parent=5 // pred_region
      // Predicated region
      $region17: #{anti_layer_segment.6} parent=15 // pred_check
        %p256 = pneg %p47
      $region18: #{anti_layer_segment.6} parent=15 // pred_check_branch
        %258 = sbr.rel (%p256) target = $region20
      $region19: #{anti_layer_segment.6} parent=15 // pred_region
        %p259 = scmp.lt.s32.totalorder %s21, 1
        %s260 = scalar_select %p259, %s21, 1
        %p261 = scmp.lt.s32.totalorder %s20, 1
        %s262 = scalar_select %p261, %s20, 1
        %s263 = smul.addr %s260, 2
        %s264 = sadd.s32 %s262, %s263
        %s265 = smul.addr %s264, 8
        %s266 = scalar_lea.vmem %s0, %s265
      $region20: #{anti_layer_segment.6} parent=15 // pred_fallthru
        _
      // Predicated region
      $region21: #{anti_layer_segment.6} parent=15 // pred_check
        %p267 = pneg %p73
      $region22: #{anti_layer_segment.6} parent=15 // pred_check_branch
        %269 = sbr.rel (%p267) target = $region24
      $region23: #{anti_layer_segment.6} parent=15 // pred_region
        %p270 = scmp.lt.s32.totalorder %s20, 1
        %s271 = scalar_select %p270, %s20, 1
        %s272 = smul.addr %s271, 4
        %s273 = smul.addr %s272, 8
        %s274 = scalar_lea.vmem %s1, %s273
      $region24: #{anti_layer_segment.6} parent=15 // pred_fallthru
        _
      // Predicated region
      $region25: #{anti_layer_segment.6} parent=15 // pred_check
        %p275 = pneg %p99
      $region26: #{anti_layer_segment.6} parent=15 // pred_check_branch
        %277 = sbr.rel (%p275) target = $region28
      $region27: #{anti_layer_segment.6} parent=15 // pred_region
        %p278 = scmp.lt.s32.totalorder %s20, 1
        %s279 = scalar_select %p278, %s20, 1
        %s280 = smul.addr %s279, 4
        %s281 = smul.addr %s280, 8
        %s282 = scalar_lea.vmem %s2, %s281
      $region28: #{anti_layer_segment.6} parent=15 // pred_fallthru
        _
      // Predicated region
      $region29: #{anti_layer_segment.6} parent=15 // pred_check
        %p283 = pneg %p125
      $region30: #{anti_layer_segment.6} parent=15 // pred_check_branch
        %285 = sbr.rel (%p283) target = $region32
      $region31: #{anti_layer_segment.6} parent=15 // pred_region
        %p286 = scmp.lt.s32.totalorder %s20, 1
        %s287 = scalar_select %p286, %s20, 1
        %s288 = smul.addr %s287, 4
        %s289 = smul.addr %s288, 8
        %s290 = scalar_lea.vmem %s3, %s289
      $region32: #{anti_layer_segment.6} parent=15 // pred_fallthru
        _
      // Predicated region
      $region33: #{anti_layer_segment.6} parent=15 // pred_check
        %p291 = pneg %p151
      $region34: #{anti_layer_segment.6} parent=15 // pred_check_branch
        %293 = sbr.rel (%p291) target = $region36
      $region35: #{anti_layer_segment.6} parent=15 // pred_region
        %p294 = scmp.lt.s32.totalorder %s20, 1
        %s295 = scalar_select %p294, %s20, 1
        %s296 = scalar_lea.vmem %s4, %s295
      $region36: #{anti_layer_segment.6} parent=15 // pred_fallthru
        _
      // Predicated region
      $region37: #{anti_layer_segment.6} parent=15 // pred_check
        %p297 = pneg %p177
      $region38: #{anti_layer_segment.6} parent=15 // pred_check_branch
        %299 = sbr.rel (%p297) target = $region40
      $region39: #{anti_layer_segment.6} parent=15 // pred_region
        %p300 = scmp.lt.s32.totalorder %s20, 1
        %s301 = scalar_select %p300, %s20, 1
        %s302 = scalar_lea.vmem %s5, %s301
      $region40: #{anti_layer_segment.6} parent=15 // pred_fallthru
        _
      // Predicated region
      $region41: #{anti_layer_segment.6} parent=15 // pred_check
        %p303 = pneg %p203
      $region42: #{anti_layer_segment.6} parent=15 // pred_check_branch
        %305 = sbr.rel (%p303) target = $region44
      $region43: #{anti_layer_segment.6} parent=15 // pred_region
        %p306 = scmp.lt.s32.totalorder %s20, 1
        %s307 = scalar_select %p306, %s20, 1
        %s308 = scalar_lea.vmem %s6, %s307
      $region44: #{anti_layer_segment.6} parent=15 // pred_fallthru
        _
    $region16: #{anti_layer_segment.6} parent=5 // pred_fallthru
      _
    %p309 = scmp.le.s32.totalorder 1, %s13
    %p310 = scmp.lt.s32.totalorder %s13, 5
    %p311 = pnand %p309, %p310
    %p312 = pneg %p311
    // Predicated region
    $region45: #{anti_layer_segment.6} parent=5 // pred_check
      _
    $region46: #{anti_layer_segment.6} parent=5 // pred_check_branch
      %314 = sbr.rel (%p311) target = $region48
    $region47: #{anti_layer_segment.6} parent=5 // pred_region
      %s315 = ssub.s32 %s13, 1
      %p316 = scmp.lt.s32.totalorder %s23, 1
      %s317 = scalar_select %p316, %s23, 1
      %p318 = scmp.lt.s32.totalorder %s22, 1
      %s319 = scalar_select %p318, %s22, 1
      %s320 = smul.addr %s317, 2
      %s321 = sadd.s32 %s319, %s320
      %s322 = smul.addr %s321, 8
      %s323 = scalar_lea.vmem %s0, %s322
      %p324 = pneg %p53
      %p325 = pneg %p50
      %p326 = scmp.lt.s32.totalorder %s22, 1
      %s327 = scalar_select %p326, %s22, 1
      %s328 = smul.addr %s327, 4
      %s329 = smul.addr %s328, 8
      %s330 = scalar_lea.vmem %s1, %s329
      %p331 = pneg %p79
      %p332 = pneg %p76
      %p333 = scmp.lt.s32.totalorder %s22, 1
      %s334 = scalar_select %p333, %s22, 1
      %s335 = smul.addr %s334, 4
      %s336 = smul.addr %s335, 8
      %s337 = scalar_lea.vmem %s2, %s336
      %p338 = pneg %p105
      %p339 = pneg %p102
      %p340 = scmp.lt.s32.totalorder %s22, 1
      %s341 = scalar_select %p340, %s22, 1
      %s342 = smul.addr %s341, 4
      %s343 = smul.addr %s342, 8
      %s344 = scalar_lea.vmem %s3, %s343
      %p345 = pneg %p131
      %p346 = pneg %p128
      %p347 = scmp.lt.s32.totalorder %s22, 1
      %s348 = scalar_select %p347, %s22, 1
      %s349 = scalar_lea.vmem %s4, %s348
      %p350 = pneg %p157
      %p351 = pneg %p154
      %p352 = scmp.lt.s32.totalorder %s22, 1
      %s353 = scalar_select %p352, %s22, 1
      %s354 = scalar_lea.vmem %s5, %s353
      %p355 = pneg %p183
      %p356 = pneg %p180
      %p357 = scmp.lt.s32.totalorder %s22, 1
      %s358 = scalar_select %p357, %s22, 1
      %s359 = scalar_lea.vmem %s6, %s358
      %p360 = pneg %p209
      %p361 = pneg %p206
      %p362 = pneg %p237
      %p363 = pneg %p234
      %p364 = scmp.lt.s32.totalorder %s23, 1
      %s365 = scalar_select %p364, %s23, 1
      %p366 = scmp.lt.s32.totalorder %s22, 1
      %s367 = scalar_select %p366, %s22, 1
      %s368 = smul.addr %s365, 2
      %s369 = sadd.s32 %s367, %s368
      %s370 = smul.addr %s369, 8
      %s371 = scalar_lea.vmem %s7, %s370
      %p372 = scmp.lt.s32.totalorder %s23, 1
      %s373 = scalar_select %p372, %s23, 1
      %p374 = scmp.lt.s32.totalorder %s22, 1
      %s375 = scalar_select %p374, %s22, 1
      %s376 = smul.addr %s373, 2
      %s377 = sadd.s32 %s375, %s376
      %s378 = smul.addr %s377, 8
      %s379 = scalar_lea.vmem %s0, %s378
      %p380 = scmp.lt.s32.totalorder %s22, 1
      %s381 = scalar_select %p380, %s22, 1
      %s382 = smul.addr %s381, 4
      %s383 = smul.addr %s382, 8
      %s384 = scalar_lea.vmem %s1, %s383
      %p385 = scmp.lt.s32.totalorder %s22, 1
      %s386 = scalar_select %p385, %s22, 1
      %s387 = smul.addr %s386, 4
      %s388 = smul.addr %s387, 8
      %s389 = scalar_lea.vmem %s2, %s388
      %p390 = scmp.lt.s32.totalorder %s22, 1
      %s391 = scalar_select %p390, %s22, 1
      %s392 = smul.addr %s391, 4
      %s393 = smul.addr %s392, 8
      %s394 = scalar_lea.vmem %s3, %s393
      %p395 = scmp.lt.s32.totalorder %s22, 1
      %s396 = scalar_select %p395, %s22, 1
      %s397 = scalar_lea.vmem %s4, %s396
      %p398 = scmp.lt.s32.totalorder %s22, 1
      %s399 = scalar_select %p398, %s22, 1
      %s400 = scalar_lea.vmem %s5, %s399
      %p401 = scmp.lt.s32.totalorder %s22, 1
      %s402 = scalar_select %p401, %s22, 1
      %s403 = scalar_lea.vmem %s6, %s402
      %p404 = scmp.lt.s32.totalorder %s23, 1
      %s405 = scalar_select %p404, %s23, 1
      %p406 = scmp.lt.s32.totalorder %s22, 1
      %s407 = scalar_select %p406, %s22, 1
      %s408 = smul.addr %s405, 2
      %s409 = sadd.s32 %s407, %s408
      %s410 = smul.addr %s409, 8
      %s411 = scalar_lea.vmem %s7, %s410
      %v412 = vld [vmem:[%s379] sm:$0xff]
      %v413 = vld [vmem:[%s384] sm:$0xff]
      %v414 = vld [vmem:[%s384 + $0x8] sm:$0xff]
      %v415 = vld [vmem:[%s384 + $0x10] sm:$0xff]
      %v416 = vld [vmem:[%s384 + $0x18] sm:$0xff]
      %v417 = vld [vmem:[%s397] sm:$0x1]
      %v419 = vlaneseq
      %v420 = vshrl.u32 %v419, 7
      %v421 = vsub.s32 0, %v420
      %v422 = vrot.slane %v417, %v421
      %vm424 = vcmask 261120
      %v426 = vsel %vm424, %v412, 0
      %428 = vmatprep.subr.mxu0 0.0
      %429 = vmatpush1.msra.mxu0 %v413
      %430 = vmatprep.subr.mxu0 0.0
      %431 = vmatpush1.msra.mxu0 %v414
      %432 = vmatprep.subr.mxu0 0.0
      %433 = vmatpush1.msra.mxu0 %v415
      %434 = vmatprep.subr.mxu0 0.0
      %435 = vmatpush1.msra.mxu0 %v416
      %436 = vmatprep.subr.mxu0 0.0
      %437 = vmatpush1.msra.mxu0 0.0
      %438 = vmatprep.subr.mxu0 0.0
      %439 = vmatpush1.msra.mxu0 0.0
      %440 = vmatprep.subr.mxu0 0.0
      %441 = vmatpush1.msra.mxu0 0.0
      %442 = vmatprep.subr.mxu0 0.0
      %443 = vmatpush1.msra.mxu0 0.0
      %444 = vmatprep.subr.mxu0 0.0
      %445 = vmatpush1.msra.mxu0 0.0
      %446 = vmatprep.subr.mxu0 0.0
      %447 = vmatpush1.msra.mxu0 0.0
      %448 = vmatprep.subr.mxu0 0.0
      %449 = vmatpush1.msra.mxu0 0.0
      %450 = vmatprep.subr.mxu0 0.0
      %451 = vmatpush1.msra.mxu0 0.0
      %452 = vmatprep.subr.mxu0 0.0
      %453 = vmatpush1.msra.mxu0 0.0
      %454 = vmatprep.subr.mxu0 0.0
      %455 = vmatpush1.msra.mxu0 0.0
      %456 = vmatprep.subr.mxu0 0.0
      %457 = vmatpush1.msra.mxu0 0.0
      %458 = vmatprep.subr.mxu0 0.0
      %459 = vmatpush1.msra.mxu0 0.0
      %460 = vmatprep.subr.mxu0 0.0
      %461 = vmatpush1.msra.mxu0 0.0
      %462 = vmatprep.subr.mxu0 0.0
      %463 = vmatpush1.msra.mxu0 0.0
      %464 = vmatprep.subr.mxu0 0.0
      %465 = vmatpush1.msra.mxu0 0.0
      %466 = vmatprep.subr.mxu0 0.0
      %467 = vmatpush1.msra.mxu0 0.0
      %468 = vmatprep.subr.mxu0 0.0
      %469 = vmatpush1.msra.mxu0 0.0
      %470 = vmatprep.subr.mxu0 0.0
      %471 = vmatpush1.msra.mxu0 0.0
      %472 = vmatprep.subr.mxu0 0.0
      %473 = vmatpush1.msra.mxu0 0.0
      %474 = vmatprep.subr.mxu0 0.0
      %475 = vmatpush1.msra.mxu0 0.0
      %476 = vmatprep.subr.mxu0 0.0
      %477 = vmatpush1.msra.mxu0 0.0
      %478 = vmatprep.subr.mxu0 0.0
      %479 = vmatpush1.msra.mxu0 0.0
      %480 = vmatprep.subr.mxu0 0.0
      %481 = vmatpush1.msra.mxu0 0.0
      %482 = vmatprep.subr.mxu0 0.0
      %483 = vmatpush1.msra.mxu0 0.0
      %484 = vmatprep.subr.mxu0 0.0
      %485 = vmatpush1.msra.mxu0 0.0
      %486 = vmatprep.subr.mxu0 0.0
      %487 = vmatpush1.msra.mxu0 0.0
      %488 = vmatprep.subr.mxu0 0.0
      %489 = vmatpush1.msra.mxu0 0.0
      %490 = vmatprep.subr.mxu0 0.0
      %491 = vmatpush1.msra.mxu0 0.0
      %492 = vmatprep.mubr.f32.mxu0 0.0
      %493 = vmatmul.mubr.f32.gmra.mrb[0].mxu0 %v426
      %v494 = vpop.f32.mrb[0].mxu0
      %v495 = vadd.f32 %v422, %v494
      %v496 = vpop.f32.mrb[0].mxu0
      %497 = vdwg.mxu0
      %v498 = vld [vmem:[%s389] sm:$0xff]
      %v499 = vld [vmem:[%s389 + $0x8] sm:$0xff]
      %v500 = vld [vmem:[%s389 + $0x10] sm:$0xff]
      %v501 = vld [vmem:[%s389 + $0x18] sm:$0xff]
      %v502 = vld [vmem:[%s400] sm:$0x1]
      %v504 = vlaneseq
      %v505 = vshrl.u32 %v504, 7
      %v506 = vsub.s32 0, %v505
      %v507 = vrot.slane %v502, %v506
      %509 = vmatprep.subr.mxu0 0.0
      %510 = vmatpush1.msra.mxu0 %v498
      %511 = vmatprep.subr.mxu0 0.0
      %512 = vmatpush1.msra.mxu0 %v499
      %513 = vmatprep.subr.mxu0 0.0
      %514 = vmatpush1.msra.mxu0 %v500
      %515 = vmatprep.subr.mxu0 0.0
      %516 = vmatpush1.msra.mxu0 %v501
      %517 = vmatprep.subr.mxu0 0.0
      %518 = vmatpush1.msra.mxu0 0.0
      %519 = vmatprep.subr.mxu0 0.0
      %520 = vmatpush1.msra.mxu0 0.0
      %521 = vmatprep.subr.mxu0 0.0
      %522 = vmatpush1.msra.mxu0 0.0
      %523 = vmatprep.subr.mxu0 0.0
      %524 = vmatpush1.msra.mxu0 0.0
      %525 = vmatprep.subr.mxu0 0.0
      %526 = vmatpush1.msra.mxu0 0.0
      %527 = vmatprep.subr.mxu0 0.0
      %528 = vmatpush1.msra.mxu0 0.0
      %529 = vmatprep.subr.mxu0 0.0
      %530 = vmatpush1.msra.mxu0 0.0
      %531 = vmatprep.subr.mxu0 0.0
      %532 = vmatpush1.msra.mxu0 0.0
      %533 = vmatprep.subr.mxu0 0.0
      %534 = vmatpush1.msra.mxu0 0.0
      %535 = vmatprep.subr.mxu0 0.0
      %536 = vmatpush1.msra.mxu0 0.0
      %537 = vmatprep.subr.mxu0 0.0
      %538 = vmatpush1.msra.mxu0 0.0
      %539 = vmatprep.subr.mxu0 0.0
      %540 = vmatpush1.msra.mxu0 0.0
      %541 = vmatprep.subr.mxu0 0.0
      %542 = vmatpush1.msra.mxu0 0.0
      %543 = vmatprep.subr.mxu0 0.0
      %544 = vmatpush1.msra.mxu0 0.0
      %545 = vmatprep.subr.mxu0 0.0
      %546 = vmatpush1.msra.mxu0 0.0
      %547 = vmatprep.subr.mxu0 0.0
      %548 = vmatpush1.msra.mxu0 0.0
      %549 = vmatprep.subr.mxu0 0.0
      %550 = vmatpush1.msra.mxu0 0.0
      %551 = vmatprep.subr.mxu0 0.0
      %552 = vmatpush1.msra.mxu0 0.0
      %553 = vmatprep.subr.mxu0 0.0
      %554 = vmatpush1.msra.mxu0 0.0
      %555 = vmatprep.subr.mxu0 0.0
      %556 = vmatpush1.msra.mxu0 0.0
      %557 = vmatprep.subr.mxu0 0.0
      %558 = vmatpush1.msra.mxu0 0.0
      %559 = vmatprep.subr.mxu0 0.0
      %560 = vmatpush1.msra.mxu0 0.0
      %561 = vmatprep.subr.mxu0 0.0
      %562 = vmatpush1.msra.mxu0 0.0
      %563 = vmatprep.subr.mxu0 0.0
      %564 = vmatpush1.msra.mxu0 0.0
      %565 = vmatprep.subr.mxu0 0.0
      %566 = vmatpush1.msra.mxu0 0.0
      %567 = vmatprep.subr.mxu0 0.0
      %568 = vmatpush1.msra.mxu0 0.0
      %569 = vmatprep.subr.mxu0 0.0
      %570 = vmatpush1.msra.mxu0 0.0
      %571 = vmatprep.subr.mxu0 0.0
      %572 = vmatpush1.msra.mxu0 0.0
      %573 = vmatprep.mubr.f32.mxu0 0.0
      %574 = vmatmul.mubr.f32.gmra.mrb[0].mxu0 %v426
      %v575 = vpop.f32.mrb[0].mxu0
      %v576 = vadd.f32 %v507, %v575
      %v577 = vpop.f32.mrb[0].mxu0
      %578 = vdwg.mxu0
      %v579 = vld [vmem:[%s394] sm:$0xff]
      %v580 = vld [vmem:[%s394 + $0x8] sm:$0xff]
      %v581 = vld [vmem:[%s394 + $0x10] sm:$0xff]
      %v582 = vld [vmem:[%s394 + $0x18] sm:$0xff]
      %v583 = vld [vmem:[%s403] sm:$0x1]
      %v585 = vlaneseq
      %v586 = vshrl.u32 %v585, 7
      %v587 = vsub.s32 0, %v586
      %v588 = vrot.slane %v583, %v587
      %590 = vmatprep.subr.mxu0 0.0
      %591 = vmatpush1.msra.mxu0 %v579
      %592 = vmatprep.subr.mxu0 0.0
      %593 = vmatpush1.msra.mxu0 %v580
      %594 = vmatprep.subr.mxu0 0.0
      %595 = vmatpush1.msra.mxu0 %v581
      %596 = vmatprep.subr.mxu0 0.0
      %597 = vmatpush1.msra.mxu0 %v582
      %598 = vmatprep.subr.mxu0 0.0
      %599 = vmatpush1.msra.mxu0 0.0
      %600 = vmatprep.subr.mxu0 0.0
      %601 = vmatpush1.msra.mxu0 0.0
      %602 = vmatprep.subr.mxu0 0.0
      %603 = vmatpush1.msra.mxu0 0.0
      %604 = vmatprep.subr.mxu0 0.0
      %605 = vmatpush1.msra.mxu0 0.0
      %606 = vmatprep.subr.mxu0 0.0
      %607 = vmatpush1.msra.mxu0 0.0
      %608 = vmatprep.subr.mxu0 0.0
      %609 = vmatpush1.msra.mxu0 0.0
      %610 = vmatprep.subr.mxu0 0.0
      %611 = vmatpush1.msra.mxu0 0.0
      %612 = vmatprep.subr.mxu0 0.0
      %613 = vmatpush1.msra.mxu0 0.0
      %614 = vmatprep.subr.mxu0 0.0
      %615 = vmatpush1.msra.mxu0 0.0
      %616 = vmatprep.subr.mxu0 0.0
      %617 = vmatpush1.msra.mxu0 0.0
      %618 = vmatprep.subr.mxu0 0.0
      %619 = vmatpush1.msra.mxu0 0.0
      %620 = vmatprep.subr.mxu0 0.0
      %621 = vmatpush1.msra.mxu0 0.0
      %622 = vmatprep.subr.mxu0 0.0
      %623 = vmatpush1.msra.mxu0 0.0
      %624 = vmatprep.subr.mxu0 0.0
      %625 = vmatpush1.msra.mxu0 0.0
      %626 = vmatprep.subr.mxu0 0.0
      %627 = vmatpush1.msra.mxu0 0.0
      %628 = vmatprep.subr.mxu0 0.0
      %629 = vmatpush1.msra.mxu0 0.0
      %630 = vmatprep.subr.mxu0 0.0
      %631 = vmatpush1.msra.mxu0 0.0
      %632 = vmatprep.subr.mxu0 0.0
      %633 = vmatpush1.msra.mxu0 0.0
      %634 = vmatprep.subr.mxu0 0.0
      %635 = vmatpush1.msra.mxu0 0.0
      %636 = vmatprep.subr.mxu0 0.0
      %637 = vmatpush1.msra.mxu0 0.0
      %638 = vmatprep.subr.mxu0 0.0
      %639 = vmatpush1.msra.mxu0 0.0
      %640 = vmatprep.subr.mxu0 0.0
      %641 = vmatpush1.msra.mxu0 0.0
      %642 = vmatprep.subr.mxu0 0.0
      %643 = vmatpush1.msra.mxu0 0.0
      %644 = vmatprep.subr.mxu0 0.0
      %645 = vmatpush1.msra.mxu0 0.0
      %646 = vmatprep.subr.mxu0 0.0
      %647 = vmatpush1.msra.mxu0 0.0
      %648 = vmatprep.subr.mxu0 0.0
      %649 = vmatpush1.msra.mxu0 0.0
      %650 = vmatprep.subr.mxu0 0.0
      %651 = vmatpush1.msra.mxu0 0.0
      %652 = vmatprep.subr.mxu0 0.0
      %653 = vmatpush1.msra.mxu0 0.0
      %654 = vmatprep.mubr.f32.mxu0 0.0
      %655 = vmatmul.mubr.f32.gmra.mrb[0].mxu0 %v426
      %v656 = vpop.f32.mrb[0].mxu0
      %v657 = vadd.f32 %v588, %v656
      %v658 = vpop.f32.mrb[0].mxu0
      %659 = vdwg.mxu0
      %vm660 = vcmask 64512
      %v662 = vsel %vm660, %v495, 0
      %v665 = vsel %vm660, %v576, 0
      %667 = vmatprep.subr.mxu0 0.0
      %668 = vmatpush1.xpose.msra.mxu0 %v665
      %669 = vmatprep.subr.mxu0 0.0
      %670 = vmatpush1.xpose.msra.mxu0 0.0
      %671 = vmatprep.subr.mxu0 0.0
      %672 = vmatpush1.xpose.msra.mxu0 0.0
      %673 = vmatprep.subr.mxu0 0.0
      %674 = vmatpush1.xpose.msra.mxu0 0.0
      %675 = vmatprep.subr.mxu0 0.0
      %676 = vmatpush1.xpose.msra.mxu0 0.0
      %677 = vmatprep.subr.mxu0 0.0
      %678 = vmatpush1.xpose.msra.mxu0 0.0
      %679 = vmatprep.subr.mxu0 0.0
      %680 = vmatpush1.xpose.msra.mxu0 0.0
      %681 = vmatprep.subr.mxu0 0.0
      %682 = vmatpush1.xpose.msra.mxu0 0.0
      %683 = vmatprep.subr.mxu0 0.0
      %684 = vmatpush1.xpose.msra.mxu0 0.0
      %685 = vmatprep.subr.mxu0 0.0
      %686 = vmatpush1.xpose.msra.mxu0 0.0
      %687 = vmatprep.subr.mxu0 0.0
      %688 = vmatpush1.xpose.msra.mxu0 0.0
      %689 = vmatprep.subr.mxu0 0.0
      %690 = vmatpush1.xpose.msra.mxu0 0.0
      %691 = vmatprep.subr.mxu0 0.0
      %692 = vmatpush1.xpose.msra.mxu0 0.0
      %693 = vmatprep.subr.mxu0 0.0
      %694 = vmatpush1.xpose.msra.mxu0 0.0
      %695 = vmatprep.subr.mxu0 0.0
      %696 = vmatpush1.xpose.msra.mxu0 0.0
      %697 = vmatprep.subr.mxu0 0.0
      %698 = vmatpush1.xpose.msra.mxu0 0.0
      %699 = vmatprep.subr.mxu0 0.0
      %700 = vmatpush1.xpose.msra.mxu0 0.0
      %701 = vmatprep.subr.mxu0 0.0
      %702 = vmatpush1.xpose.msra.mxu0 0.0
      %703 = vmatprep.subr.mxu0 0.0
      %704 = vmatpush1.xpose.msra.mxu0 0.0
      %705 = vmatprep.subr.mxu0 0.0
      %706 = vmatpush1.xpose.msra.mxu0 0.0
      %707 = vmatprep.subr.mxu0 0.0
      %708 = vmatpush1.xpose.msra.mxu0 0.0
      %709 = vmatprep.subr.mxu0 0.0
      %710 = vmatpush1.xpose.msra.mxu0 0.0
      %711 = vmatprep.subr.mxu0 0.0
      %712 = vmatpush1.xpose.msra.mxu0 0.0
      %713 = vmatprep.subr.mxu0 0.0
      %714 = vmatpush1.xpose.msra.mxu0 0.0
      %715 = vmatprep.subr.mxu0 0.0
      %716 = vmatpush1.xpose.msra.mxu0 0.0
      %717 = vmatprep.subr.mxu0 0.0
      %718 = vmatpush1.xpose.msra.mxu0 0.0
      %719 = vmatprep.subr.mxu0 0.0
      %720 = vmatpush1.xpose.msra.mxu0 0.0
      %721 = vmatprep.subr.mxu0 0.0
      %722 = vmatpush1.xpose.msra.mxu0 0.0
      %723 = vmatprep.subr.mxu0 0.0
      %724 = vmatpush1.xpose.msra.mxu0 0.0
      %725 = vmatprep.subr.mxu0 0.0
      %726 = vmatpush1.xpose.msra.mxu0 0.0
      %727 = vmatprep.subr.mxu0 0.0
      %728 = vmatpush1.xpose.msra.mxu0 0.0
      %729 = vmatprep.subr.mxu0 0.0
      %730 = vmatpush1.xpose.msra.mxu0 0.0
      %731 = vmatprep.mubr.f32.mxu0 0.0
      %732 = vmatmul.mubr.f32.gmra.mrb[0].mxu0 %v662
      %v733 = vpop.f32.mrb[0].mxu0
      %v734 = vadd.f32 0.0, %v733
      %v735 = vpop.f32.mrb[0].mxu0
      %736 = vdwg.mxu0
      %v737 = vmul.f32 %v734, 0.35355338
      %v738 = vsel %vm660, %v737, -inf
      %739 = vmax.xlane.f32.xlu0 %v738
      %v740 = vpop.xlane.xlu0 %739
      %v741 = vsub.f32 %v737, %v740
      %v742 = vmul.f32 %v741, 1.442695
      %v743 = vpow.pop %v742
      %v744 = vsel %vm660, %v743, 0.0
      %745 = vadd.xlane.f32.xlu0 %v744
      %v746 = vpop.xlane.xlu0 %745
      %v747 = vrcp.pop %v746
      %v748 = vmul.f32 %v743, %v747
      %v750 = vsel %vm660, %v748, 0
      %752 = vmatprep.subr.mxu0 0.0
      %753 = vmatpush1.msra.mxu0 %v657
      %754 = vmatprep.subr.mxu0 0.0
      %755 = vmatpush1.msra.mxu0 0.0
      %756 = vmatprep.subr.mxu0 0.0
      %757 = vmatpush1.msra.mxu0 0.0
      %758 = vmatprep.subr.mxu0 0.0
      %759 = vmatpush1.msra.mxu0 0.0
      %760 = vmatprep.subr.mxu0 0.0
      %761 = vmatpush1.msra.mxu0 0.0
      %762 = vmatprep.subr.mxu0 0.0
      %763 = vmatpush1.msra.mxu0 0.0
      %764 = vmatprep.subr.mxu0 0.0
      %765 = vmatpush1.msra.mxu0 0.0
      %766 = vmatprep.subr.mxu0 0.0
      %767 = vmatpush1.msra.mxu0 0.0
      %768 = vmatprep.subr.mxu0 0.0
      %769 = vmatpush1.msra.mxu0 0.0
      %770 = vmatprep.subr.mxu0 0.0
      %771 = vmatpush1.msra.mxu0 0.0
      %772 = vmatprep.subr.mxu0 0.0
      %773 = vmatpush1.msra.mxu0 0.0
      %774 = vmatprep.subr.mxu0 0.0
      %775 = vmatpush1.msra.mxu0 0.0
      %776 = vmatprep.subr.mxu0 0.0
      %777 = vmatpush1.msra.mxu0 0.0
      %778 = vmatprep.subr.mxu0 0.0
      %779 = vmatpush1.msra.mxu0 0.0
      %780 = vmatprep.subr.mxu0 0.0
      %781 = vmatpush1.msra.mxu0 0.0
      %782 = vmatprep.subr.mxu0 0.0
      %783 = vmatpush1.msra.mxu0 0.0
      %784 = vmatprep.subr.mxu0 0.0
      %785 = vmatpush1.msra.mxu0 0.0
      %786 = vmatprep.subr.mxu0 0.0
      %787 = vmatpush1.msra.mxu0 0.0
      %788 = vmatprep.subr.mxu0 0.0
      %789 = vmatpush1.msra.mxu0 0.0
      %790 = vmatprep.subr.mxu0 0.0
      %791 = vmatpush1.msra.mxu0 0.0
      %792 = vmatprep.subr.mxu0 0.0
      %793 = vmatpush1.msra.mxu0 0.0
      %794 = vmatprep.subr.mxu0 0.0
      %795 = vmatpush1.msra.mxu0 0.0
      %796 = vmatprep.subr.mxu0 0.0
      %797 = vmatpush1.msra.mxu0 0.0
      %798 = vmatprep.subr.mxu0 0.0
      %799 = vmatpush1.msra.mxu0 0.0
      %800 = vmatprep.subr.mxu0 0.0
      %801 = vmatpush1.msra.mxu0 0.0
      %802 = vmatprep.subr.mxu0 0.0
      %803 = vmatpush1.msra.mxu0 0.0
      %804 = vmatprep.subr.mxu0 0.0
      %805 = vmatpush1.msra.mxu0 0.0
      %806 = vmatprep.subr.mxu0 0.0
      %807 = vmatpush1.msra.mxu0 0.0
      %808 = vmatprep.subr.mxu0 0.0
      %809 = vmatpush1.msra.mxu0 0.0
      %810 = vmatprep.subr.mxu0 0.0
      %811 = vmatpush1.msra.mxu0 0.0
      %812 = vmatprep.subr.mxu0 0.0
      %813 = vmatpush1.msra.mxu0 0.0
      %814 = vmatprep.subr.mxu0 0.0
      %815 = vmatpush1.msra.mxu0 0.0
      %816 = vmatprep.mubr.f32.mxu0 0.0
      %817 = vmatmul.mubr.f32.gmra.mrb[0].mxu0 %v750
      %v818 = vpop.f32.mrb[0].mxu0
      %v819 = vadd.f32 0.0, %v818
      %v820 = vpop.f32.mrb[0].mxu0
      %821 = vdwg.mxu0
      %822 = vrot.lane.b32.xlu0 %v495, 120
      %v823 = vpop.permute.xlu0 %822
      %824 = vrot.lane.b32.xlu0 %v576, 120
      %v825 = vpop.permute.xlu0 %824
      %v826 = vsel %vm660, %v823, 0
      %v828 = vsel %vm660, %v825, 0
      %830 = vmatprep.subr.mxu0 0.0
      %831 = vmatpush1.xpose.msra.mxu0 %v828
      %832 = vmatprep.subr.mxu0 0.0
      %833 = vmatpush1.xpose.msra.mxu0 0.0
      %834 = vmatprep.subr.mxu0 0.0
      %835 = vmatpush1.xpose.msra.mxu0 0.0
      %836 = vmatprep.subr.mxu0 0.0
      %837 = vmatpush1.xpose.msra.mxu0 0.0
      %838 = vmatprep.subr.mxu0 0.0
      %839 = vmatpush1.xpose.msra.mxu0 0.0
      %840 = vmatprep.subr.mxu0 0.0
      %841 = vmatpush1.xpose.msra.mxu0 0.0
      %842 = vmatprep.subr.mxu0 0.0
      %843 = vmatpush1.xpose.msra.mxu0 0.0
      %844 = vmatprep.subr.mxu0 0.0
      %845 = vmatpush1.xpose.msra.mxu0 0.0
      %846 = vmatprep.subr.mxu0 0.0
      %847 = vmatpush1.xpose.msra.mxu0 0.0
      %848 = vmatprep.subr.mxu0 0.0
      %849 = vmatpush1.xpose.msra.mxu0 0.0
      %850 = vmatprep.subr.mxu0 0.0
      %851 = vmatpush1.xpose.msra.mxu0 0.0
      %852 = vmatprep.subr.mxu0 0.0
      %853 = vmatpush1.xpose.msra.mxu0 0.0
      %854 = vmatprep.subr.mxu0 0.0
      %855 = vmatpush1.xpose.msra.mxu0 0.0
      %856 = vmatprep.subr.mxu0 0.0
      %857 = vmatpush1.xpose.msra.mxu0 0.0
      %858 = vmatprep.subr.mxu0 0.0
      %859 = vmatpush1.xpose.msra.mxu0 0.0
      %860 = vmatprep.subr.mxu0 0.0
      %861 = vmatpush1.xpose.msra.mxu0 0.0
      %862 = vmatprep.subr.mxu0 0.0
      %863 = vmatpush1.xpose.msra.mxu0 0.0
      %864 = vmatprep.subr.mxu0 0.0
      %865 = vmatpush1.xpose.msra.mxu0 0.0
      %866 = vmatprep.subr.mxu0 0.0
      %867 = vmatpush1.xpose.msra.mxu0 0.0
      %868 = vmatprep.subr.mxu0 0.0
      %869 = vmatpush1.xpose.msra.mxu0 0.0
      %870 = vmatprep.subr.mxu0 0.0
      %871 = vmatpush1.xpose.msra.mxu0 0.0
      %872 = vmatprep.subr.mxu0 0.0
      %873 = vmatpush1.xpose.msra.mxu0 0.0
      %874 = vmatprep.subr.mxu0 0.0
      %875 = vmatpush1.xpose.msra.mxu0 0.0
      %876 = vmatprep.subr.mxu0 0.0
      %877 = vmatpush1.xpose.msra.mxu0 0.0
      %878 = vmatprep.subr.mxu0 0.0
      %879 = vmatpush1.xpose.msra.mxu0 0.0
      %880 = vmatprep.subr.mxu0 0.0
      %881 = vmatpush1.xpose.msra.mxu0 0.0
      %882 = vmatprep.subr.mxu0 0.0
      %883 = vmatpush1.xpose.msra.mxu0 0.0
      %884 = vmatprep.subr.mxu0 0.0
      %885 = vmatpush1.xpose.msra.mxu0 0.0
      %886 = vmatprep.subr.mxu0 0.0
      %887 = vmatpush1.xpose.msra.mxu0 0.0
      %888 = vmatprep.subr.mxu0 0.0
      %889 = vmatpush1.xpose.msra.mxu0 0.0
      %890 = vmatprep.subr.mxu0 0.0
      %891 = vmatpush1.xpose.msra.mxu0 0.0
      %892 = vmatprep.subr.mxu0 0.0
      %893 = vmatpush1.xpose.msra.mxu0 0.0
      %894 = vmatprep.mubr.f32.mxu0 0.0
      %895 = vmatmul.mubr.f32.gmra.mrb[0].mxu0 %v826
      %v896 = vpop.f32.mrb[0].mxu0
      %v897 = vadd.f32 0.0, %v896
      %v898 = vpop.f32.mrb[0].mxu0
      %899 = vdwg.mxu0
      %v900 = vmul.f32 %v897, 0.35355338
      %v901 = vsel %vm660, %v900, -inf
      %902 = vmax.xlane.f32.xlu0 %v901
      %v903 = vpop.xlane.xlu0 %902
      %v904 = vsub.f32 %v900, %v903
      %v905 = vmul.f32 %v904, 1.442695
      %v906 = vpow.pop %v905
      %v907 = vsel %vm660, %v906, 0.0
      %908 = vadd.xlane.f32.xlu0 %v907
      %v909 = vpop.xlane.xlu0 %908
      %v910 = vrcp.pop %v909
      %v911 = vmul.f32 %v906, %v910
      %913 = vrot.lane.b32.xlu0 %v657, 120
      %v914 = vpop.permute.xlu0 %913
      %v917 = vsel %vm660, %v911, 0
      %919 = vmatprep.subr.mxu0 0.0
      %920 = vmatpush1.msra.mxu0 %v914
      %921 = vmatprep.subr.mxu0 0.0
      %922 = vmatpush1.msra.mxu0 0.0
      %923 = vmatprep.subr.mxu0 0.0
      %924 = vmatpush1.msra.mxu0 0.0
      %925 = vmatprep.subr.mxu0 0.0
      %926 = vmatpush1.msra.mxu0 0.0
      %927 = vmatprep.subr.mxu0 0.0
      %928 = vmatpush1.msra.mxu0 0.0
      %929 = vmatprep.subr.mxu0 0.0
      %930 = vmatpush1.msra.mxu0 0.0
      %931 = vmatprep.subr.mxu0 0.0
      %932 = vmatpush1.msra.mxu0 0.0
      %933 = vmatprep.subr.mxu0 0.0
      %934 = vmatpush1.msra.mxu0 0.0
      %935 = vmatprep.subr.mxu0 0.0
      %936 = vmatpush1.msra.mxu0 0.0
      %937 = vmatprep.subr.mxu0 0.0
      %938 = vmatpush1.msra.mxu0 0.0
      %939 = vmatprep.subr.mxu0 0.0
      %940 = vmatpush1.msra.mxu0 0.0
      %941 = vmatprep.subr.mxu0 0.0
      %942 = vmatpush1.msra.mxu0 0.0
      %943 = vmatprep.subr.mxu0 0.0
      %944 = vmatpush1.msra.mxu0 0.0
      %945 = vmatprep.subr.mxu0 0.0
      %946 = vmatpush1.msra.mxu0 0.0
      %947 = vmatprep.subr.mxu0 0.0
      %948 = vmatpush1.msra.mxu0 0.0
      %949 = vmatprep.subr.mxu0 0.0
      %950 = vmatpush1.msra.mxu0 0.0
      %951 = vmatprep.subr.mxu0 0.0
      %952 = vmatpush1.msra.mxu0 0.0
      %953 = vmatprep.subr.mxu0 0.0
      %954 = vmatpush1.msra.mxu0 0.0
      %955 = vmatprep.subr.mxu0 0.0
      %956 = vmatpush1.msra.mxu0 0.0
      %957 = vmatprep.subr.mxu0 0.0
      %958 = vmatpush1.msra.mxu0 0.0
      %959 = vmatprep.subr.mxu0 0.0
      %960 = vmatpush1.msra.mxu0 0.0
      %961 = vmatprep.subr.mxu0 0.0
      %962 = vmatpush1.msra.mxu0 0.0
      %963 = vmatprep.subr.mxu0 0.0
      %964 = vmatpush1.msra.mxu0 0.0
      %965 = vmatprep.subr.mxu0 0.0
      %966 = vmatpush1.msra.mxu0 0.0
      %967 = vmatprep.subr.mxu0 0.0
      %968 = vmatpush1.msra.mxu0 0.0
      %969 = vmatprep.subr.mxu0 0.0
      %970 = vmatpush1.msra.mxu0 0.0
      %971 = vmatprep.subr.mxu0 0.0
      %972 = vmatpush1.msra.mxu0 0.0
      %973 = vmatprep.subr.mxu0 0.0
      %974 = vmatpush1.msra.mxu0 0.0
      %975 = vmatprep.subr.mxu0 0.0
      %976 = vmatpush1.msra.mxu0 0.0
      %977 = vmatprep.subr.mxu0 0.0
      %978 = vmatpush1.msra.mxu0 0.0
      %979 = vmatprep.subr.mxu0 0.0
      %980 = vmatpush1.msra.mxu0 0.0
      %981 = vmatprep.subr.mxu0 0.0
      %982 = vmatpush1.msra.mxu0 0.0
      %983 = vmatprep.mubr.f32.mxu0 0.0
      %984 = vmatmul.mubr.f32.gmra.mrb[0].mxu0 %v917
      %v985 = vpop.f32.mrb[0].mxu0
      %v986 = vadd.f32 0.0, %v985
      %v987 = vpop.f32.mrb[0].mxu0
      %988 = vdwg.mxu0
      %989 = vrot.lane.b32.xlu0 %v495, 112
      %v990 = vpop.permute.xlu0 %989
      %991 = vrot.lane.b32.xlu0 %v576, 112
      %v992 = vpop.permute.xlu0 %991
      %v993 = vsel %vm660, %v990, 0
      %v995 = vsel %vm660, %v992, 0
      %997 = vmatprep.subr.mxu0 0.0
      %998 = vmatpush1.xpose.msra.mxu0 %v995
      %999 = vmatprep.subr.mxu0 0.0
      %1000 = vmatpush1.xpose.msra.mxu0 0.0
      %1001 = vmatprep.subr.mxu0 0.0
      %1002 = vmatpush1.xpose.msra.mxu0 0.0
      %1003 = vmatprep.subr.mxu0 0.0
      %1004 = vmatpush1.xpose.msra.mxu0 0.0
      %1005 = vmatprep.subr.mxu0 0.0
      %1006 = vmatpush1.xpose.msra.mxu0 0.0
      %1007 = vmatprep.subr.mxu0 0.0
      %1008 = vmatpush1.xpose.msra.mxu0 0.0
      %1009 = vmatprep.subr.mxu0 0.0
      %1010 = vmatpush1.xpose.msra.mxu0 0.0
      %1011 = vmatprep.subr.mxu0 0.0
      %1012 = vmatpush1.xpose.msra.mxu0 0.0
      %1013 = vmatprep.subr.mxu0 0.0
      %1014 = vmatpush1.xpose.msra.mxu0 0.0
      %1015 = vmatprep.subr.mxu0 0.0
      %1016 = vmatpush1.xpose.msra.mxu0 0.0
      %1017 = vmatprep.subr.mxu0 0.0
      %1018 = vmatpush1.xpose.msra.mxu0 0.0
      %1019 = vmatprep.subr.mxu0 0.0
      %1020 = vmatpush1.xpose.msra.mxu0 0.0
      %1021 = vmatprep.subr.mxu0 0.0
      %1022 = vmatpush1.xpose.msra.mxu0 0.0
      %1023 = vmatprep.subr.mxu0 0.0
      %1024 = vmatpush1.xpose.msra.mxu0 0.0
      %1025 = vmatprep.subr.mxu0 0.0
      %1026 = vmatpush1.xpose.msra.mxu0 0.0
      %1027 = vmatprep.subr.mxu0 0.0
      %1028 = vmatpush1.xpose.msra.mxu0 0.0
      %1029 = vmatprep.subr.mxu0 0.0
      %1030 = vmatpush1.xpose.msra.mxu0 0.0
      %1031 = vmatprep.subr.mxu0 0.0
      %1032 = vmatpush1.xpose.msra.mxu0 0.0
      %1033 = vmatprep.subr.mxu0 0.0
      %1034 = vmatpush1.xpose.msra.mxu0 0.0
      %1035 = vmatprep.subr.mxu0 0.0
      %1036 = vmatpush1.xpose.msra.mxu0 0.0
      %1037 = vmatprep.subr.mxu0 0.0
      %1038 = vmatpush1.xpose.msra.mxu0 0.0
      %1039 = vmatprep.subr.mxu0 0.0
      %1040 = vmatpush1.xpose.msra.mxu0 0.0
      %1041 = vmatprep.subr.mxu0 0.0
      %1042 = vmatpush1.xpose.msra.mxu0 0.0
      %1043 = vmatprep.subr.mxu0 0.0
      %1044 = vmatpush1.xpose.msra.mxu0 0.0
      %1045 = vmatprep.subr.mxu0 0.0
      %1046 = vmatpush1.xpose.msra.mxu0 0.0
      %1047 = vmatprep.subr.mxu0 0.0
      %1048 = vmatpush1.xpose.msra.mxu0 0.0
      %1049 = vmatprep.subr.mxu0 0.0
      %1050 = vmatpush1.xpose.msra.mxu0 0.0
      %1051 = vmatprep.subr.mxu0 0.0
      %1052 = vmatpush1.xpose.msra.mxu0 0.0
      %1053 = vmatprep.subr.mxu0 0.0
      %1054 = vmatpush1.xpose.msra.mxu0 0.0
      %1055 = vmatprep.subr.mxu0 0.0
      %1056 = vmatpush1.xpose.msra.mxu0 0.0
      %1057 = vmatprep.subr.mxu0 0.0
      %1058 = vmatpush1.xpose.msra.mxu0 0.0
      %1059 = vmatprep.subr.mxu0 0.0
      %1060 = vmatpush1.xpose.msra.mxu0 0.0
      %1061 = vmatprep.mubr.f32.mxu0 0.0
      %1062 = vmatmul.mubr.f32.gmra.mrb[0].mxu0 %v993
      %v1063 = vpop.f32.mrb[0].mxu0
      %v1064 = vadd.f32 0.0, %v1063
      %v1065 = vpop.f32.mrb[0].mxu0
      %1066 = vdwg.mxu0
      %v1067 = vmul.f32 %v1064, 0.35355338
      %v1068 = vsel %vm660, %v1067, -inf
      %1069 = vmax.xlane.f32.xlu0 %v1068
      %v1070 = vpop.xlane.xlu0 %1069
      %v1071 = vsub.f32 %v1067, %v1070
      %v1072 = vmul.f32 %v1071, 1.442695
      %v1073 = vpow.pop %v1072
      %v1074 = vsel %vm660, %v1073, 0.0
      %1075 = vadd.xlane.f32.xlu0 %v1074
      %v1076 = vpop.xlane.xlu0 %1075
      %v1077 = vrcp.pop %v1076
      %v1078 = vmul.f32 %v1073, %v1077
      %1079 = vrot.lane.b32.xlu0 %v657, 112
      %v1080 = vpop.permute.xlu0 %1079
      %v1083 = vsel %vm660, %v1078, 0
      %1085 = vmatprep.subr.mxu0 0.0
      %1086 = vmatpush1.msra.mxu0 %v1080
      %1087 = vmatprep.subr.mxu0 0.0
      %1088 = vmatpush1.msra.mxu0 0.0
      %1089 = vmatprep.subr.mxu0 0.0
      %1090 = vmatpush1.msra.mxu0 0.0
      %1091 = vmatprep.subr.mxu0 0.0
      %1092 = vmatpush1.msra.mxu0 0.0
      %1093 = vmatprep.subr.mxu0 0.0
      %1094 = vmatpush1.msra.mxu0 0.0
      %1095 = vmatprep.subr.mxu0 0.0
      %1096 = vmatpush1.msra.mxu0 0.0
      %1097 = vmatprep.subr.mxu0 0.0
      %1098 = vmatpush1.msra.mxu0 0.0
      %1099 = vmatprep.subr.mxu0 0.0
      %1100 = vmatpush1.msra.mxu0 0.0
      %1101 = vmatprep.subr.mxu0 0.0
      %1102 = vmatpush1.msra.mxu0 0.0
      %1103 = vmatprep.subr.mxu0 0.0
      %1104 = vmatpush1.msra.mxu0 0.0
      %1105 = vmatprep.subr.mxu0 0.0
      %1106 = vmatpush1.msra.mxu0 0.0
      %1107 = vmatprep.subr.mxu0 0.0
      %1108 = vmatpush1.msra.mxu0 0.0
      %1109 = vmatprep.subr.mxu0 0.0
      %1110 = vmatpush1.msra.mxu0 0.0
      %1111 = vmatprep.subr.mxu0 0.0
      %1112 = vmatpush1.msra.mxu0 0.0
      %1113 = vmatprep.subr.mxu0 0.0
      %1114 = vmatpush1.msra.mxu0 0.0
      %1115 = vmatprep.subr.mxu0 0.0
      %1116 = vmatpush1.msra.mxu0 0.0
      %1117 = vmatprep.subr.mxu0 0.0
      %1118 = vmatpush1.msra.mxu0 0.0
      %1119 = vmatprep.subr.mxu0 0.0
      %1120 = vmatpush1.msra.mxu0 0.0
      %1121 = vmatprep.subr.mxu0 0.0
      %1122 = vmatpush1.msra.mxu0 0.0
      %1123 = vmatprep.subr.mxu0 0.0
      %1124 = vmatpush1.msra.mxu0 0.0
      %1125 = vmatprep.subr.mxu0 0.0
      %1126 = vmatpush1.msra.mxu0 0.0
      %1127 = vmatprep.subr.mxu0 0.0
      %1128 = vmatpush1.msra.mxu0 0.0
      %1129 = vmatprep.subr.mxu0 0.0
      %1130 = vmatpush1.msra.mxu0 0.0
      %1131 = vmatprep.subr.mxu0 0.0
      %1132 = vmatpush1.msra.mxu0 0.0
      %1133 = vmatprep.subr.mxu0 0.0
      %1134 = vmatpush1.msra.mxu0 0.0
      %1135 = vmatprep.subr.mxu0 0.0
      %1136 = vmatpush1.msra.mxu0 0.0
      %1137 = vmatprep.subr.mxu0 0.0
      %1138 = vmatpush1.msra.mxu0 0.0
      %1139 = vmatprep.subr.mxu0 0.0
      %1140 = vmatpush1.msra.mxu0 0.0
      %1141 = vmatprep.subr.mxu0 0.0
      %1142 = vmatpush1.msra.mxu0 0.0
      %1143 = vmatprep.subr.mxu0 0.0
      %1144 = vmatpush1.msra.mxu0 0.0
      %1145 = vmatprep.subr.mxu0 0.0
      %1146 = vmatpush1.msra.mxu0 0.0
      %1147 = vmatprep.subr.mxu0 0.0
      %1148 = vmatpush1.msra.mxu0 0.0
      %1149 = vmatprep.mubr.f32.mxu0 0.0
      %1150 = vmatmul.mubr.f32.gmra.mrb[0].mxu0 %v1083
      %v1151 = vpop.f32.mrb[0].mxu0
      %v1152 = vadd.f32 0.0, %v1151
      %v1153 = vpop.f32.mrb[0].mxu0
      %1154 = vdwg.mxu0
      %1155 = vrot.lane.b32.xlu0 %v495, 104
      %v1156 = vpop.permute.xlu0 %1155
      %1157 = vrot.lane.b32.xlu0 %v576, 104
      %v1158 = vpop.permute.xlu0 %1157
      %v1159 = vsel %vm660, %v1156, 0
      %v1161 = vsel %vm660, %v1158, 0
      %1163 = vmatprep.subr.mxu0 0.0
      %1164 = vmatpush1.xpose.msra.mxu0 %v1161
      %1165 = vmatprep.subr.mxu0 0.0
      %1166 = vmatpush1.xpose.msra.mxu0 0.0
      %1167 = vmatprep.subr.mxu0 0.0
      %1168 = vmatpush1.xpose.msra.mxu0 0.0
      %1169 = vmatprep.subr.mxu0 0.0
      %1170 = vmatpush1.xpose.msra.mxu0 0.0
      %1171 = vmatprep.subr.mxu0 0.0
      %1172 = vmatpush1.xpose.msra.mxu0 0.0
      %1173 = vmatprep.subr.mxu0 0.0
      %1174 = vmatpush1.xpose.msra.mxu0 0.0
      %1175 = vmatprep.subr.mxu0 0.0
      %1176 = vmatpush1.xpose.msra.mxu0 0.0
      %1177 = vmatprep.subr.mxu0 0.0
      %1178 = vmatpush1.xpose.msra.mxu0 0.0
      %1179 = vmatprep.subr.mxu0 0.0
      %1180 = vmatpush1.xpose.msra.mxu0 0.0
      %1181 = vmatprep.subr.mxu0 0.0
      %1182 = vmatpush1.xpose.msra.mxu0 0.0
      %1183 = vmatprep.subr.mxu0 0.0
      %1184 = vmatpush1.xpose.msra.mxu0 0.0
      %1185 = vmatprep.subr.mxu0 0.0
      %1186 = vmatpush1.xpose.msra.mxu0 0.0
      %1187 = vmatprep.subr.mxu0 0.0
      %1188 = vmatpush1.xpose.msra.mxu0 0.0
      %1189 = vmatprep.subr.mxu0 0.0
      %1190 = vmatpush1.xpose.msra.mxu0 0.0
      %1191 = vmatprep.subr.mxu0 0.0
      %1192 = vmatpush1.xpose.msra.mxu0 0.0
      %1193 = vmatprep.subr.mxu0 0.0
      %1194 = vmatpush1.xpose.msra.mxu0 0.0
      %1195 = vmatprep.subr.mxu0 0.0
      %1196 = vmatpush1.xpose.msra.mxu0 0.0
      %1197 = vmatprep.subr.mxu0 0.0
      %1198 = vmatpush1.xpose.msra.mxu0 0.0
      %1199 = vmatprep.subr.mxu0 0.0
      %1200 = vmatpush1.xpose.msra.mxu0 0.0
      %1201 = vmatprep.subr.mxu0 0.0
      %1202 = vmatpush1.xpose.msra.mxu0 0.0
      %1203 = vmatprep.subr.mxu0 0.0
      %1204 = vmatpush1.xpose.msra.mxu0 0.0
      %1205 = vmatprep.subr.mxu0 0.0
      %1206 = vmatpush1.xpose.msra.mxu0 0.0
      %1207 = vmatprep.subr.mxu0 0.0
      %1208 = vmatpush1.xpose.msra.mxu0 0.0
      %1209 = vmatprep.subr.mxu0 0.0
      %1210 = vmatpush1.xpose.msra.mxu0 0.0
      %1211 = vmatprep.subr.mxu0 0.0
      %1212 = vmatpush1.xpose.msra.mxu0 0.0
      %1213 = vmatprep.subr.mxu0 0.0
      %1214 = vmatpush1.xpose.msra.mxu0 0.0
      %1215 = vmatprep.subr.mxu0 0.0
      %1216 = vmatpush1.xpose.msra.mxu0 0.0
      %1217 = vmatprep.subr.mxu0 0.0
      %1218 = vmatpush1.xpose.msra.mxu0 0.0
      %1219 = vmatprep.subr.mxu0 0.0
      %1220 = vmatpush1.xpose.msra.mxu0 0.0
      %1221 = vmatprep.subr.mxu0 0.0
      %1222 = vmatpush1.xpose.msra.mxu0 0.0
      %1223 = vmatprep.subr.mxu0 0.0
      %1224 = vmatpush1.xpose.msra.mxu0 0.0
      %1225 = vmatprep.subr.mxu0 0.0
      %1226 = vmatpush1.xpose.msra.mxu0 0.0
      %1227 = vmatprep.mubr.f32.mxu0 0.0
      %1228 = vmatmul.mubr.f32.gmra.mrb[0].mxu0 %v1159
      %v1229 = vpop.f32.mrb[0].mxu0
      %v1230 = vadd.f32 0.0, %v1229
      %v1231 = vpop.f32.mrb[0].mxu0
      %1232 = vdwg.mxu0
      %v1233 = vmul.f32 %v1230, 0.35355338
      %v1234 = vsel %vm660, %v1233, -inf
      %1235 = vmax.xlane.f32.xlu0 %v1234
      %v1236 = vpop.xlane.xlu0 %1235
      %v1237 = vsub.f32 %v1233, %v1236
      %v1238 = vmul.f32 %v1237, 1.442695
      %v1239 = vpow.pop %v1238
      %v1240 = vsel %vm660, %v1239, 0.0
      %1241 = vadd.xlane.f32.xlu0 %v1240
      %v1242 = vpop.xlane.xlu0 %1241
      %v1243 = vrcp.pop %v1242
      %v1244 = vmul.f32 %v1239, %v1243
      %1245 = vrot.lane.b32.xlu0 %v657, 104
      %v1246 = vpop.permute.xlu0 %1245
      %v1249 = vsel %vm660, %v1244, 0
      %1251 = vmatprep.subr.mxu0 0.0
      %1252 = vmatpush1.msra.mxu0 %v1246
      %1253 = vmatprep.subr.mxu0 0.0
      %1254 = vmatpush1.msra.mxu0 0.0
      %1255 = vmatprep.subr.mxu0 0.0
      %1256 = vmatpush1.msra.mxu0 0.0
      %1257 = vmatprep.subr.mxu0 0.0
      %1258 = vmatpush1.msra.mxu0 0.0
      %1259 = vmatprep.subr.mxu0 0.0
      %1260 = vmatpush1.msra.mxu0 0.0
      %1261 = vmatprep.subr.mxu0 0.0
      %1262 = vmatpush1.msra.mxu0 0.0
      %1263 = vmatprep.subr.mxu0 0.0
      %1264 = vmatpush1.msra.mxu0 0.0
      %1265 = vmatprep.subr.mxu0 0.0
      %1266 = vmatpush1.msra.mxu0 0.0
      %1267 = vmatprep.subr.mxu0 0.0
      %1268 = vmatpush1.msra.mxu0 0.0
      %1269 = vmatprep.subr.mxu0 0.0
      %1270 = vmatpush1.msra.mxu0 0.0
      %1271 = vmatprep.subr.mxu0 0.0
      %1272 = vmatpush1.msra.mxu0 0.0
      %1273 = vmatprep.subr.mxu0 0.0
      %1274 = vmatpush1.msra.mxu0 0.0
      %1275 = vmatprep.subr.mxu0 0.0
      %1276 = vmatpush1.msra.mxu0 0.0
      %1277 = vmatprep.subr.mxu0 0.0
      %1278 = vmatpush1.msra.mxu0 0.0
      %1279 = vmatprep.subr.mxu0 0.0
      %1280 = vmatpush1.msra.mxu0 0.0
      %1281 = vmatprep.subr.mxu0 0.0
      %1282 = vmatpush1.msra.mxu0 0.0
      %1283 = vmatprep.subr.mxu0 0.0
      %1284 = vmatpush1.msra.mxu0 0.0
      %1285 = vmatprep.subr.mxu0 0.0
      %1286 = vmatpush1.msra.mxu0 0.0
      %1287 = vmatprep.subr.mxu0 0.0
      %1288 = vmatpush1.msra.mxu0 0.0
      %1289 = vmatprep.subr.mxu0 0.0
      %1290 = vmatpush1.msra.mxu0 0.0
      %1291 = vmatprep.subr.mxu0 0.0
      %1292 = vmatpush1.msra.mxu0 0.0
      %1293 = vmatprep.subr.mxu0 0.0
      %1294 = vmatpush1.msra.mxu0 0.0
      %1295 = vmatprep.subr.mxu0 0.0
      %1296 = vmatpush1.msra.mxu0 0.0
      %1297 = vmatprep.subr.mxu0 0.0
      %1298 = vmatpush1.msra.mxu0 0.0
      %1299 = vmatprep.subr.mxu0 0.0
      %1300 = vmatpush1.msra.mxu0 0.0
      %1301 = vmatprep.subr.mxu0 0.0
      %1302 = vmatpush1.msra.mxu0 0.0
      %1303 = vmatprep.subr.mxu0 0.0
      %1304 = vmatpush1.msra.mxu0 0.0
      %1305 = vmatprep.subr.mxu0 0.0
      %1306 = vmatpush1.msra.mxu0 0.0
      %1307 = vmatprep.subr.mxu0 0.0
      %1308 = vmatpush1.msra.mxu0 0.0
      %1309 = vmatprep.subr.mxu0 0.0
      %1310 = vmatpush1.msra.mxu0 0.0
      %1311 = vmatprep.subr.mxu0 0.0
      %1312 = vmatpush1.msra.mxu0 0.0
      %1313 = vmatprep.subr.mxu0 0.0
      %1314 = vmatpush1.msra.mxu0 0.0
      %1315 = vmatprep.mubr.f32.mxu0 0.0
      %1316 = vmatmul.mubr.f32.gmra.mrb[0].mxu0 %v1249
      %v1317 = vpop.f32.mrb[0].mxu0
      %v1318 = vadd.f32 0.0, %v1317
      %v1319 = vpop.f32.mrb[0].mxu0
      %1320 = vdwg.mxu0
      %1322 = vrot.lane.b32.xlu0 %v986, 8
      %v1323 = vpop.permute.xlu0 %1322
      %1326 = vrot.lane.b32.xlu0 %v1152, 16
      %v1327 = vpop.permute.xlu0 %1326
      %1330 = vrot.lane.b32.xlu0 %v1318, 24
      %v1331 = vpop.permute.xlu0 %1330
      %v1333 = vsel %vm660, %v819, %v1323
      %vm1334 = vcmask 130048
      %v1335 = vsel %vm1334, %v1333, %v1327
      %vm1336 = vcmask 195584
      %v1337 = vsel %vm1336, %v1335, %v1331
      %1338 = vst.msk [vmem:[%s411] sm:$0xff] %vm424, %v1337
      %p1339 = scmp.lt.s32.totalorder %s23, 1
      %s1340 = scalar_select %p1339, %s23, 1
      %p1341 = scmp.lt.s32.totalorder %s22, 1
      %s1342 = scalar_select %p1341, %s22, 1
      %s1343 = smul.addr %s1340, 2
      %s1344 = sadd.s32 %s1342, %s1343
      %s1345 = smul.addr %s1344, 8
      %s1346 = scalar_lea.vmem %s7, %s1345
      // Predicated region
      $region49: #{anti_layer_segment.6} parent=47 // pred_check
        %p1347 = pneg %p234
      $region50: #{anti_layer_segment.6} parent=47 // pred_check_branch
        %1349 = sbr.rel (%p1347) target = $region52
      $region51: #{anti_layer_segment.6} parent=47 // pred_region
        _
      $region52: #{anti_layer_segment.6} parent=47 // pred_fallthru
        _
    $region48: #{anti_layer_segment.6} parent=5 // pred_fallthru
      _
    %p1350 = scmp.le.s32.totalorder 2, %s13
    // Predicated region
    $region53: #{anti_layer_segment.6} parent=5 // pred_check
      %p1351 = pneg %p1350
    $region54: #{anti_layer_segment.6} parent=5 // pred_check_branch
      %1353 = sbr.rel (%p1351) target = $region56
    $region55: #{anti_layer_segment.6} parent=5 // pred_region
      %s1354 = ssub.s32 %s13, 2
      // Predicated region
      $region57: #{anti_layer_segment.6} parent=55 // pred_check
        %p1355 = pneg %p240
      $region58: #{anti_layer_segment.6} parent=55 // pred_check_branch
        %1357 = sbr.rel (%p1355) target = $region60
      $region59: #{anti_layer_segment.6} parent=55 // pred_region
        %p1358 = scmp.lt.s32.totalorder %s25, 1
        %s1359 = scalar_select %p1358, %s25, 1
        %p1360 = scmp.lt.s32.totalorder %s24, 1
        %s1361 = scalar_select %p1360, %s24, 1
        %s1362 = smul.addr %s1359, 2
        %s1363 = sadd.s32 %s1361, %s1362
        %s1364 = smul.addr %s1363, 8
        %s1365 = scalar_lea.vmem %s7, %s1364
      $region60: #{anti_layer_segment.6} parent=55 // pred_fallthru
        _
    $region56: #{anti_layer_segment.6} parent=5 // pred_fallthru
      _
  $region6: #{anti_layer_segment.6} parent=0 // loop_footer
    %s17 = sadd.s32 1, %s13
  $region7: #{anti_layer_segment.6} parent=0 // loop_footer_branch
    %12 = sbr.rel target = $region3
  $region8: #{anti_layer_segment.6} parent=0 // loop_exit
    _

// kernel: anti_layer_segment.7
$region0: #{anti_layer_segment.7}
  #allocation0 [shape = 'u32[]', space=smem, size = 0x4, offset = 0x4, fixed_abs, tag = 'smem constant byte address 0x4 - core index']
  #allocation1 [shape = 'u32[144,128]{1,0:T(1,128)}', space=vmem, size = 0x12000, scoped, tag = 'internal scratch']
  %s0 = inlined_call_operand.vmem [shape: f32[2,1,3,32], index: 0, kind: input, shape index: {}]
  %s1 = inlined_call_operand.vmem [shape: f32[1,32,32], index: 1, kind: input, shape index: {}]
  %s2 = inlined_call_operand.vmem [shape: f32[1,32,32], index: 2, kind: input, shape index: {}]
  %s3 = inlined_call_operand.vmem [shape: f32[1,32,32], index: 3, kind: input, shape index: {}]
  %s4 = inlined_call_operand.vmem [shape: f32[1,1,32], index: 4, kind: input, shape index: {}]
  %s5 = inlined_call_operand.vmem [shape: f32[1,1,32], index: 5, kind: input, shape index: {}]
  %s6 = inlined_call_operand.vmem [shape: f32[1,1,32], index: 6, kind: input, shape index: {}]
  %s7 = inlined_call_operand.vmem [shape: f32[2,1,3,32], index: 7, kind: output, shape index: {}]
  %s8 = sld [smem:[#allocation0]]
  $region61: #{anti_layer_segment.7} parent=0
    _
  %s10 = ssub.s32 1, %s8
  %s11 = scalar_select 0, %s10, %s8
  loop: start=0, step=1, limit=4
  $region2: #{anti_layer_segment.7} parent=0 // loop_pre_header
    _
  $region3: #{anti_layer_segment.7} parent=0 // loop_header
    %s13 = sphi 0, %s17
    %p14 = scmp.ge.s32.totalorder %s13, 4
    %s20 = sphi 0, %s32
    %s21 = sphi 0, %s28
    %s22 = sphi 0, %s20
    %s23 = sphi 0, %s21
    %s24 = sphi 0, %s22
    %s25 = sphi 0, %s23
    %s37 = sphi 0, %s39
    %s40 = sphi 0, %s37
    %s41 = sphi 0, %s40
    %s57 = sphi 0, %s41
    %s63 = sphi 0, %s65
    %s66 = sphi 0, %s63
    %s67 = sphi 0, %s66
    %s83 = sphi 0, %s67
    %s89 = sphi 0, %s91
    %s92 = sphi 0, %s89
    %s93 = sphi 0, %s92
    %s109 = sphi 0, %s93
    %s115 = sphi 0, %s117
    %s118 = sphi 0, %s115
    %s119 = sphi 0, %s118
    %s135 = sphi 0, %s119
    %s141 = sphi 0, %s143
    %s144 = sphi 0, %s141
    %s145 = sphi 0, %s144
    %s161 = sphi 0, %s145
    %s167 = sphi 0, %s169
    %s170 = sphi 0, %s167
    %s171 = sphi 0, %s170
    %s187 = sphi 0, %s171
    %s193 = sphi 0, %s195
    %s196 = sphi 0, %s193
    %s197 = sphi 0, %s196
    %s213 = sphi 0, %s197
    %s221 = sphi 0, %s223
    %s224 = sphi 0, %s221
    %s225 = sphi 0, %s224
    %s241 = sphi 0, %s225
  $region4: #{anti_layer_segment.7} parent=0 // loop_header_branch
    %16 = sbr.rel (%p14) target = $region8
  $region5: #{anti_layer_segment.7} parent=0 // loop_body
    %s18 = ssub.s32 %s13, 1
    %s19 = ssub.s32 %s13, 2
    %s26 = sadd.s32 1, %s21
    %p27 = scmp.ge.s32.totalorder %s26, 2
    %s28 = scalar_select %p27, 0, %s26
    %s29 = sadd.s32 1, %s20
    %s30 = scalar_select %p27, %s29, %s20
    %p31 = scmp.ge.s32.totalorder %s30, 1
    %s32 = scalar_select %p31, 0, %s30
    %s33 = ssub.s32 %s21, %s28
    %s34 = ssub.s32 %s20, %s32
    %s35 = sor.u32 %s33, %s34
    %p36 = scmp.eq.s32.totalorder %s35, 0
    %s38 = sadd.s32 %s37, 1
    %s39 = scalar_select %p36, %s37, %s38
    %p42 = pneg %p36
    %p43 = scmp.eq.s32.totalorder %s13, 1
    %p44 = por %p42, %p43
    %p45 = scmp.ne.s32.totalorder %s37, %s40
    %p46 = scmp.eq.s32.totalorder %s13, 0
    %p47 = por %p45, %p46
    %p48 = scmp.ne.s32.totalorder %s37, %s40
    %p49 = scmp.eq.s32.totalorder %s18, 1
    %p50 = por %p48, %p49
    %p51 = scmp.ne.s32.totalorder %s40, %s41
    %p52 = scmp.eq.s32.totalorder %s18, 0
    %p53 = por %p51, %p52
    %p54 = scmp.ne.s32.totalorder %s40, %s41
    %p55 = scmp.eq.s32.totalorder %s19, 1
    %p56 = por %p54, %p55
    %p58 = scmp.ne.s32.totalorder %s41, %s57
    %p59 = scmp.eq.s32.totalorder %s19, 0
    %p60 = por %p58, %p59
    %s61 = ssub.s32 %s20, %s32
    %p62 = scmp.eq.s32.totalorder %s61, 0
    %s64 = sadd.s32 %s63, 1
    %s65 = scalar_select %p62, %s63, %s64
    %p68 = pneg %p62
    %p69 = scmp.eq.s32.totalorder %s13, 1
    %p70 = por %p68, %p69
    %p71 = scmp.ne.s32.totalorder %s63, %s66
    %p72 = scmp.eq.s32.totalorder %s13, 0
    %p73 = por %p71, %p72
    %p74 = scmp.ne.s32.totalorder %s63, %s66
    %p75 = scmp.eq.s32.totalorder %s18, 1
    %p76 = por %p74, %p75
    %p77 = scmp.ne.s32.totalorder %s66, %s67
    %p78 = scmp.eq.s32.totalorder %s18, 0
    %p79 = por %p77, %p78
    %p80 = scmp.ne.s32.totalorder %s66, %s67
    %p81 = scmp.eq.s32.totalorder %s19, 1
    %p82 = por %p80, %p81
    %p84 = scmp.ne.s32.totalorder %s67, %s83
    %p85 = scmp.eq.s32.totalorder %s19, 0
    %p86 = por %p84, %p85
    %s87 = ssub.s32 %s20, %s32
    %p88 = scmp.eq.s32.totalorder %s87, 0
    %s90 = sadd.s32 %s89, 1
    %s91 = scalar_select %p88, %s89, %s90
    %p94 = pneg %p88
    %p95 = scmp.eq.s32.totalorder %s13, 1
    %p96 = por %p94, %p95
    %p97 = scmp.ne.s32.totalorder %s89, %s92
    %p98 = scmp.eq.s32.totalorder %s13, 0
    %p99 = por %p97, %p98
    %p100 = scmp.ne.s32.totalorder %s89, %s92
    %p101 = scmp.eq.s32.totalorder %s18, 1
    %p102 = por %p100, %p101
    %p103 = scmp.ne.s32.totalorder %s92, %s93
    %p104 = scmp.eq.s32.totalorder %s18, 0
    %p105 = por %p103, %p104
    %p106 = scmp.ne.s32.totalorder %s92, %s93
    %p107 = scmp.eq.s32.totalorder %s19, 1
    %p108 = por %p106, %p107
    %p110 = scmp.ne.s32.totalorder %s93, %s109
    %p111 = scmp.eq.s32.totalorder %s19, 0
    %p112 = por %p110, %p111
    %s113 = ssub.s32 %s20, %s32
    %p114 = scmp.eq.s32.totalorder %s113, 0
    %s116 = sadd.s32 %s115, 1
    %s117 = scalar_select %p114, %s115, %s116
    %p120 = pneg %p114
    %p121 = scmp.eq.s32.totalorder %s13, 1
    %p122 = por %p120, %p121
    %p123 = scmp.ne.s32.totalorder %s115, %s118
    %p124 = scmp.eq.s32.totalorder %s13, 0
    %p125 = por %p123, %p124
    %p126 = scmp.ne.s32.totalorder %s115, %s118
    %p127 = scmp.eq.s32.totalorder %s18, 1
    %p128 = por %p126, %p127
    %p129 = scmp.ne.s32.totalorder %s118, %s119
    %p130 = scmp.eq.s32.totalorder %s18, 0
    %p131 = por %p129, %p130
    %p132 = scmp.ne.s32.totalorder %s118, %s119
    %p133 = scmp.eq.s32.totalorder %s19, 1
    %p134 = por %p132, %p133
    %p136 = scmp.ne.s32.totalorder %s119, %s135
    %p137 = scmp.eq.s32.totalorder %s19, 0
    %p138 = por %p136, %p137
    %s139 = ssub.s32 %s20, %s32
    %p140 = scmp.eq.s32.totalorder %s139, 0
    %s142 = sadd.s32 %s141, 1
    %s143 = scalar_select %p140, %s141, %s142
    %p146 = pneg %p140
    %p147 = scmp.eq.s32.totalorder %s13, 1
    %p148 = por %p146, %p147
    %p149 = scmp.ne.s32.totalorder %s141, %s144
    %p150 = scmp.eq.s32.totalorder %s13, 0
    %p151 = por %p149, %p150
    %p152 = scmp.ne.s32.totalorder %s141, %s144
    %p153 = scmp.eq.s32.totalorder %s18, 1
    %p154 = por %p152, %p153
    %p155 = scmp.ne.s32.totalorder %s144, %s145
    %p156 = scmp.eq.s32.totalorder %s18, 0
    %p157 = por %p155, %p156
    %p158 = scmp.ne.s32.totalorder %s144, %s145
    %p159 = scmp.eq.s32.totalorder %s19, 1
    %p160 = por %p158, %p159
    %p162 = scmp.ne.s32.totalorder %s145, %s161
    %p163 = scmp.eq.s32.totalorder %s19, 0
    %p164 = por %p162, %p163
    %s165 = ssub.s32 %s20, %s32
    %p166 = scmp.eq.s32.totalorder %s165, 0
    %s168 = sadd.s32 %s167, 1
    %s169 = scalar_select %p166, %s167, %s168
    %p172 = pneg %p166
    %p173 = scmp.eq.s32.totalorder %s13, 1
    %p174 = por %p172, %p173
    %p175 = scmp.ne.s32.totalorder %s167, %s170
    %p176 = scmp.eq.s32.totalorder %s13, 0
    %p177 = por %p175, %p176
    %p178 = scmp.ne.s32.totalorder %s167, %s170
    %p179 = scmp.eq.s32.totalorder %s18, 1
    %p180 = por %p178, %p179
    %p181 = scmp.ne.s32.totalorder %s170, %s171
    %p182 = scmp.eq.s32.totalorder %s18, 0
    %p183 = por %p181, %p182
    %p184 = scmp.ne.s32.totalorder %s170, %s171
    %p185 = scmp.eq.s32.totalorder %s19, 1
    %p186 = por %p184, %p185
    %p188 = scmp.ne.s32.totalorder %s171, %s187
    %p189 = scmp.eq.s32.totalorder %s19, 0
    %p190 = por %p188, %p189
    %s191 = ssub.s32 %s20, %s32
    %p192 = scmp.eq.s32.totalorder %s191, 0
    %s194 = sadd.s32 %s193, 1
    %s195 = scalar_select %p192, %s193, %s194
    %p198 = pneg %p192
    %p199 = scmp.eq.s32.totalorder %s13, 1
    %p200 = por %p198, %p199
    %p201 = scmp.ne.s32.totalorder %s193, %s196
    %p202 = scmp.eq.s32.totalorder %s13, 0
    %p203 = por %p201, %p202
    %p204 = scmp.ne.s32.totalorder %s193, %s196
    %p205 = scmp.eq.s32.totalorder %s18, 1
    %p206 = por %p204, %p205
    %p207 = scmp.ne.s32.totalorder %s196, %s197
    %p208 = scmp.eq.s32.totalorder %s18, 0
    %p209 = por %p207, %p208
    %p210 = scmp.ne.s32.totalorder %s196, %s197
    %p211 = scmp.eq.s32.totalorder %s19, 1
    %p212 = por %p210, %p211
    %p214 = scmp.ne.s32.totalorder %s197, %s213
    %p215 = scmp.eq.s32.totalorder %s19, 0
    %p216 = por %p214, %p215
    %s217 = ssub.s32 %s21, %s28
    %s218 = ssub.s32 %s20, %s32
    %s219 = sor.u32 %s217, %s218
    %p220 = scmp.eq.s32.totalorder %s219, 0
    %s222 = sadd.s32 %s221, 1
    %s223 = scalar_select %p220, %s221, %s222
    %p226 = pneg %p220
    %p227 = scmp.eq.s32.totalorder %s13, 1
    %p228 = por %p226, %p227
    %p229 = scmp.ne.s32.totalorder %s221, %s224
    %p230 = scmp.eq.s32.totalorder %s13, 0
    %p231 = por %p229, %p230
    %p232 = scmp.ne.s32.totalorder %s221, %s224
    %p233 = scmp.eq.s32.totalorder %s18, 1
    %p234 = por %p232, %p233
    %p235 = scmp.ne.s32.totalorder %s224, %s225
    %p236 = scmp.eq.s32.totalorder %s18, 0
    %p237 = por %p235, %p236
    %p238 = scmp.ne.s32.totalorder %s224, %s225
    %p239 = scmp.eq.s32.totalorder %s19, 1
    %p240 = por %p238, %p239
    %p242 = scmp.ne.s32.totalorder %s225, %s241
    %p243 = scmp.eq.s32.totalorder %s19, 0
    %p244 = por %p242, %p243
    %p245 = scmp.le.s32.totalorder 1, %s13
    %p246 = scmp.lt.s32.totalorder %s13, 3
    %p247 = pnand %p245, %p246
    %p248 = pneg %p247
    // Predicated region
    $region9: #{anti_layer_segment.7} parent=5 // pred_check
      _
    $region10: #{anti_layer_segment.7} parent=5 // pred_check_branch
      %250 = sbr.rel (%p247) target = $region12
    $region11: #{anti_layer_segment.7} parent=5 // pred_region
      %s251 = ssub.s32 %s13, 1
      // Predicated region
      $region13: #{anti_layer_segment.7} parent=11 // pred_check
        %p252 = pneg %p79
      $region14: #{anti_layer_segment.7} parent=11 // pred_check_branch
        %254 = sbr.rel (%p252) target = $region16
      $region15: #{anti_layer_segment.7} parent=11 // pred_region
        %p255 = scmp.lt.s32.totalorder %s22, 0
        %s256 = scalar_select %p255, %s22, 0
        %s257 = smul.addr %s256, 4
        %s258 = smul.addr %s257, 8
        %s259 = scalar_lea.vmem %s1, %s258
      $region16: #{anti_layer_segment.7} parent=11 // pred_fallthru
        _
      // Predicated region
      $region17: #{anti_layer_segment.7} parent=11 // pred_check
        %p260 = pneg %p105
      $region18: #{anti_layer_segment.7} parent=11 // pred_check_branch
        %262 = sbr.rel (%p260) target = $region20
      $region19: #{anti_layer_segment.7} parent=11 // pred_region
        %p263 = scmp.lt.s32.totalorder %s22, 0
        %s264 = scalar_select %p263, %s22, 0
        %s265 = smul.addr %s264, 4
        %s266 = smul.addr %s265, 8
        %s267 = scalar_lea.vmem %s2, %s266
      $region20: #{anti_layer_segment.7} parent=11 // pred_fallthru
        _
      // Predicated region
      $region21: #{anti_layer_segment.7} parent=11 // pred_check
        %p268 = pneg %p131
      $region22: #{anti_layer_segment.7} parent=11 // pred_check_branch
        %270 = sbr.rel (%p268) target = $region24
      $region23: #{anti_layer_segment.7} parent=11 // pred_region
        %p271 = scmp.lt.s32.totalorder %s22, 0
        %s272 = scalar_select %p271, %s22, 0
        %s273 = smul.addr %s272, 4
        %s274 = smul.addr %s273, 8
        %s275 = scalar_lea.vmem %s3, %s274
      $region24: #{anti_layer_segment.7} parent=11 // pred_fallthru
        _
      // Predicated region
      $region25: #{anti_layer_segment.7} parent=11 // pred_check
        %p276 = pneg %p157
      $region26: #{anti_layer_segment.7} parent=11 // pred_check_branch
        %278 = sbr.rel (%p276) target = $region28
      $region27: #{anti_layer_segment.7} parent=11 // pred_region
        %p279 = scmp.lt.s32.totalorder %s22, 0
        %s280 = scalar_select %p279, %s22, 0
        %s281 = scalar_lea.vmem %s4, %s280
      $region28: #{anti_layer_segment.7} parent=11 // pred_fallthru
        _
      // Predicated region
      $region29: #{anti_layer_segment.7} parent=11 // pred_check
        %p282 = pneg %p183
      $region30: #{anti_layer_segment.7} parent=11 // pred_check_branch
        %284 = sbr.rel (%p282) target = $region32
      $region31: #{anti_layer_segment.7} parent=11 // pred_region
        %p285 = scmp.lt.s32.totalorder %s22, 0
        %s286 = scalar_select %p285, %s22, 0
        %s287 = scalar_lea.vmem %s5, %s286
      $region32: #{anti_layer_segment.7} parent=11 // pred_fallthru
        _
      // Predicated region
      $region33: #{anti_layer_segment.7} parent=11 // pred_check
        %p288 = pneg %p209
      $region34: #{anti_layer_segment.7} parent=11 // pred_check_branch
        %290 = sbr.rel (%p288) target = $region36
      $region35: #{anti_layer_segment.7} parent=11 // pred_region
        %p291 = scmp.lt.s32.totalorder %s22, 0
        %s292 = scalar_select %p291, %s22, 0
        %s293 = scalar_lea.vmem %s6, %s292
      $region36: #{anti_layer_segment.7} parent=11 // pred_fallthru
        _
    $region12: #{anti_layer_segment.7} parent=5 // pred_fallthru
      _
    %p294 = scmp.lt.s32.totalorder %s13, 2
    // Predicated region
    $region37: #{anti_layer_segment.7} parent=5 // pred_check
      %p295 = pneg %p294
    $region38: #{anti_layer_segment.7} parent=5 // pred_check_branch
      %297 = sbr.rel (%p295) target = $region40
    $region39: #{anti_layer_segment.7} parent=5 // pred_region
      // Predicated region
      $region41: #{anti_layer_segment.7} parent=39 // pred_check
        %p298 = pneg %p47
      $region42: #{anti_layer_segment.7} parent=39 // pred_check_branch
        %300 = sbr.rel (%p298) target = $region44
      $region43: #{anti_layer_segment.7} parent=39 // pred_region
        %p301 = scmp.lt.s32.totalorder %s21, 1
        %s302 = scalar_select %p301, %s21, 1
        %p303 = scmp.lt.s32.totalorder %s20, 0
        %s304 = scalar_select %p303, %s20, 0
        %s305 = sadd.s32 %s304, %s302
        %s306 = smul.addr %s305, 4
        %s307 = scalar_lea.vmem %s0, %s306
      $region44: #{anti_layer_segment.7} parent=39 // pred_fallthru
        _
    $region40: #{anti_layer_segment.7} parent=5 // pred_fallthru
      _
    %p308 = scmp.le.s32.totalorder 1, %s13
    %p309 = scmp.lt.s32.totalorder %s13, 3
    %p310 = pnand %p308, %p309
    %p311 = pneg %p310
    // Predicated region
    $region45: #{anti_layer_segment.7} parent=5 // pred_check
      _
    $region46: #{anti_layer_segment.7} parent=5 // pred_check_branch
      %313 = sbr.rel (%p310) target = $region48
    $region47: #{anti_layer_segment.7} parent=5 // pred_region
      %s314 = ssub.s32 %s13, 1
      %p315 = scmp.lt.s32.totalorder %s23, 1
      %s316 = scalar_select %p315, %s23, 1
      %p317 = scmp.lt.s32.totalorder %s22, 0
      %s318 = scalar_select %p317, %s22, 0
      %s319 = sadd.s32 %s318, %s316
      %s320 = smul.addr %s319, 4
      %s321 = scalar_lea.vmem %s0, %s320
      %p322 = pneg %p53
      %p323 = pneg %p50
      %p324 = scmp.lt.s32.totalorder %s22, 0
      %s325 = scalar_select %p324, %s22, 0
      %s326 = smul.addr %s325, 4
      %s327 = smul.addr %s326, 8
      %s328 = scalar_lea.vmem %s1, %s327
      %p329 = pneg %p79
      %p330 = pneg %p76
      %p331 = scmp.lt.s32.totalorder %s22, 0
      %s332 = scalar_select %p331, %s22, 0
      %s333 = smul.addr %s332, 4
      %s334 = smul.addr %s333, 8
      %s335 = scalar_lea.vmem %s2, %s334
      %p336 = pneg %p105
      %p337 = pneg %p102
      %p338 = scmp.lt.s32.totalorder %s22, 0
      %s339 = scalar_select %p338, %s22, 0
      %s340 = smul.addr %s339, 4
      %s341 = smul.addr %s340, 8
      %s342 = scalar_lea.vmem %s3, %s341
      %p343 = pneg %p131
      %p344 = pneg %p128
      %p345 = scmp.lt.s32.totalorder %s22, 0
      %s346 = scalar_select %p345, %s22, 0
      %s347 = scalar_lea.vmem %s4, %s346
      %p348 = pneg %p157
      %p349 = pneg %p154
      %p350 = scmp.lt.s32.totalorder %s22, 0
      %s351 = scalar_select %p350, %s22, 0
      %s352 = scalar_lea.vmem %s5, %s351
      %p353 = pneg %p183
      %p354 = pneg %p180
      %p355 = scmp.lt.s32.totalorder %s22, 0
      %s356 = scalar_select %p355, %s22, 0
      %s357 = scalar_lea.vmem %s6, %s356
      %p358 = pneg %p209
      %p359 = pneg %p206
      %p360 = pneg %p237
      %p361 = pneg %p234
      %p362 = scmp.lt.s32.totalorder %s23, 1
      %s363 = scalar_select %p362, %s23, 1
      %p364 = scmp.lt.s32.totalorder %s22, 0
      %s365 = scalar_select %p364, %s22, 0
      %s366 = sadd.s32 %s365, %s363
      %s367 = smul.addr %s366, 4
      %s368 = scalar_lea.vmem %s7, %s367
      %p369 = scmp.lt.s32.totalorder %s23, 1
      %s370 = scalar_select %p369, %s23, 1
      %p371 = scmp.lt.s32.totalorder %s22, 0
      %s372 = scalar_select %p371, %s22, 0
      %s373 = sadd.s32 %s372, %s370
      %s374 = smul.addr %s373, 4
      %s375 = scalar_lea.vmem %s0, %s374
      %p376 = scmp.lt.s32.totalorder %s22, 0
      %s377 = scalar_select %p376, %s22, 0
      %s378 = smul.addr %s377, 4
      %s379 = smul.addr %s378, 8
      %s380 = scalar_lea.vmem %s1, %s379
      %p381 = scmp.lt.s32.totalorder %s22, 0
      %s382 = scalar_select %p381, %s22, 0
      %s383 = smul.addr %s382, 4
      %s384 = smul.addr %s383, 8
      %s385 = scalar_lea.vmem %s2, %s384
      %p386 = scmp.lt.s32.totalorder %s22, 0
      %s387 = scalar_select %p386, %s22, 0
      %s388 = smul.addr %s387, 4
      %s389 = smul.addr %s388, 8
      %s390 = scalar_lea.vmem %s3, %s389
      %p391 = scmp.lt.s32.totalorder %s22, 0
      %s392 = scalar_select %p391, %s22, 0
      %s393 = scalar_lea.vmem %s4, %s392
      %p394 = scmp.lt.s32.totalorder %s22, 0
      %s395 = scalar_select %p394, %s22, 0
      %s396 = scalar_lea.vmem %s5, %s395
      %p397 = scmp.lt.s32.totalorder %s22, 0
      %s398 = scalar_select %p397, %s22, 0
      %s399 = scalar_lea.vmem %s6, %s398
      %p400 = scmp.lt.s32.totalorder %s23, 1
      %s401 = scalar_select %p400, %s23, 1
      %p402 = scmp.lt.s32.totalorder %s22, 0
      %s403 = scalar_select %p402, %s22, 0
      %s404 = sadd.s32 %s403, %s401
      %s405 = smul.addr %s404, 4
      %s406 = scalar_lea.vmem %s7, %s405
      %v407 = vld [vmem:[%s375] sm:$0x7]
      %v408 = vld [vmem:[%s380] sm:$0xff]
      %v409 = vld [vmem:[%s380 + $0x8] sm:$0xff]
      %v410 = vld [vmem:[%s380 + $0x10] sm:$0xff]
      %v411 = vld [vmem:[%s380 + $0x18] sm:$0xff]
      %v412 = vld [vmem:[%s393] sm:$0x1]
      %v414 = vlaneseq
      %v415 = vshrl.u32 %v414, 7
      %v416 = vsub.s32 0, %v415
      %v417 = vrot.slane %v412, %v416
      %vm419 = vcmask 261120
      %v421 = vsel %vm419, %v407, 0
      %423 = vmatprep.subr.mxu0 0.0
      %424 = vmatpush1.msra.mxu0 %v408
      %425 = vmatprep.subr.mxu0 0.0
      %426 = vmatpush1.msra.mxu0 %v409
      %427 = vmatprep.subr.mxu0 0.0
      %428 = vmatpush1.msra.mxu0 %v410
      %429 = vmatprep.subr.mxu0 0.0
      %430 = vmatpush1.msra.mxu0 %v411
      %431 = vmatprep.subr.mxu0 0.0
      %432 = vmatpush1.msra.mxu0 0.0
      %433 = vmatprep.subr.mxu0 0.0
      %434 = vmatpush1.msra.mxu0 0.0
      %435 = vmatprep.subr.mxu0 0.0
      %436 = vmatpush1.msra.mxu0 0.0
      %437 = vmatprep.subr.mxu0 0.0
      %438 = vmatpush1.msra.mxu0 0.0
      %439 = vmatprep.subr.mxu0 0.0
      %440 = vmatpush1.msra.mxu0 0.0
      %441 = vmatprep.subr.mxu0 0.0
      %442 = vmatpush1.msra.mxu0 0.0
      %443 = vmatprep.subr.mxu0 0.0
      %444 = vmatpush1.msra.mxu0 0.0
      %445 = vmatprep.subr.mxu0 0.0
      %446 = vmatpush1.msra.mxu0 0.0
      %447 = vmatprep.subr.mxu0 0.0
      %448 = vmatpush1.msra.mxu0 0.0
      %449 = vmatprep.subr.mxu0 0.0
      %450 = vmatpush1.msra.mxu0 0.0
      %451 = vmatprep.subr.mxu0 0.0
      %452 = vmatpush1.msra.mxu0 0.0
      %453 = vmatprep.subr.mxu0 0.0
      %454 = vmatpush1.msra.mxu0 0.0
      %455 = vmatprep.subr.mxu0 0.0
      %456 = vmatpush1.msra.mxu0 0.0
      %457 = vmatprep.subr.mxu0 0.0
      %458 = vmatpush1.msra.mxu0 0.0
      %459 = vmatprep.subr.mxu0 0.0
      %460 = vmatpush1.msra.mxu0 0.0
      %461 = vmatprep.subr.mxu0 0.0
      %462 = vmatpush1.msra.mxu0 0.0
      %463 = vmatprep.subr.mxu0 0.0
      %464 = vmatpush1.msra.mxu0 0.0
      %465 = vmatprep.subr.mxu0 0.0
      %466 = vmatpush1.msra.mxu0 0.0
      %467 = vmatprep.subr.mxu0 0.0
      %468 = vmatpush1.msra.mxu0 0.0
      %469 = vmatprep.subr.mxu0 0.0
      %470 = vmatpush1.msra.mxu0 0.0
      %471 = vmatprep.subr.mxu0 0.0
      %472 = vmatpush1.msra.mxu0 0.0
      %473 = vmatprep.subr.mxu0 0.0
      %474 = vmatpush1.msra.mxu0 0.0
      %475 = vmatprep.subr.mxu0 0.0
      %476 = vmatpush1.msra.mxu0 0.0
      %477 = vmatprep.subr.mxu0 0.0
      %478 = vmatpush1.msra.mxu0 0.0
      %479 = vmatprep.subr.mxu0 0.0
      %480 = vmatpush1.msra.mxu0 0.0
      %481 = vmatprep.subr.mxu0 0.0
      %482 = vmatpush1.msra.mxu0 0.0
      %483 = vmatprep.subr.mxu0 0.0
      %484 = vmatpush1.msra.mxu0 0.0
      %485 = vmatprep.subr.mxu0 0.0
      %486 = vmatpush1.msra.mxu0 0.0
      %487 = vmatprep.mubr.f32.mxu0 0.0
      %488 = vmatmul.mubr.f32.gmra.mrb[0].mxu0 %v421
      %v489 = vpop.f32.mrb[0].mxu0
      %v490 = vadd.f32 %v417, %v489
      %v491 = vpop.f32.mrb[0].mxu0
      %492 = vdwg.mxu0
      %v493 = vld [vmem:[%s385] sm:$0xff]
      %v494 = vld [vmem:[%s385 + $0x8] sm:$0xff]
      %v495 = vld [vmem:[%s385 + $0x10] sm:$0xff]
      %v496 = vld [vmem:[%s385 + $0x18] sm:$0xff]
      %v497 = vld [vmem:[%s396] sm:$0x1]
      %v499 = vlaneseq
      %v500 = vshrl.u32 %v499, 7
      %v501 = vsub.s32 0, %v500
      %v502 = vrot.slane %v497, %v501
      %504 = vmatprep.subr.mxu0 0.0
      %505 = vmatpush1.msra.mxu0 %v493
      %506 = vmatprep.subr.mxu0 0.0
      %507 = vmatpush1.msra.mxu0 %v494
      %508 = vmatprep.subr.mxu0 0.0
      %509 = vmatpush1.msra.mxu0 %v495
      %510 = vmatprep.subr.mxu0 0.0
      %511 = vmatpush1.msra.mxu0 %v496
      %512 = vmatprep.subr.mxu0 0.0
      %513 = vmatpush1.msra.mxu0 0.0
      %514 = vmatprep.subr.mxu0 0.0
      %515 = vmatpush1.msra.mxu0 0.0
      %516 = vmatprep.subr.mxu0 0.0
      %517 = vmatpush1.msra.mxu0 0.0
      %518 = vmatprep.subr.mxu0 0.0
      %519 = vmatpush1.msra.mxu0 0.0
      %520 = vmatprep.subr.mxu0 0.0
      %521 = vmatpush1.msra.mxu0 0.0
      %522 = vmatprep.subr.mxu0 0.0
      %523 = vmatpush1.msra.mxu0 0.0
      %524 = vmatprep.subr.mxu0 0.0
      %525 = vmatpush1.msra.mxu0 0.0
      %526 = vmatprep.subr.mxu0 0.0
      %527 = vmatpush1.msra.mxu0 0.0
      %528 = vmatprep.subr.mxu0 0.0
      %529 = vmatpush1.msra.mxu0 0.0
      %530 = vmatprep.subr.mxu0 0.0
      %531 = vmatpush1.msra.mxu0 0.0
      %532 = vmatprep.subr.mxu0 0.0
      %533 = vmatpush1.msra.mxu0 0.0
      %534 = vmatprep.subr.mxu0 0.0
      %535 = vmatpush1.msra.mxu0 0.0
      %536 = vmatprep.subr.mxu0 0.0
      %537 = vmatpush1.msra.mxu0 0.0
      %538 = vmatprep.subr.mxu0 0.0
      %539 = vmatpush1.msra.mxu0 0.0
      %540 = vmatprep.subr.mxu0 0.0
      %541 = vmatpush1.msra.mxu0 0.0
      %542 = vmatprep.subr.mxu0 0.0
      %543 = vmatpush1.msra.mxu0 0.0
      %544 = vmatprep.subr.mxu0 0.0
      %545 = vmatpush1.msra.mxu0 0.0
      %546 = vmatprep.subr.mxu0 0.0
      %547 = vmatpush1.msra.mxu0 0.0
      %548 = vmatprep.subr.mxu0 0.0
      %549 = vmatpush1.msra.mxu0 0.0
      %550 = vmatprep.subr.mxu0 0.0
      %551 = vmatpush1.msra.mxu0 0.0
      %552 = vmatprep.subr.mxu0 0.0
      %553 = vmatpush1.msra.mxu0 0.0
      %554 = vmatprep.subr.mxu0 0.0
      %555 = vmatpush1.msra.mxu0 0.0
      %556 = vmatprep.subr.mxu0 0.0
      %557 = vmatpush1.msra.mxu0 0.0
      %558 = vmatprep.subr.mxu0 0.0
      %559 = vmatpush1.msra.mxu0 0.0
      %560 = vmatprep.subr.mxu0 0.0
      %561 = vmatpush1.msra.mxu0 0.0
      %562 = vmatprep.subr.mxu0 0.0
      %563 = vmatpush1.msra.mxu0 0.0
      %564 = vmatprep.subr.mxu0 0.0
      %565 = vmatpush1.msra.mxu0 0.0
      %566 = vmatprep.subr.mxu0 0.0
      %567 = vmatpush1.msra.mxu0 0.0
      %568 = vmatprep.mubr.f32.mxu0 0.0
      %569 = vmatmul.mubr.f32.gmra.mrb[0].mxu0 %v421
      %v570 = vpop.f32.mrb[0].mxu0
      %v571 = vadd.f32 %v502, %v570
      %v572 = vpop.f32.mrb[0].mxu0
      %573 = vdwg.mxu0
      %v574 = vld [vmem:[%s390] sm:$0xff]
      %v575 = vld [vmem:[%s390 + $0x8] sm:$0xff]
      %v576 = vld [vmem:[%s390 + $0x10] sm:$0xff]
      %v577 = vld [vmem:[%s390 + $0x18] sm:$0xff]
      %v578 = vld [vmem:[%s399] sm:$0x1]
      %v580 = vlaneseq
      %v581 = vshrl.u32 %v580, 7
      %v582 = vsub.s32 0, %v581
      %v583 = vrot.slane %v578, %v582
      %585 = vmatprep.subr.mxu0 0.0
      %586 = vmatpush1.msra.mxu0 %v574
      %587 = vmatprep.subr.mxu0 0.0
      %588 = vmatpush1.msra.mxu0 %v575
      %589 = vmatprep.subr.mxu0 0.0
      %590 = vmatpush1.msra.mxu0 %v576
      %591 = vmatprep.subr.mxu0 0.0
      %592 = vmatpush1.msra.mxu0 %v577
      %593 = vmatprep.subr.mxu0 0.0
      %594 = vmatpush1.msra.mxu0 0.0
      %595 = vmatprep.subr.mxu0 0.0
      %596 = vmatpush1.msra.mxu0 0.0
      %597 = vmatprep.subr.mxu0 0.0
      %598 = vmatpush1.msra.mxu0 0.0
      %599 = vmatprep.subr.mxu0 0.0
      %600 = vmatpush1.msra.mxu0 0.0
      %601 = vmatprep.subr.mxu0 0.0
      %602 = vmatpush1.msra.mxu0 0.0
      %603 = vmatprep.subr.mxu0 0.0
      %604 = vmatpush1.msra.mxu0 0.0
      %605 = vmatprep.subr.mxu0 0.0
      %606 = vmatpush1.msra.mxu0 0.0
      %607 = vmatprep.subr.mxu0 0.0
      %608 = vmatpush1.msra.mxu0 0.0
      %609 = vmatprep.subr.mxu0 0.0
      %610 = vmatpush1.msra.mxu0 0.0
      %611 = vmatprep.subr.mxu0 0.0
      %612 = vmatpush1.msra.mxu0 0.0
      %613 = vmatprep.subr.mxu0 0.0
      %614 = vmatpush1.msra.mxu0 0.0
      %615 = vmatprep.subr.mxu0 0.0
      %616 = vmatpush1.msra.mxu0 0.0
      %617 = vmatprep.subr.mxu0 0.0
      %618 = vmatpush1.msra.mxu0 0.0
      %619 = vmatprep.subr.mxu0 0.0
      %620 = vmatpush1.msra.mxu0 0.0
      %621 = vmatprep.subr.mxu0 0.0
      %622 = vmatpush1.msra.mxu0 0.0
      %623 = vmatprep.subr.mxu0 0.0
      %624 = vmatpush1.msra.mxu0 0.0
      %625 = vmatprep.subr.mxu0 0.0
      %626 = vmatpush1.msra.mxu0 0.0
      %627 = vmatprep.subr.mxu0 0.0
      %628 = vmatpush1.msra.mxu0 0.0
      %629 = vmatprep.subr.mxu0 0.0
      %630 = vmatpush1.msra.mxu0 0.0
      %631 = vmatprep.subr.mxu0 0.0
      %632 = vmatpush1.msra.mxu0 0.0
      %633 = vmatprep.subr.mxu0 0.0
      %634 = vmatpush1.msra.mxu0 0.0
      %635 = vmatprep.subr.mxu0 0.0
      %636 = vmatpush1.msra.mxu0 0.0
      %637 = vmatprep.subr.mxu0 0.0
      %638 = vmatpush1.msra.mxu0 0.0
      %639 = vmatprep.subr.mxu0 0.0
      %640 = vmatpush1.msra.mxu0 0.0
      %641 = vmatprep.subr.mxu0 0.0
      %642 = vmatpush1.msra.mxu0 0.0
      %643 = vmatprep.subr.mxu0 0.0
      %644 = vmatpush1.msra.mxu0 0.0
      %645 = vmatprep.subr.mxu0 0.0
      %646 = vmatpush1.msra.mxu0 0.0
      %647 = vmatprep.subr.mxu0 0.0
      %648 = vmatpush1.msra.mxu0 0.0
      %649 = vmatprep.mubr.f32.mxu0 0.0
      %650 = vmatmul.mubr.f32.gmra.mrb[0].mxu0 %v421
      %v651 = vpop.f32.mrb[0].mxu0
      %v652 = vadd.f32 %v583, %v651
      %v653 = vpop.f32.mrb[0].mxu0
      %654 = vdwg.mxu0
      %vm655 = vcmask 64512
      %v657 = vsel %vm655, %v490, 0
      %v660 = vsel %vm655, %v571, 0
      %662 = vmatprep.subr.mxu0 0.0
      %663 = vmatpush1.xpose.msra.mxu0 %v660
      %664 = vmatprep.subr.mxu0 0.0
      %665 = vmatpush1.xpose.msra.mxu0 0.0
      %666 = vmatprep.subr.mxu0 0.0
      %667 = vmatpush1.xpose.msra.mxu0 0.0
      %668 = vmatprep.subr.mxu0 0.0
      %669 = vmatpush1.xpose.msra.mxu0 0.0
      %670 = vmatprep.subr.mxu0 0.0
      %671 = vmatpush1.xpose.msra.mxu0 0.0
      %672 = vmatprep.subr.mxu0 0.0
      %673 = vmatpush1.xpose.msra.mxu0 0.0
      %674 = vmatprep.subr.mxu0 0.0
      %675 = vmatpush1.xpose.msra.mxu0 0.0
      %676 = vmatprep.subr.mxu0 0.0
      %677 = vmatpush1.xpose.msra.mxu0 0.0
      %678 = vmatprep.subr.mxu0 0.0
      %679 = vmatpush1.xpose.msra.mxu0 0.0
      %680 = vmatprep.subr.mxu0 0.0
      %681 = vmatpush1.xpose.msra.mxu0 0.0
      %682 = vmatprep.subr.mxu0 0.0
      %683 = vmatpush1.xpose.msra.mxu0 0.0
      %684 = vmatprep.subr.mxu0 0.0
      %685 = vmatpush1.xpose.msra.mxu0 0.0
      %686 = vmatprep.subr.mxu0 0.0
      %687 = vmatpush1.xpose.msra.mxu0 0.0
      %688 = vmatprep.subr.mxu0 0.0
      %689 = vmatpush1.xpose.msra.mxu0 0.0
      %690 = vmatprep.subr.mxu0 0.0
      %691 = vmatpush1.xpose.msra.mxu0 0.0
      %692 = vmatprep.subr.mxu0 0.0
      %693 = vmatpush1.xpose.msra.mxu0 0.0
      %694 = vmatprep.subr.mxu0 0.0
      %695 = vmatpush1.xpose.msra.mxu0 0.0
      %696 = vmatprep.subr.mxu0 0.0
      %697 = vmatpush1.xpose.msra.mxu0 0.0
      %698 = vmatprep.subr.mxu0 0.0
      %699 = vmatpush1.xpose.msra.mxu0 0.0
      %700 = vmatprep.subr.mxu0 0.0
      %701 = vmatpush1.xpose.msra.mxu0 0.0
      %702 = vmatprep.subr.mxu0 0.0
      %703 = vmatpush1.xpose.msra.mxu0 0.0
      %704 = vmatprep.subr.mxu0 0.0
      %705 = vmatpush1.xpose.msra.mxu0 0.0
      %706 = vmatprep.subr.mxu0 0.0
      %707 = vmatpush1.xpose.msra.mxu0 0.0
      %708 = vmatprep.subr.mxu0 0.0
      %709 = vmatpush1.xpose.msra.mxu0 0.0
      %710 = vmatprep.subr.mxu0 0.0
      %711 = vmatpush1.xpose.msra.mxu0 0.0
      %712 = vmatprep.subr.mxu0 0.0
      %713 = vmatpush1.xpose.msra.mxu0 0.0
      %714 = vmatprep.subr.mxu0 0.0
      %715 = vmatpush1.xpose.msra.mxu0 0.0
      %716 = vmatprep.subr.mxu0 0.0
      %717 = vmatpush1.xpose.msra.mxu0 0.0
      %718 = vmatprep.subr.mxu0 0.0
      %719 = vmatpush1.xpose.msra.mxu0 0.0
      %720 = vmatprep.subr.mxu0 0.0
      %721 = vmatpush1.xpose.msra.mxu0 0.0
      %722 = vmatprep.subr.mxu0 0.0
      %723 = vmatpush1.xpose.msra.mxu0 0.0
      %724 = vmatprep.subr.mxu0 0.0
      %725 = vmatpush1.xpose.msra.mxu0 0.0
      %726 = vmatprep.mubr.f32.mxu0 0.0
      %727 = vmatmul.mubr.f32.gmra.mrb[0].mxu0 %v657
      %v728 = vpop.f32.mrb[0].mxu0
      %v729 = vadd.f32 0.0, %v728
      %v730 = vpop.f32.mrb[0].mxu0
      %731 = vdwg.mxu0
      %v732 = vmul.f32 %v729, 0.35355338
      %vm733 = vcmask 18432
      %v734 = vsel %vm733, %v732, -inf
      %735 = vmax.xlane.f32.xlu0 %v734
      %v736 = vpop.xlane.xlu0 %735
      %v737 = vsub.f32 %v732, %v736
      %v738 = vmul.f32 %v737, 1.442695
      %v739 = vpow.pop %v738
      %v740 = vsel %vm733, %v739, 0.0
      %741 = vadd.xlane.f32.xlu0 %v740
      %v742 = vpop.xlane.xlu0 %741
      %v743 = vrcp.pop %v742
      %v744 = vmul.f32 %v739, %v743
      %vm745 = vcmask 23552
      %v747 = vsel %vm745, %v744, 0
      %vm749 = vcmask 1042432
      %v751 = vsel %vm749, %v652, 0
      %753 = vmatprep.subr.mxu0 0.0
      %754 = vmatpush1.msra.mxu0 %v751
      %755 = vmatprep.subr.mxu0 0.0
      %756 = vmatpush1.msra.mxu0 0.0
      %757 = vmatprep.subr.mxu0 0.0
      %758 = vmatpush1.msra.mxu0 0.0
      %759 = vmatprep.subr.mxu0 0.0
      %760 = vmatpush1.msra.mxu0 0.0
      %761 = vmatprep.subr.mxu0 0.0
      %762 = vmatpush1.msra.mxu0 0.0
      %763 = vmatprep.subr.mxu0 0.0
      %764 = vmatpush1.msra.mxu0 0.0
      %765 = vmatprep.subr.mxu0 0.0
      %766 = vmatpush1.msra.mxu0 0.0
      %767 = vmatprep.subr.mxu0 0.0
      %768 = vmatpush1.msra.mxu0 0.0
      %769 = vmatprep.subr.mxu0 0.0
      %770 = vmatpush1.msra.mxu0 0.0
      %771 = vmatprep.subr.mxu0 0.0
      %772 = vmatpush1.msra.mxu0 0.0
      %773 = vmatprep.subr.mxu0 0.0
      %774 = vmatpush1.msra.mxu0 0.0
      %775 = vmatprep.subr.mxu0 0.0
      %776 = vmatpush1.msra.mxu0 0.0
      %777 = vmatprep.subr.mxu0 0.0
      %778 = vmatpush1.msra.mxu0 0.0
      %779 = vmatprep.subr.mxu0 0.0
      %780 = vmatpush1.msra.mxu0 0.0
      %781 = vmatprep.subr.mxu0 0.0
      %782 = vmatpush1.msra.mxu0 0.0
      %783 = vmatprep.subr.mxu0 0.0
      %784 = vmatpush1.msra.mxu0 0.0
      %785 = vmatprep.subr.mxu0 0.0
      %786 = vmatpush1.msra.mxu0 0.0
      %787 = vmatprep.subr.mxu0 0.0
      %788 = vmatpush1.msra.mxu0 0.0
      %789 = vmatprep.subr.mxu0 0.0
      %790 = vmatpush1.msra.mxu0 0.0
      %791 = vmatprep.subr.mxu0 0.0
      %792 = vmatpush1.msra.mxu0 0.0
      %793 = vmatprep.subr.mxu0 0.0
      %794 = vmatpush1.msra.mxu0 0.0
      %795 = vmatprep.subr.mxu0 0.0
      %796 = vmatpush1.msra.mxu0 0.0
      %797 = vmatprep.subr.mxu0 0.0
      %798 = vmatpush1.msra.mxu0 0.0
      %799 = vmatprep.subr.mxu0 0.0
      %800 = vmatpush1.msra.mxu0 0.0
      %801 = vmatprep.subr.mxu0 0.0
      %802 = vmatpush1.msra.mxu0 0.0
      %803 = vmatprep.subr.mxu0 0.0
      %804 = vmatpush1.msra.mxu0 0.0
      %805 = vmatprep.subr.mxu0 0.0
      %806 = vmatpush1.msra.mxu0 0.0
      %807 = vmatprep.subr.mxu0 0.0
      %808 = vmatpush1.msra.mxu0 0.0
      %809 = vmatprep.subr.mxu0 0.0
      %810 = vmatpush1.msra.mxu0 0.0
      %811 = vmatprep.subr.mxu0 0.0
      %812 = vmatpush1.msra.mxu0 0.0
      %813 = vmatprep.subr.mxu0 0.0
      %814 = vmatpush1.msra.mxu0 0.0
      %815 = vmatprep.subr.mxu0 0.0
      %816 = vmatpush1.msra.mxu0 0.0
      %817 = vmatprep.mubr.f32.mxu0 0.0
      %818 = vmatmul.mubr.f32.gmra.mrb[0].mxu0 %v747
      %v819 = vpop.f32.mrb[0].mxu0
      %v820 = vadd.f32 0.0, %v819
      %v821 = vpop.f32.mrb[0].mxu0
      %822 = vdwg.mxu0
      %823 = vrot.lane.b32.xlu0 %v490, 120
      %v824 = vpop.permute.xlu0 %823
      %825 = vrot.lane.b32.xlu0 %v571, 120
      %v826 = vpop.permute.xlu0 %825
      %v827 = vsel %vm655, %v824, 0
      %v829 = vsel %vm655, %v826, 0
      %831 = vmatprep.subr.mxu0 0.0
      %832 = vmatpush1.xpose.msra.mxu0 %v829
      %833 = vmatprep.subr.mxu0 0.0
      %834 = vmatpush1.xpose.msra.mxu0 0.0
      %835 = vmatprep.subr.mxu0 0.0
      %836 = vmatpush1.xpose.msra.mxu0 0.0
      %837 = vmatprep.subr.mxu0 0.0
      %838 = vmatpush1.xpose.msra.mxu0 0.0
      %839 = vmatprep.subr.mxu0 0.0
      %840 = vmatpush1.xpose.msra.mxu0 0.0
      %841 = vmatprep.subr.mxu0 0.0
      %842 = vmatpush1.xpose.msra.mxu0 0.0
      %843 = vmatprep.subr.mxu0 0.0
      %844 = vmatpush1.xpose.msra.mxu0 0.0
      %845 = vmatprep.subr.mxu0 0.0
      %846 = vmatpush1.xpose.msra.mxu0 0.0
      %847 = vmatprep.subr.mxu0 0.0
      %848 = vmatpush1.xpose.msra.mxu0 0.0
      %849 = vmatprep.subr.mxu0 0.0
      %850 = vmatpush1.xpose.msra.mxu0 0.0
      %851 = vmatprep.subr.mxu0 0.0
      %852 = vmatpush1.xpose.msra.mxu0 0.0
      %853 = vmatprep.subr.mxu0 0.0
      %854 = vmatpush1.xpose.msra.mxu0 0.0
      %855 = vmatprep.subr.mxu0 0.0
      %856 = vmatpush1.xpose.msra.mxu0 0.0
      %857 = vmatprep.subr.mxu0 0.0
      %858 = vmatpush1.xpose.msra.mxu0 0.0
      %859 = vmatprep.subr.mxu0 0.0
      %860 = vmatpush1.xpose.msra.mxu0 0.0
      %861 = vmatprep.subr.mxu0 0.0
      %862 = vmatpush1.xpose.msra.mxu0 0.0
      %863 = vmatprep.subr.mxu0 0.0
      %864 = vmatpush1.xpose.msra.mxu0 0.0
      %865 = vmatprep.subr.mxu0 0.0
      %866 = vmatpush1.xpose.msra.mxu0 0.0
      %867 = vmatprep.subr.mxu0 0.0
      %868 = vmatpush1.xpose.msra.mxu0 0.0
      %869 = vmatprep.subr.mxu0 0.0
      %870 = vmatpush1.xpose.msra.mxu0 0.0
      %871 = vmatprep.subr.mxu0 0.0
      %872 = vmatpush1.xpose.msra.mxu0 0.0
      %873 = vmatprep.subr.mxu0 0.0
      %874 = vmatpush1.xpose.msra.mxu0 0.0
      %875 = vmatprep.subr.mxu0 0.0
      %876 = vmatpush1.xpose.msra.mxu0 0.0
      %877 = vmatprep.subr.mxu0 0.0
      %878 = vmatpush1.xpose.msra.mxu0 0.0
      %879 = vmatprep.subr.mxu0 0.0
      %880 = vmatpush1.xpose.msra.mxu0 0.0
      %881 = vmatprep.subr.mxu0 0.0
      %882 = vmatpush1.xpose.msra.mxu0 0.0
      %883 = vmatprep.subr.mxu0 0.0
      %884 = vmatpush1.xpose.msra.mxu0 0.0
      %885 = vmatprep.subr.mxu0 0.0
      %886 = vmatpush1.xpose.msra.mxu0 0.0
      %887 = vmatprep.subr.mxu0 0.0
      %888 = vmatpush1.xpose.msra.mxu0 0.0
      %889 = vmatprep.subr.mxu0 0.0
      %890 = vmatpush1.xpose.msra.mxu0 0.0
      %891 = vmatprep.subr.mxu0 0.0
      %892 = vmatpush1.xpose.msra.mxu0 0.0
      %893 = vmatprep.subr.mxu0 0.0
      %894 = vmatpush1.xpose.msra.mxu0 0.0
      %895 = vmatprep.mubr.f32.mxu0 0.0
      %896 = vmatmul.mubr.f32.gmra.mrb[0].mxu0 %v827
      %v897 = vpop.f32.mrb[0].mxu0
      %v898 = vadd.f32 0.0, %v897
      %v899 = vpop.f32.mrb[0].mxu0
      %900 = vdwg.mxu0
      %v901 = vmul.f32 %v898, 0.35355338
      %v902 = vsel %vm733, %v901, -inf
      %903 = vmax.xlane.f32.xlu0 %v902
      %v904 = vpop.xlane.xlu0 %903
      %v905 = vsub.f32 %v901, %v904
      %v906 = vmul.f32 %v905, 1.442695
      %v907 = vpow.pop %v906
      %v908 = vsel %vm733, %v907, 0.0
      %909 = vadd.xlane.f32.xlu0 %v908
      %v910 = vpop.xlane.xlu0 %909
      %v911 = vrcp.pop %v910
      %v912 = vmul.f32 %v907, %v911
      %913 = vrot.lane.b32.xlu0 %v652, 120
      %v914 = vpop.permute.xlu0 %913
      %v916 = vsel %vm745, %v912, 0
      %v918 = vsel %vm749, %v914, 0
      %920 = vmatprep.subr.mxu0 0.0
      %921 = vmatpush1.msra.mxu0 %v918
      %922 = vmatprep.subr.mxu0 0.0
      %923 = vmatpush1.msra.mxu0 0.0
      %924 = vmatprep.subr.mxu0 0.0
      %925 = vmatpush1.msra.mxu0 0.0
      %926 = vmatprep.subr.mxu0 0.0
      %927 = vmatpush1.msra.mxu0 0.0
      %928 = vmatprep.subr.mxu0 0.0
      %929 = vmatpush1.msra.mxu0 0.0
      %930 = vmatprep.subr.mxu0 0.0
      %931 = vmatpush1.msra.mxu0 0.0
      %932 = vmatprep.subr.mxu0 0.0
      %933 = vmatpush1.msra.mxu0 0.0
      %934 = vmatprep.subr.mxu0 0.0
      %935 = vmatpush1.msra.mxu0 0.0
      %936 = vmatprep.subr.mxu0 0.0
      %937 = vmatpush1.msra.mxu0 0.0
      %938 = vmatprep.subr.mxu0 0.0
      %939 = vmatpush1.msra.mxu0 0.0
      %940 = vmatprep.subr.mxu0 0.0
      %941 = vmatpush1.msra.mxu0 0.0
      %942 = vmatprep.subr.mxu0 0.0
      %943 = vmatpush1.msra.mxu0 0.0
      %944 = vmatprep.subr.mxu0 0.0
      %945 = vmatpush1.msra.mxu0 0.0
      %946 = vmatprep.subr.mxu0 0.0
      %947 = vmatpush1.msra.mxu0 0.0
      %948 = vmatprep.subr.mxu0 0.0
      %949 = vmatpush1.msra.mxu0 0.0
      %950 = vmatprep.subr.mxu0 0.0
      %951 = vmatpush1.msra.mxu0 0.0
      %952 = vmatprep.subr.mxu0 0.0
      %953 = vmatpush1.msra.mxu0 0.0
      %954 = vmatprep.subr.mxu0 0.0
      %955 = vmatpush1.msra.mxu0 0.0
      %956 = vmatprep.subr.mxu0 0.0
      %957 = vmatpush1.msra.mxu0 0.0
      %958 = vmatprep.subr.mxu0 0.0
      %959 = vmatpush1.msra.mxu0 0.0
      %960 = vmatprep.subr.mxu0 0.0
      %961 = vmatpush1.msra.mxu0 0.0
      %962 = vmatprep.subr.mxu0 0.0
      %963 = vmatpush1.msra.mxu0 0.0
      %964 = vmatprep.subr.mxu0 0.0
      %965 = vmatpush1.msra.mxu0 0.0
      %966 = vmatprep.subr.mxu0 0.0
      %967 = vmatpush1.msra.mxu0 0.0
      %968 = vmatprep.subr.mxu0 0.0
      %969 = vmatpush1.msra.mxu0 0.0
      %970 = vmatprep.subr.mxu0 0.0
      %971 = vmatpush1.msra.mxu0 0.0
      %972 = vmatprep.subr.mxu0 0.0
      %973 = vmatpush1.msra.mxu0 0.0
      %974 = vmatprep.subr.mxu0 0.0
      %975 = vmatpush1.msra.mxu0 0.0
      %976 = vmatprep.subr.mxu0 0.0
      %977 = vmatpush1.msra.mxu0 0.0
      %978 = vmatprep.subr.mxu0 0.0
      %979 = vmatpush1.msra.mxu0 0.0
      %980 = vmatprep.subr.mxu0 0.0
      %981 = vmatpush1.msra.mxu0 0.0
      %982 = vmatprep.subr.mxu0 0.0
      %983 = vmatpush1.msra.mxu0 0.0
      %984 = vmatprep.mubr.f32.mxu0 0.0
      %985 = vmatmul.mubr.f32.gmra.mrb[0].mxu0 %v916
      %v986 = vpop.f32.mrb[0].mxu0
      %v987 = vadd.f32 0.0, %v986
      %v988 = vpop.f32.mrb[0].mxu0
      %989 = vdwg.mxu0
      %990 = vrot.lane.b32.xlu0 %v490, 112
      %v991 = vpop.permute.xlu0 %990
      %992 = vrot.lane.b32.xlu0 %v571, 112
      %v993 = vpop.permute.xlu0 %992
      %v994 = vsel %vm655, %v991, 0
      %v996 = vsel %vm655, %v993, 0
      %998 = vmatprep.subr.mxu0 0.0
      %999 = vmatpush1.xpose.msra.mxu0 %v996
      %1000 = vmatprep.subr.mxu0 0.0
      %1001 = vmatpush1.xpose.msra.mxu0 0.0
      %1002 = vmatprep.subr.mxu0 0.0
      %1003 = vmatpush1.xpose.msra.mxu0 0.0
      %1004 = vmatprep.subr.mxu0 0.0
      %1005 = vmatpush1.xpose.msra.mxu0 0.0
      %1006 = vmatprep.subr.mxu0 0.0
      %1007 = vmatpush1.xpose.msra.mxu0 0.0
      %1008 = vmatprep.subr.mxu0 0.0
      %1009 = vmatpush1.xpose.msra.mxu0 0.0
      %1010 = vmatprep.subr.mxu0 0.0
      %1011 = vmatpush1.xpose.msra.mxu0 0.0
      %1012 = vmatprep.subr.mxu0 0.0
      %1013 = vmatpush1.xpose.msra.mxu0 0.0
      %1014 = vmatprep.subr.mxu0 0.0
      %1015 = vmatpush1.xpose.msra.mxu0 0.0
      %1016 = vmatprep.subr.mxu0 0.0
      %1017 = vmatpush1.xpose.msra.mxu0 0.0
      %1018 = vmatprep.subr.mxu0 0.0
      %1019 = vmatpush1.xpose.msra.mxu0 0.0
      %1020 = vmatprep.subr.mxu0 0.0
      %1021 = vmatpush1.xpose.msra.mxu0 0.0
      %1022 = vmatprep.subr.mxu0 0.0
      %1023 = vmatpush1.xpose.msra.mxu0 0.0
      %1024 = vmatprep.subr.mxu0 0.0
      %1025 = vmatpush1.xpose.msra.mxu0 0.0
      %1026 = vmatprep.subr.mxu0 0.0
      %1027 = vmatpush1.xpose.msra.mxu0 0.0
      %1028 = vmatprep.subr.mxu0 0.0
      %1029 = vmatpush1.xpose.msra.mxu0 0.0
      %1030 = vmatprep.subr.mxu0 0.0
      %1031 = vmatpush1.xpose.msra.mxu0 0.0
      %1032 = vmatprep.subr.mxu0 0.0
      %1033 = vmatpush1.xpose.msra.mxu0 0.0
      %1034 = vmatprep.subr.mxu0 0.0
      %1035 = vmatpush1.xpose.msra.mxu0 0.0
      %1036 = vmatprep.subr.mxu0 0.0
      %1037 = vmatpush1.xpose.msra.mxu0 0.0
      %1038 = vmatprep.subr.mxu0 0.0
      %1039 = vmatpush1.xpose.msra.mxu0 0.0
      %1040 = vmatprep.subr.mxu0 0.0
      %1041 = vmatpush1.xpose.msra.mxu0 0.0
      %1042 = vmatprep.subr.mxu0 0.0
      %1043 = vmatpush1.xpose.msra.mxu0 0.0
      %1044 = vmatprep.subr.mxu0 0.0
      %1045 = vmatpush1.xpose.msra.mxu0 0.0
      %1046 = vmatprep.subr.mxu0 0.0
      %1047 = vmatpush1.xpose.msra.mxu0 0.0
      %1048 = vmatprep.subr.mxu0 0.0
      %1049 = vmatpush1.xpose.msra.mxu0 0.0
      %1050 = vmatprep.subr.mxu0 0.0
      %1051 = vmatpush1.xpose.msra.mxu0 0.0
      %1052 = vmatprep.subr.mxu0 0.0
      %1053 = vmatpush1.xpose.msra.mxu0 0.0
      %1054 = vmatprep.subr.mxu0 0.0
      %1055 = vmatpush1.xpose.msra.mxu0 0.0
      %1056 = vmatprep.subr.mxu0 0.0
      %1057 = vmatpush1.xpose.msra.mxu0 0.0
      %1058 = vmatprep.subr.mxu0 0.0
      %1059 = vmatpush1.xpose.msra.mxu0 0.0
      %1060 = vmatprep.subr.mxu0 0.0
      %1061 = vmatpush1.xpose.msra.mxu0 0.0
      %1062 = vmatprep.mubr.f32.mxu0 0.0
      %1063 = vmatmul.mubr.f32.gmra.mrb[0].mxu0 %v994
      %v1064 = vpop.f32.mrb[0].mxu0
      %v1065 = vadd.f32 0.0, %v1064
      %v1066 = vpop.f32.mrb[0].mxu0
      %1067 = vdwg.mxu0
      %v1068 = vmul.f32 %v1065, 0.35355338
      %v1069 = vsel %vm733, %v1068, -inf
      %1070 = vmax.xlane.f32.xlu0 %v1069
      %v1071 = vpop.xlane.xlu0 %1070
      %v1072 = vsub.f32 %v1068, %v1071
      %v1073 = vmul.f32 %v1072, 1.442695
      %v1074 = vpow.pop %v1073
      %v1075 = vsel %vm733, %v1074, 0.0
      %1076 = vadd.xlane.f32.xlu0 %v1075
      %v1077 = vpop.xlane.xlu0 %1076
      %v1078 = vrcp.pop %v1077
      %v1079 = vmul.f32 %v1074, %v1078
      %1080 = vrot.lane.b32.xlu0 %v652, 112
      %v1081 = vpop.permute.xlu0 %1080
      %v1083 = vsel %vm745, %v1079, 0
      %v1085 = vsel %vm749, %v1081, 0
      %1087 = vmatprep.subr.mxu0 0.0
      %1088 = vmatpush1.msra.mxu0 %v1085
      %1089 = vmatprep.subr.mxu0 0.0
      %1090 = vmatpush1.msra.mxu0 0.0
      %1091 = vmatprep.subr.mxu0 0.0
      %1092 = vmatpush1.msra.mxu0 0.0
      %1093 = vmatprep.subr.mxu0 0.0
      %1094 = vmatpush1.msra.mxu0 0.0
      %1095 = vmatprep.subr.mxu0 0.0
      %1096 = vmatpush1.msra.mxu0 0.0
      %1097 = vmatprep.subr.mxu0 0.0
      %1098 = vmatpush1.msra.mxu0 0.0
      %1099 = vmatprep.subr.mxu0 0.0
      %1100 = vmatpush1.msra.mxu0 0.0
      %1101 = vmatprep.subr.mxu0 0.0
      %1102 = vmatpush1.msra.mxu0 0.0
      %1103 = vmatprep.subr.mxu0 0.0
      %1104 = vmatpush1.msra.mxu0 0.0
      %1105 = vmatprep.subr.mxu0 0.0
      %1106 = vmatpush1.msra.mxu0 0.0
      %1107 = vmatprep.subr.mxu0 0.0
      %1108 = vmatpush1.msra.mxu0 0.0
      %1109 = vmatprep.subr.mxu0 0.0
      %1110 = vmatpush1.msra.mxu0 0.0
      %1111 = vmatprep.subr.mxu0 0.0
      %1112 = vmatpush1.msra.mxu0 0.0
      %1113 = vmatprep.subr.mxu0 0.0
      %1114 = vmatpush1.msra.mxu0 0.0
      %1115 = vmatprep.subr.mxu0 0.0
      %1116 = vmatpush1.msra.mxu0 0.0
      %1117 = vmatprep.subr.mxu0 0.0
      %1118 = vmatpush1.msra.mxu0 0.0
      %1119 = vmatprep.subr.mxu0 0.0
      %1120 = vmatpush1.msra.mxu0 0.0
      %1121 = vmatprep.subr.mxu0 0.0
      %1122 = vmatpush1.msra.mxu0 0.0
      %1123 = vmatprep.subr.mxu0 0.0
      %1124 = vmatpush1.msra.mxu0 0.0
      %1125 = vmatprep.subr.mxu0 0.0
      %1126 = vmatpush1.msra.mxu0 0.0
      %1127 = vmatprep.subr.mxu0 0.0
      %1128 = vmatpush1.msra.mxu0 0.0
      %1129 = vmatprep.subr.mxu0 0.0
      %1130 = vmatpush1.msra.mxu0 0.0
      %1131 = vmatprep.subr.mxu0 0.0
      %1132 = vmatpush1.msra.mxu0 0.0
      %1133 = vmatprep.subr.mxu0 0.0
      %1134 = vmatpush1.msra.mxu0 0.0
      %1135 = vmatprep.subr.mxu0 0.0
      %1136 = vmatpush1.msra.mxu0 0.0
      %1137 = vmatprep.subr.mxu0 0.0
      %1138 = vmatpush1.msra.mxu0 0.0
      %1139 = vmatprep.subr.mxu0 0.0
      %1140 = vmatpush1.msra.mxu0 0.0
      %1141 = vmatprep.subr.mxu0 0.0
      %1142 = vmatpush1.msra.mxu0 0.0
      %1143 = vmatprep.subr.mxu0 0.0
      %1144 = vmatpush1.msra.mxu0 0.0
      %1145 = vmatprep.subr.mxu0 0.0
      %1146 = vmatpush1.msra.mxu0 0.0
      %1147 = vmatprep.subr.mxu0 0.0
      %1148 = vmatpush1.msra.mxu0 0.0
      %1149 = vmatprep.subr.mxu0 0.0
      %1150 = vmatpush1.msra.mxu0 0.0
      %1151 = vmatprep.mubr.f32.mxu0 0.0
      %1152 = vmatmul.mubr.f32.gmra.mrb[0].mxu0 %v1083
      %v1153 = vpop.f32.mrb[0].mxu0
      %v1154 = vadd.f32 0.0, %v1153
      %v1155 = vpop.f32.mrb[0].mxu0
      %1156 = vdwg.mxu0
      %1157 = vrot.lane.b32.xlu0 %v490, 104
      %v1158 = vpop.permute.xlu0 %1157
      %1159 = vrot.lane.b32.xlu0 %v571, 104
      %v1160 = vpop.permute.xlu0 %1159
      %v1161 = vsel %vm655, %v1158, 0
      %v1163 = vsel %vm655, %v1160, 0
      %1165 = vmatprep.subr.mxu0 0.0
      %1166 = vmatpush1.xpose.msra.mxu0 %v1163
      %1167 = vmatprep.subr.mxu0 0.0
      %1168 = vmatpush1.xpose.msra.mxu0 0.0
      %1169 = vmatprep.subr.mxu0 0.0
      %1170 = vmatpush1.xpose.msra.mxu0 0.0
      %1171 = vmatprep.subr.mxu0 0.0
      %1172 = vmatpush1.xpose.msra.mxu0 0.0
      %1173 = vmatprep.subr.mxu0 0.0
      %1174 = vmatpush1.xpose.msra.mxu0 0.0
      %1175 = vmatprep.subr.mxu0 0.0
      %1176 = vmatpush1.xpose.msra.mxu0 0.0
      %1177 = vmatprep.subr.mxu0 0.0
      %1178 = vmatpush1.xpose.msra.mxu0 0.0
      %1179 = vmatprep.subr.mxu0 0.0
      %1180 = vmatpush1.xpose.msra.mxu0 0.0
      %1181 = vmatprep.subr.mxu0 0.0
      %1182 = vmatpush1.xpose.msra.mxu0 0.0
      %1183 = vmatprep.subr.mxu0 0.0
      %1184 = vmatpush1.xpose.msra.mxu0 0.0
      %1185 = vmatprep.subr.mxu0 0.0
      %1186 = vmatpush1.xpose.msra.mxu0 0.0
      %1187 = vmatprep.subr.mxu0 0.0
      %1188 = vmatpush1.xpose.msra.mxu0 0.0
      %1189 = vmatprep.subr.mxu0 0.0
      %1190 = vmatpush1.xpose.msra.mxu0 0.0
      %1191 = vmatprep.subr.mxu0 0.0
      %1192 = vmatpush1.xpose.msra.mxu0 0.0
      %1193 = vmatprep.subr.mxu0 0.0
      %1194 = vmatpush1.xpose.msra.mxu0 0.0
      %1195 = vmatprep.subr.mxu0 0.0
      %1196 = vmatpush1.xpose.msra.mxu0 0.0
      %1197 = vmatprep.subr.mxu0 0.0
      %1198 = vmatpush1.xpose.msra.mxu0 0.0
      %1199 = vmatprep.subr.mxu0 0.0
      %1200 = vmatpush1.xpose.msra.mxu0 0.0
      %1201 = vmatprep.subr.mxu0 0.0
      %1202 = vmatpush1.xpose.msra.mxu0 0.0
      %1203 = vmatprep.subr.mxu0 0.0
      %1204 = vmatpush1.xpose.msra.mxu0 0.0
      %1205 = vmatprep.subr.mxu0 0.0
      %1206 = vmatpush1.xpose.msra.mxu0 0.0
      %1207 = vmatprep.subr.mxu0 0.0
      %1208 = vmatpush1.xpose.msra.mxu0 0.0
      %1209 = vmatprep.subr.mxu0 0.0
      %1210 = vmatpush1.xpose.msra.mxu0 0.0
      %1211 = vmatprep.subr.mxu0 0.0
      %1212 = vmatpush1.xpose.msra.mxu0 0.0
      %1213 = vmatprep.subr.mxu0 0.0
      %1214 = vmatpush1.xpose.msra.mxu0 0.0
      %1215 = vmatprep.subr.mxu0 0.0
      %1216 = vmatpush1.xpose.msra.mxu0 0.0
      %1217 = vmatprep.subr.mxu0 0.0
      %1218 = vmatpush1.xpose.msra.mxu0 0.0
      %1219 = vmatprep.subr.mxu0 0.0
      %1220 = vmatpush1.xpose.msra.mxu0 0.0
      %1221 = vmatprep.subr.mxu0 0.0
      %1222 = vmatpush1.xpose.msra.mxu0 0.0
      %1223 = vmatprep.subr.mxu0 0.0
      %1224 = vmatpush1.xpose.msra.mxu0 0.0
      %1225 = vmatprep.subr.mxu0 0.0
      %1226 = vmatpush1.xpose.msra.mxu0 0.0
      %1227 = vmatprep.subr.mxu0 0.0
      %1228 = vmatpush1.xpose.msra.mxu0 0.0
      %1229 = vmatprep.mubr.f32.mxu0 0.0
      %1230 = vmatmul.mubr.f32.gmra.mrb[0].mxu0 %v1161
      %v1231 = vpop.f32.mrb[0].mxu0
      %v1232 = vadd.f32 0.0, %v1231
      %v1233 = vpop.f32.mrb[0].mxu0
      %1234 = vdwg.mxu0
      %v1235 = vmul.f32 %v1232, 0.35355338
      %v1236 = vsel %vm733, %v1235, -inf
      %1237 = vmax.xlane.f32.xlu0 %v1236
      %v1238 = vpop.xlane.xlu0 %1237
      %v1239 = vsub.f32 %v1235, %v1238
      %v1240 = vmul.f32 %v1239, 1.442695
      %v1241 = vpow.pop %v1240
      %v1242 = vsel %vm733, %v1241, 0.0
      %1243 = vadd.xlane.f32.xlu0 %v1242
      %v1244 = vpop.xlane.xlu0 %1243
      %v1245 = vrcp.pop %v1244
      %v1246 = vmul.f32 %v1241, %v1245
      %1247 = vrot.lane.b32.xlu0 %v652, 104
      %v1248 = vpop.permute.xlu0 %1247
      %v1250 = vsel %vm745, %v1246, 0
      %v1252 = vsel %vm749, %v1248, 0
      %1254 = vmatprep.subr.mxu0 0.0
      %1255 = vmatpush1.msra.mxu0 %v1252
      %1256 = vmatprep.subr.mxu0 0.0
      %1257 = vmatpush1.msra.mxu0 0.0
      %1258 = vmatprep.subr.mxu0 0.0
      %1259 = vmatpush1.msra.mxu0 0.0
      %1260 = vmatprep.subr.mxu0 0.0
      %1261 = vmatpush1.msra.mxu0 0.0
      %1262 = vmatprep.subr.mxu0 0.0
      %1263 = vmatpush1.msra.mxu0 0.0
      %1264 = vmatprep.subr.mxu0 0.0
      %1265 = vmatpush1.msra.mxu0 0.0
      %1266 = vmatprep.subr.mxu0 0.0
      %1267 = vmatpush1.msra.mxu0 0.0
      %1268 = vmatprep.subr.mxu0 0.0
      %1269 = vmatpush1.msra.mxu0 0.0
      %1270 = vmatprep.subr.mxu0 0.0
      %1271 = vmatpush1.msra.mxu0 0.0
      %1272 = vmatprep.subr.mxu0 0.0
      %1273 = vmatpush1.msra.mxu0 0.0
      %1274 = vmatprep.subr.mxu0 0.0
      %1275 = vmatpush1.msra.mxu0 0.0
      %1276 = vmatprep.subr.mxu0 0.0
      %1277 = vmatpush1.msra.mxu0 0.0
      %1278 = vmatprep.subr.mxu0 0.0
      %1279 = vmatpush1.msra.mxu0 0.0
      %1280 = vmatprep.subr.mxu0 0.0
      %1281 = vmatpush1.msra.mxu0 0.0
      %1282 = vmatprep.subr.mxu0 0.0
      %1283 = vmatpush1.msra.mxu0 0.0
      %1284 = vmatprep.subr.mxu0 0.0
      %1285 = vmatpush1.msra.mxu0 0.0
      %1286 = vmatprep.subr.mxu0 0.0
      %1287 = vmatpush1.msra.mxu0 0.0
      %1288 = vmatprep.subr.mxu0 0.0
      %1289 = vmatpush1.msra.mxu0 0.0
      %1290 = vmatprep.subr.mxu0 0.0
      %1291 = vmatpush1.msra.mxu0 0.0
      %1292 = vmatprep.subr.mxu0 0.0
      %1293 = vmatpush1.msra.mxu0 0.0
      %1294 = vmatprep.subr.mxu0 0.0
      %1295 = vmatpush1.msra.mxu0 0.0
      %1296 = vmatprep.subr.mxu0 0.0
      %1297 = vmatpush1.msra.mxu0 0.0
      %1298 = vmatprep.subr.mxu0 0.0
      %1299 = vmatpush1.msra.mxu0 0.0
      %1300 = vmatprep.subr.mxu0 0.0
      %1301 = vmatpush1.msra.mxu0 0.0
      %1302 = vmatprep.subr.mxu0 0.0
      %1303 = vmatpush1.msra.mxu0 0.0
      %1304 = vmatprep.subr.mxu0 0.0
      %1305 = vmatpush1.msra.mxu0 0.0
      %1306 = vmatprep.subr.mxu0 0.0
      %1307 = vmatpush1.msra.mxu0 0.0
      %1308 = vmatprep.subr.mxu0 0.0
      %1309 = vmatpush1.msra.mxu0 0.0
      %1310 = vmatprep.subr.mxu0 0.0
      %1311 = vmatpush1.msra.mxu0 0.0
      %1312 = vmatprep.subr.mxu0 0.0
      %1313 = vmatpush1.msra.mxu0 0.0
      %1314 = vmatprep.subr.mxu0 0.0
      %1315 = vmatpush1.msra.mxu0 0.0
      %1316 = vmatprep.subr.mxu0 0.0
      %1317 = vmatpush1.msra.mxu0 0.0
      %1318 = vmatprep.mubr.f32.mxu0 0.0
      %1319 = vmatmul.mubr.f32.gmra.mrb[0].mxu0 %v1250
      %v1320 = vpop.f32.mrb[0].mxu0
      %v1321 = vadd.f32 0.0, %v1320
      %v1322 = vpop.f32.mrb[0].mxu0
      %1323 = vdwg.mxu0
      %1325 = vrot.lane.b32.xlu0 %v987, 8
      %v1326 = vpop.permute.xlu0 %1325
      %1329 = vrot.lane.b32.xlu0 %v1154, 16
      %v1330 = vpop.permute.xlu0 %1329
      %1333 = vrot.lane.b32.xlu0 %v1321, 24
      %v1334 = vpop.permute.xlu0 %1333
      %v1336 = vsel %vm655, %v820, %v1326
      %vm1337 = vcmask 130048
      %v1338 = vsel %vm1337, %v1336, %v1330
      %vm1339 = vcmask 195584
      %v1340 = vsel %vm1339, %v1338, %v1334
      %vm1341 = vcmask 256000
      %1342 = vst.msk [vmem:[%s406] sm:$0x7] %vm1341, %v1340
      %p1343 = scmp.lt.s32.totalorder %s23, 1
      %s1344 = scalar_select %p1343, %s23, 1
      %p1345 = scmp.lt.s32.totalorder %s22, 0
      %s1346 = scalar_select %p1345, %s22, 0
      %s1347 = sadd.s32 %s1346, %s1344
      %s1348 = smul.addr %s1347, 4
      %s1349 = scalar_lea.vmem %s7, %s1348
      // Predicated region
      $region49: #{anti_layer_segment.7} parent=47 // pred_check
        %p1350 = pneg %p234
      $region50: #{anti_layer_segment.7} parent=47 // pred_check_branch
        %1352 = sbr.rel (%p1350) target = $region52
      $region51: #{anti_layer_segment.7} parent=47 // pred_region
        _
      $region52: #{anti_layer_segment.7} parent=47 // pred_fallthru
        _
    $region48: #{anti_layer_segment.7} parent=5 // pred_fallthru
      _
    %p1353 = scmp.le.s32.totalorder 2, %s13
    // Predicated region
    $region53: #{anti_layer_segment.7} parent=5 // pred_check
      %p1354 = pneg %p1353
    $region54: #{anti_layer_segment.7} parent=5 // pred_check_branch
      %1356 = sbr.rel (%p1354) target = $region56
    $region55: #{anti_layer_segment.7} parent=5 // pred_region
      %s1357 = ssub.s32 %s13, 2
      // Predicated region
      $region57: #{anti_layer_segment.7} parent=55 // pred_check
        %p1358 = pneg %p240
      $region58: #{anti_layer_segment.7} parent=55 // pred_check_branch
        %1360 = sbr.rel (%p1358) target = $region60
      $region59: #{anti_layer_segment.7} parent=55 // pred_region
        %p1361 = scmp.lt.s32.totalorder %s25, 1
        %s1362 = scalar_select %p1361, %s25, 1
        %p1363 = scmp.lt.s32.totalorder %s24, 0
        %s1364 = scalar_select %p1363, %s24, 0
        %s1365 = sadd.s32 %s1364, %s1362
        %s1366 = smul.addr %s1365, 4
        %s1367 = scalar_lea.vmem %s7, %s1366
      $region60: #{anti_layer_segment.7} parent=55 // pred_fallthru
        _
    $region56: #{anti_layer_segment.7} parent=5 // pred_fallthru
      _
  $region6: #{anti_layer_segment.7} parent=0 // loop_footer
    %s17 = sadd.s32 1, %s13
  $region7: #{anti_layer_segment.7} parent=0 // loop_footer_branch
    %12 = sbr.rel target = $region3
  $region8: #{anti_layer_segment.7} parent=0 // loop_exit
    _

// kernel: anti_layer_segment.8
$region0: #{anti_layer_segment.8}
  #allocation0 [shape = 'u32[]', space=smem, size = 0x4, offset = 0x4, fixed_abs, tag = 'smem constant byte address 0x4 - core index']
  #allocation1 [shape = 'u32[144,128]{1,0:T(1,128)}', space=vmem, size = 0x12000, scoped, tag = 'internal scratch']
  %s0 = inlined_call_operand.vmem [shape: f32[2,17,32], index: 0, kind: input, shape index: {}]
  %s1 = inlined_call_operand.vmem [shape: f32[2,17,32], index: 1, kind: input, shape index: {}]
  %s2 = inlined_call_operand.vmem [shape: f32[32,32], index: 2, kind: input, shape index: {}]
  %s3 = inlined_call_operand.vmem [shape: f32[1,32], index: 3, kind: input, shape index: {}]
  %s4 = inlined_call_operand.vmem [shape: f32[1,32], index: 4, kind: input, shape index: {}]
  %s5 = inlined_call_operand.vmem [shape: f32[1,32], index: 5, kind: input, shape index: {}]
  %s6 = inlined_call_operand.vmem [shape: f32[2,17,32], index: 6, kind: output, shape index: {}]
  %s7 = sld [smem:[#allocation0]]
  $region57: #{anti_layer_segment.8} parent=0
    _
  %s9 = ssub.s32 1, %s7
  %s10 = scalar_select 0, %s9, %s7
  loop: start=0, step=1, limit=4
  $region2: #{anti_layer_segment.8} parent=0 // loop_pre_header
    _
  $region3: #{anti_layer_segment.8} parent=0 // loop_header
    %s12 = sphi 0, %s16
    %p13 = scmp.ge.s32.totalorder %s12, 4
    %s22 = sphi 0, %s24
    %s25 = sphi 0, %s22
    %s26 = sphi 0, %s25
    %s42 = sphi 0, %s26
    %s48 = sphi 0, %s50
    %s51 = sphi 0, %s48
    %s52 = sphi 0, %s51
    %s68 = sphi 0, %s52
    %s72 = sphi 0, %s72
    %s74 = sphi 0, %s72
    %s75 = sphi 0, %s74
    %s89 = sphi 0, %s75
    %s93 = sphi 0, %s93
    %s95 = sphi 0, %s93
    %s96 = sphi 0, %s95
    %s110 = sphi 0, %s96
    %s114 = sphi 0, %s114
    %s116 = sphi 0, %s114
    %s117 = sphi 0, %s116
    %s131 = sphi 0, %s117
    %s135 = sphi 0, %s135
    %s137 = sphi 0, %s135
    %s138 = sphi 0, %s137
    %s152 = sphi 0, %s138
    %s158 = sphi 0, %s160
    %s161 = sphi 0, %s158
    %s162 = sphi 0, %s161
    %s178 = sphi 0, %s162
  $region4: #{anti_layer_segment.8} parent=0 // loop_header_branch
    %15 = sbr.rel (%p13) target = $region8
  $region5: #{anti_layer_segment.8} parent=0 // loop_body
    %s17 = ssub.s32 %s12, 1
    %s18 = ssub.s32 %s12, 2
    %s19 = sadd.s32 %s12, 1
    %s20 = ssub.s32 %s12, %s19
    %p21 = scmp.eq.s32.totalorder %s20, 0
    %s23 = sadd.s32 %s22, 1
    %s24 = scalar_select %p21, %s22, %s23
    %p27 = pneg %p21
    %p28 = scmp.eq.s32.totalorder %s12, 1
    %p29 = por %p27, %p28
    %p30 = scmp.ne.s32.totalorder %s22, %s25
    %p31 = scmp.eq.s32.totalorder %s12, 0
    %p32 = por %p30, %p31
    %p33 = scmp.ne.s32.totalorder %s22, %s25
    %p34 = scmp.eq.s32.totalorder %s17, 1
    %p35 = por %p33, %p34
    %p36 = scmp.ne.s32.totalorder %s25, %s26
    %p37 = scmp.eq.s32.totalorder %s17, 0
    %p38 = por %p36, %p37
    %p39 = scmp.ne.s32.totalorder %s25, %s26
    %p40 = scmp.eq.s32.totalorder %s18, 1
    %p41 = por %p39, %p40
    %p43 = scmp.ne.s32.totalorder %s26, %s42
    %p44 = scmp.eq.s32.totalorder %s18, 0
    %p45 = por %p43, %p44
    %s46 = ssub.s32 %s12, %s19
    %p47 = scmp.eq.s32.totalorder %s46, 0
    %s49 = sadd.s32 %s48, 1
    %s50 = scalar_select %p47, %s48, %s49
    %p53 = pneg %p47
    %p54 = scmp.eq.s32.totalorder %s12, 1
    %p55 = por %p53, %p54
    %p56 = scmp.ne.s32.totalorder %s48, %s51
    %p57 = scmp.eq.s32.totalorder %s12, 0
    %p58 = por %p56, %p57
    %p59 = scmp.ne.s32.totalorder %s48, %s51
    %p60 = scmp.eq.s32.totalorder %s17, 1
    %p61 = por %p59, %p60
    %p62 = scmp.ne.s32.totalorder %s51, %s52
    %p63 = scmp.eq.s32.totalorder %s17, 0
    %p64 = por %p62, %p63
    %p65 = scmp.ne.s32.totalorder %s51, %s52
    %p66 = scmp.eq.s32.totalorder %s18, 1
    %p67 = por %p65, %p66
    %p69 = scmp.ne.s32.totalorder %s52, %s68
    %p70 = scmp.eq.s32.totalorder %s18, 0
    %p71 = por %p69, %p70
    %s73 = sadd.s32 %s72, 1
    %p76 = scmp.eq.s32.totalorder %s12, 1
    %p77 = scmp.ne.s32.totalorder %s72, %s74
    %p78 = scmp.eq.s32.totalorder %s12, 0
    %p79 = por %p77, %p78
    %p80 = scmp.ne.s32.totalorder %s72, %s74
    %p81 = scmp.eq.s32.totalorder %s17, 1
    %p82 = por %p80, %p81
    %p83 = scmp.ne.s32.totalorder %s74, %s75
    %p84 = scmp.eq.s32.totalorder %s17, 0
    %p85 = por %p83, %p84
    %p86 = scmp.ne.s32.totalorder %s74, %s75
    %p87 = scmp.eq.s32.totalorder %s18, 1
    %p88 = por %p86, %p87
    %p90 = scmp.ne.s32.totalorder %s75, %s89
    %p91 = scmp.eq.s32.totalorder %s18, 0
    %p92 = por %p90, %p91
    %s94 = sadd.s32 %s93, 1
    %p97 = scmp.eq.s32.totalorder %s12, 1
    %p98 = scmp.ne.s32.totalorder %s93, %s95
    %p99 = scmp.eq.s32.totalorder %s12, 0
    %p100 = por %p98, %p99
    %p101 = scmp.ne.s32.totalorder %s93, %s95
    %p102 = scmp.eq.s32.totalorder %s17, 1
    %p103 = por %p101, %p102
    %p104 = scmp.ne.s32.totalorder %s95, %s96
    %p105 = scmp.eq.s32.totalorder %s17, 0
    %p106 = por %p104, %p105
    %p107 = scmp.ne.s32.totalorder %s95, %s96
    %p108 = scmp.eq.s32.totalorder %s18, 1
    %p109 = por %p107, %p108
    %p111 = scmp.ne.s32.totalorder %s96, %s110
    %p112 = scmp.eq.s32.totalorder %s18, 0
    %p113 = por %p111, %p112
    %s115 = sadd.s32 %s114, 1
    %p118 = scmp.eq.s32.totalorder %s12, 1
    %p119 = scmp.ne.s32.totalorder %s114, %s116
    %p120 = scmp.eq.s32.totalorder %s12, 0
    %p121 = por %p119, %p120
    %p122 = scmp.ne.s32.totalorder %s114, %s116
    %p123 = scmp.eq.s32.totalorder %s17, 1
    %p124 = por %p122, %p123
    %p125 = scmp.ne.s32.totalorder %s116, %s117
    %p126 = scmp.eq.s32.totalorder %s17, 0
    %p127 = por %p125, %p126
    %p128 = scmp.ne.s32.totalorder %s116, %s117
    %p129 = scmp.eq.s32.totalorder %s18, 1
    %p130 = por %p128, %p129
    %p132 = scmp.ne.s32.totalorder %s117, %s131
    %p133 = scmp.eq.s32.totalorder %s18, 0
    %p134 = por %p132, %p133
    %s136 = sadd.s32 %s135, 1
    %p139 = scmp.eq.s32.totalorder %s12, 1
    %p140 = scmp.ne.s32.totalorder %s135, %s137
    %p141 = scmp.eq.s32.totalorder %s12, 0
    %p142 = por %p140, %p141
    %p143 = scmp.ne.s32.totalorder %s135, %s137
    %p144 = scmp.eq.s32.totalorder %s17, 1
    %p145 = por %p143, %p144
    %p146 = scmp.ne.s32.totalorder %s137, %s138
    %p147 = scmp.eq.s32.totalorder %s17, 0
    %p148 = por %p146, %p147
    %p149 = scmp.ne.s32.totalorder %s137, %s138
    %p150 = scmp.eq.s32.totalorder %s18, 1
    %p151 = por %p149, %p150
    %p153 = scmp.ne.s32.totalorder %s138, %s152
    %p154 = scmp.eq.s32.totalorder %s18, 0
    %p155 = por %p153, %p154
    %s156 = ssub.s32 %s12, %s19
    %p157 = scmp.eq.s32.totalorder %s156, 0
    %s159 = sadd.s32 %s158, 1
    %s160 = scalar_select %p157, %s158, %s159
    %p163 = pneg %p157
    %p164 = scmp.eq.s32.totalorder %s12, 1
    %p165 = por %p163, %p164
    %p166 = scmp.ne.s32.totalorder %s158, %s161
    %p167 = scmp.eq.s32.totalorder %s12, 0
    %p168 = por %p166, %p167
    %p169 = scmp.ne.s32.totalorder %s158, %s161
    %p170 = scmp.eq.s32.totalorder %s17, 1
    %p171 = por %p169, %p170
    %p172 = scmp.ne.s32.totalorder %s161, %s162
    %p173 = scmp.eq.s32.totalorder %s17, 0
    %p174 = por %p172, %p173
    %p175 = scmp.ne.s32.totalorder %s161, %s162
    %p176 = scmp.eq.s32.totalorder %s18, 1
    %p177 = por %p175, %p176
    %p179 = scmp.ne.s32.totalorder %s162, %s178
    %p180 = scmp.eq.s32.totalorder %s18, 0
    %p181 = por %p179, %p180
    %p182 = scmp.le.s32.totalorder 1, %s12
    %p183 = scmp.lt.s32.totalorder %s12, 3
    %p184 = pnand %p182, %p183
    %p185 = pneg %p184
    // Predicated region
    $region9: #{anti_layer_segment.8} parent=5 // pred_check
      _
    $region10: #{anti_layer_segment.8} parent=5 // pred_check_branch
      %187 = sbr.rel (%p184) target = $region12
    $region11: #{anti_layer_segment.8} parent=5 // pred_region
      %s188 = ssub.s32 %s12, 1
      // Predicated region
      $region13: #{anti_layer_segment.8} parent=11 // pred_check
        %p189 = pneg %p85
      $region14: #{anti_layer_segment.8} parent=11 // pred_check_branch
        %191 = sbr.rel (%p189) target = $region16
      $region15: #{anti_layer_segment.8} parent=11 // pred_region
        _
      $region16: #{anti_layer_segment.8} parent=11 // pred_fallthru
        _
      // Predicated region
      $region17: #{anti_layer_segment.8} parent=11 // pred_check
        %p192 = pneg %p106
      $region18: #{anti_layer_segment.8} parent=11 // pred_check_branch
        %194 = sbr.rel (%p192) target = $region20
      $region19: #{anti_layer_segment.8} parent=11 // pred_region
        _
      $region20: #{anti_layer_segment.8} parent=11 // pred_fallthru
        _
      // Predicated region
      $region21: #{anti_layer_segment.8} parent=11 // pred_check
        %p195 = pneg %p127
      $region22: #{anti_layer_segment.8} parent=11 // pred_check_branch
        %197 = sbr.rel (%p195) target = $region24
      $region23: #{anti_layer_segment.8} parent=11 // pred_region
        _
      $region24: #{anti_layer_segment.8} parent=11 // pred_fallthru
        _
      // Predicated region
      $region25: #{anti_layer_segment.8} parent=11 // pred_check
        %p198 = pneg %p148
      $region26: #{anti_layer_segment.8} parent=11 // pred_check_branch
        %200 = sbr.rel (%p198) target = $region28
      $region27: #{anti_layer_segment.8} parent=11 // pred_region
        _
      $region28: #{anti_layer_segment.8} parent=11 // pred_fallthru
        _
    $region12: #{anti_layer_segment.8} parent=5 // pred_fallthru
      _
    %p201 = scmp.lt.s32.totalorder %s12, 2
    // Predicated region
    $region29: #{anti_layer_segment.8} parent=5 // pred_check
      %p202 = pneg %p201
    $region30: #{anti_layer_segment.8} parent=5 // pred_check_branch
      %204 = sbr.rel (%p202) target = $region32
    $region31: #{anti_layer_segment.8} parent=5 // pred_region
      // Predicated region
      $region33: #{anti_layer_segment.8} parent=31 // pred_check
        %p205 = pneg %p32
      $region34: #{anti_layer_segment.8} parent=31 // pred_check_branch
        %207 = sbr.rel (%p205) target = $region36
      $region35: #{anti_layer_segment.8} parent=31 // pred_region
        %p208 = scmp.lt.s32.totalorder %s12, 1
        %s209 = scalar_select %p208, %s12, 1
        %s210 = smul.addr %s209, 3
        %s211 = smul.addr %s210, 8
        %s212 = scalar_lea.vmem %s0, %s211
      $region36: #{anti_layer_segment.8} parent=31 // pred_fallthru
        _
      // Predicated region
      $region37: #{anti_layer_segment.8} parent=31 // pred_check
        %p213 = pneg %p58
      $region38: #{anti_layer_segment.8} parent=31 // pred_check_branch
        %215 = sbr.rel (%p213) target = $region40
      $region39: #{anti_layer_segment.8} parent=31 // pred_region
        %p216 = scmp.lt.s32.totalorder %s12, 1
        %s217 = scalar_select %p216, %s12, 1
        %s218 = smul.addr %s217, 3
        %s219 = smul.addr %s218, 8
        %s220 = scalar_lea.vmem %s1, %s219
      $region40: #{anti_layer_segment.8} parent=31 // pred_fallthru
        _
    $region32: #{anti_layer_segment.8} parent=5 // pred_fallthru
      _
    %p221 = scmp.le.s32.totalorder 1, %s12
    %p222 = scmp.lt.s32.totalorder %s12, 3
    %p223 = pnand %p221, %p222
    %p224 = pneg %p223
    // Predicated region
    $region41: #{anti_layer_segment.8} parent=5 // pred_check
      _
    $region42: #{anti_layer_segment.8} parent=5 // pred_check_branch
      %226 = sbr.rel (%p223) target = $region44
    $region43: #{anti_layer_segment.8} parent=5 // pred_region
      %s227 = ssub.s32 %s12, 1
      %p228 = scmp.lt.s32.totalorder %s17, 1
      %s229 = scalar_select %p228, %s17, 1
      %s230 = smul.addr %s229, 3
      %s231 = smul.addr %s230, 8
      %s232 = scalar_lea.vmem %s0, %s231
      %p233 = pneg %p38
      %p234 = pneg %p35
      %p235 = scmp.lt.s32.totalorder %s17, 1
      %s236 = scalar_select %p235, %s17, 1
      %s237 = smul.addr %s236, 3
      %s238 = smul.addr %s237, 8
      %s239 = scalar_lea.vmem %s1, %s238
      %p240 = pneg %p64
      %p241 = pneg %p61
      %p242 = pneg %p85
      %p243 = pneg %p82
      %p244 = pneg %p106
      %p245 = pneg %p103
      %p246 = pneg %p127
      %p247 = pneg %p124
      %p248 = pneg %p148
      %p249 = pneg %p145
      %p250 = pneg %p174
      %p251 = pneg %p171
      %p252 = scmp.lt.s32.totalorder %s17, 1
      %s253 = scalar_select %p252, %s17, 1
      %s254 = smul.addr %s253, 3
      %s255 = smul.addr %s254, 8
      %s256 = scalar_lea.vmem %s6, %s255
      %p257 = scmp.lt.s32.totalorder %s17, 1
      %s258 = scalar_select %p257, %s17, 1
      %s259 = smul.addr %s258, 3
      %s260 = smul.addr %s259, 8
      %s261 = scalar_lea.vmem %s0, %s260
      %p262 = scmp.lt.s32.totalorder %s17, 1
      %s263 = scalar_select %p262, %s17, 1
      %s264 = smul.addr %s263, 3
      %s265 = smul.addr %s264, 8
      %s266 = scalar_lea.vmem %s1, %s265
      %p267 = scmp.lt.s32.totalorder %s17, 1
      %s268 = scalar_select %p267, %s17, 1
      %s269 = smul.addr %s268, 3
      %s270 = smul.addr %s269, 8
      %s271 = scalar_lea.vmem %s6, %s270
      %v272 = vld [vmem:[%s261] sm:$0xff]
      %v273 = vld [vmem:[%s261 + $0x8] sm:$0xff]
      %v274 = vld [vmem:[%s261 + $0x10] sm:$0x1]
      %v275 = vld [vmem:[%s2] sm:$0xff]
      %v276 = vld [vmem:[%s2 + $0x8] sm:$0xff]
      %v277 = vld [vmem:[%s2 + $0x10] sm:$0xff]
      %v278 = vld [vmem:[%s2 + $0x18] sm:$0xff]
      %v279 = vld [vmem:[%s3] sm:$0x1]
      %v281 = vlaneseq
      %v282 = vshrl.u32 %v281, 7
      %v283 = vsub.s32 0, %v282
      %v284 = vrot.slane %v279, %v283
      %vm286 = vcmask 261120
      %v288 = vsel %vm286, %v272, 0
      %v291 = vsel %vm286, %v273, 0
      %v294 = vsel %vm286, %v274, 0
      %296 = vmatprep.subr.mxu0 0.0
      %297 = vmatpush1.msra.mxu0 %v275
      %298 = vmatprep.subr.mxu0 0.0
      %299 = vmatpush1.msra.mxu0 %v276
      %300 = vmatprep.subr.mxu0 0.0
      %301 = vmatpush1.msra.mxu0 %v277
      %302 = vmatprep.subr.mxu0 0.0
      %303 = vmatpush1.msra.mxu0 %v278
      %304 = vmatprep.subr.mxu0 0.0
      %305 = vmatpush1.msra.mxu0 0.0
      %306 = vmatprep.subr.mxu0 0.0
      %307 = vmatpush1.msra.mxu0 0.0
      %308 = vmatprep.subr.mxu0 0.0
      %309 = vmatpush1.msra.mxu0 0.0
      %310 = vmatprep.subr.mxu0 0.0
      %311 = vmatpush1.msra.mxu0 0.0
      %312 = vmatprep.subr.mxu0 0.0
      %313 = vmatpush1.msra.mxu0 0.0
      %314 = vmatprep.subr.mxu0 0.0
      %315 = vmatpush1.msra.mxu0 0.0
      %316 = vmatprep.subr.mxu0 0.0
      %317 = vmatpush1.msra.mxu0 0.0
      %318 = vmatprep.subr.mxu0 0.0
      %319 = vmatpush1.msra.mxu0 0.0
      %320 = vmatprep.subr.mxu0 0.0
      %321 = vmatpush1.msra.mxu0 0.0
      %322 = vmatprep.subr.mxu0 0.0
      %323 = vmatpush1.msra.mxu0 0.0
      %324 = vmatprep.subr.mxu0 0.0
      %325 = vmatpush1.msra.mxu0 0.0
      %326 = vmatprep.subr.mxu0 0.0
      %327 = vmatpush1.msra.mxu0 0.0
      %328 = vmatprep.subr.mxu0 0.0
      %329 = vmatpush1.msra.mxu0 0.0
      %330 = vmatprep.subr.mxu0 0.0
      %331 = vmatpush1.msra.mxu0 0.0
      %332 = vmatprep.subr.mxu0 0.0
      %333 = vmatpush1.msra.mxu0 0.0
      %334 = vmatprep.subr.mxu0 0.0
      %335 = vmatpush1.msra.mxu0 0.0
      %336 = vmatprep.subr.mxu0 0.0
      %337 = vmatpush1.msra.mxu0 0.0
      %338 = vmatprep.subr.mxu0 0.0
      %339 = vmatpush1.msra.mxu0 0.0
      %340 = vmatprep.subr.mxu0 0.0
      %341 = vmatpush1.msra.mxu0 0.0
      %342 = vmatprep.subr.mxu0 0.0
      %343 = vmatpush1.msra.mxu0 0.0
      %344 = vmatprep.subr.mxu0 0.0
      %345 = vmatpush1.msra.mxu0 0.0
      %346 = vmatprep.subr.mxu0 0.0
      %347 = vmatpush1.msra.mxu0 0.0
      %348 = vmatprep.subr.mxu0 0.0
      %349 = vmatpush1.msra.mxu0 0.0
      %350 = vmatprep.subr.mxu0 0.0
      %351 = vmatpush1.msra.mxu0 0.0
      %352 = vmatprep.subr.mxu0 0.0
      %353 = vmatpush1.msra.mxu0 0.0
      %354 = vmatprep.subr.mxu0 0.0
      %355 = vmatpush1.msra.mxu0 0.0
      %356 = vmatprep.subr.mxu0 0.0
      %357 = vmatpush1.msra.mxu0 0.0
      %358 = vmatprep.subr.mxu0 0.0
      %359 = vmatpush1.msra.mxu0 0.0
      %360 = vmatprep.mubr.f32.mxu0 0.0
      %361 = vmatmul.mubr.f32.gmra.mrb[0].mxu0 %v288
      %v362 = vpop.f32.mrb[0].mxu0
      %v363 = vadd.f32 %v284, %v362
      %v364 = vpop.f32.mrb[0].mxu0
      %365 = vmatprep.mubr.f32.mxu0 0.0
      %366 = vmatmul.mubr.f32.gmra.mrb[0].mxu0 %v291
      %v367 = vpop.f32.mrb[0].mxu0
      %v368 = vadd.f32 %v284, %v367
      %v369 = vpop.f32.mrb[0].mxu0
      %370 = vmatprep.mubr.f32.mxu0 0.0
      %371 = vmatmul.mubr.f32.gmra.mrb[0].mxu0 %v294
      %v372 = vpop.f32.mrb[0].mxu0
      %v373 = vadd.f32 %v284, %v372
      %v374 = vpop.f32.mrb[0].mxu0
      %375 = vdwg.mxu0
      %v376 = vld [vmem:[%s266] sm:$0xff]
      %v377 = vld [vmem:[%s266 + $0x8] sm:$0xff]
      %v378 = vld [vmem:[%s266 + $0x10] sm:$0x1]
      %v379 = vadd.f32 %v363, %v376
      %v380 = vadd.f32 %v368, %v377
      %v381 = vadd.f32 %v373, %v378
      %v382 = vsel %vm286, %v379, 0.0
      %383 = vadd.xlane.f32.xlu0 %v382
      %v384 = vpop.xlane.xlu0 %383
      %v385 = vsel %vm286, %v380, 0.0
      %386 = vadd.xlane.f32.xlu0 %v385
      %v387 = vpop.xlane.xlu0 %386
      %vm388 = vcmask 253952
      %v389 = vsel %vm388, %v381, 0.0
      %390 = vadd.xlane.f32.xlu0 %v389
      %v391 = vpop.xlane.xlu0 %390
      %v392 = vrcp.pop 32.0
      %v393 = vmul.f32 %v384, %v392
      %v394 = vmul.f32 %v387, %v392
      %v395 = vmul.f32 %v391, %v392
      %v396 = vsub.f32 %v379, %v393
      %v397 = vsub.f32 %v380, %v394
      %v398 = vsub.f32 %v381, %v395
      %v399 = vmul.f32 %v396, %v396
      %v400 = vmul.f32 %v397, %v397
      %v401 = vmul.f32 %v398, %v398
      %v402 = vsel %vm286, %v399, 0.0
      %403 = vadd.xlane.f32.xlu0 %v402
      %v404 = vpop.xlane.xlu0 %403
      %v405 = vsel %vm286, %v400, 0.0
      %406 = vadd.xlane.f32.xlu0 %v405
      %v407 = vpop.xlane.xlu0 %406
      %v408 = vsel %vm388, %v401, 0.0
      %409 = vadd.xlane.f32.xlu0 %v408
      %v410 = vpop.xlane.xlu0 %409
      %v411 = vmul.f32 %v404, %v392
      %v412 = vmul.f32 %v407, %v392
      %v413 = vmul.f32 %v410, %v392
      %v414 = vadd.f32 %v411, 1e-12
      %v415 = vadd.f32 %v412, 1e-12
      %v416 = vadd.f32 %v413, 1e-12
      %v417 = vrsqrt.pop %v414
      %v418 = vrsqrt.pop %v415
      %v419 = vrsqrt.pop %v416
      %v420 = vmul.f32 %v396, %v417
      %v421 = vmul.f32 %v397, %v418
      %v422 = vmul.f32 %v398, %v419
      %v423 = vld [vmem:[%s4] sm:$0x1]
      %v425 = vlaneseq
      %v426 = vshrl.u32 %v425, 7
      %v427 = vsub.s32 0, %v426
      %v428 = vrot.slane %v423, %v427
      %v430 = vmul.f32 %v420, %v428
      %v431 = vmul.f32 %v421, %v428
      %v432 = vmul.f32 %v422, %v428
      %v433 = vld [vmem:[%s5] sm:$0x1]
      %v435 = vlaneseq
      %v436 = vshrl.u32 %v435, 7
      %v437 = vsub.s32 0, %v436
      %v438 = vrot.slane %v433, %v437
      %v440 = vadd.f32 %v430, %v438
      %v441 = vadd.f32 %v431, %v438
      %v442 = vadd.f32 %v432, %v438
      %443 = vst.msk [vmem:[%s271] sm:$0xff] %vm286, %v440
      %444 = vst.msk [vmem:[%s271 + $0x8] sm:$0xff] %vm286, %v441
      %445 = vst.msk [vmem:[%s271 + $0x10] sm:$0x1] %vm388, %v442
      %p446 = scmp.lt.s32.totalorder %s17, 1
      %s447 = scalar_select %p446, %s17, 1
      %s448 = smul.addr %s447, 3
      %s449 = smul.addr %s448, 8
      %s450 = scalar_lea.vmem %s6, %s449
      // Predicated region
      $region45: #{anti_layer_segment.8} parent=43 // pred_check
        %p451 = pneg %p171
      $region46: #{anti_layer_segment.8} parent=43 // pred_check_branch
        %453 = sbr.rel (%p451) target = $region48
      $region47: #{anti_layer_segment.8} parent=43 // pred_region
        _
      $region48: #{anti_layer_segment.8} parent=43 // pred_fallthru
        _
    $region44: #{anti_layer_segment.8} parent=5 // pred_fallthru
      _
    %p454 = scmp.le.s32.totalorder 2, %s12
    // Predicated region
    $region49: #{anti_layer_segment.8} parent=5 // pred_check
      %p455 = pneg %p454
    $region50: #{anti_layer_segment.8} parent=5 // pred_check_branch
      %457 = sbr.rel (%p455) target = $region52
    $region51: #{anti_layer_segment.8} parent=5 // pred_region
      %s458 = ssub.s32 %s12, 2
      // Predicated region
      $region53: #{anti_layer_segment.8} parent=51 // pred_check
        %p459 = pneg %p177
      $region54: #{anti_layer_segment.8} parent=51 // pred_check_branch
        %461 = sbr.rel (%p459) target = $region56
      $region55: #{anti_layer_segment.8} parent=51 // pred_region
        %p462 = scmp.lt.s32.totalorder %s18, 1
        %s463 = scalar_select %p462, %s18, 1
        %s464 = smul.addr %s463, 3
        %s465 = smul.addr %s464, 8
        %s466 = scalar_lea.vmem %s6, %s465
      $region56: #{anti_layer_segment.8} parent=51 // pred_fallthru
        _
    $region52: #{anti_layer_segment.8} parent=5 // pred_fallthru
      _
  $region6: #{anti_layer_segment.8} parent=0 // loop_footer
    %s16 = sadd.s32 1, %s12
  $region7: #{anti_layer_segment.8} parent=0 // loop_footer_branch
    %11 = sbr.rel target = $region3
  $region8: #{anti_layer_segment.8} parent=0 // loop_exit
    _

// kernel: anti_layer_segment.9
$region0: #{anti_layer_segment.9}
  #allocation0 [shape = 'u32[]', space=smem, size = 0x4, offset = 0x4, fixed_abs, tag = 'smem constant byte address 0x4 - core index']
  #allocation1 [shape = 'u32[144,128]{1,0:T(1,128)}', space=vmem, size = 0x12000, scoped, tag = 'internal scratch']
  %s0 = inlined_call_operand.vmem [shape: f32[2,17,32], index: 0, kind: input, shape index: {}]
  %s1 = inlined_call_operand.vmem [shape: f32[32,128], index: 1, kind: input, shape index: {}]
  %s2 = inlined_call_operand.vmem [shape: f32[1,128], index: 2, kind: input, shape index: {}]
  %s3 = inlined_call_operand.vmem [shape: f32[128,32], index: 3, kind: input, shape index: {}]
  %s4 = inlined_call_operand.vmem [shape: f32[1,32], index: 4, kind: input, shape index: {}]
  %s5 = inlined_call_operand.vmem [shape: f32[1,32], index: 5, kind: input, shape index: {}]
  %s6 = inlined_call_operand.vmem [shape: f32[1,32], index: 6, kind: input, shape index: {}]
  %s7 = inlined_call_operand.vmem [shape: f32[2,17,32], index: 7, kind: output, shape index: {}]
  %s8 = sld [smem:[#allocation0]]
  $region61: #{anti_layer_segment.9} parent=0
    _
  %s10 = ssub.s32 1, %s8
  %s11 = scalar_select 0, %s10, %s8
  loop: start=0, step=1, limit=4
  $region2: #{anti_layer_segment.9} parent=0 // loop_pre_header
    _
  $region3: #{anti_layer_segment.9} parent=0 // loop_header
    %s13 = sphi 0, %s17
    %p14 = scmp.ge.s32.totalorder %s13, 4
    %s23 = sphi 0, %s25
    %s26 = sphi 0, %s23
    %s27 = sphi 0, %s26
    %s43 = sphi 0, %s27
    %s47 = sphi 0, %s47
    %s49 = sphi 0, %s47
    %s50 = sphi 0, %s49
    %s64 = sphi 0, %s50
    %s68 = sphi 0, %s68
    %s70 = sphi 0, %s68
    %s71 = sphi 0, %s70
    %s85 = sphi 0, %s71
    %s89 = sphi 0, %s89
    %s91 = sphi 0, %s89
    %s92 = sphi 0, %s91
    %s106 = sphi 0, %s92
    %s110 = sphi 0, %s110
    %s112 = sphi 0, %s110
    %s113 = sphi 0, %s112
    %s127 = sphi 0, %s113
    %s131 = sphi 0, %s131
    %s133 = sphi 0, %s131
    %s134 = sphi 0, %s133
    %s148 = sphi 0, %s134
    %s152 = sphi 0, %s152
    %s154 = sphi 0, %s152
    %s155 = sphi 0, %s154
    %s169 = sphi 0, %s155
    %s175 = sphi 0, %s177
    %s178 = sphi 0, %s175
    %s179 = sphi 0, %s178
    %s195 = sphi 0, %s179
  $region4: #{anti_layer_segment.9} parent=0 // loop_header_branch
    %16 = sbr.rel (%p14) target = $region8
  $region5: #{anti_layer_segment.9} parent=0 // loop_body
    %s18 = ssub.s32 %s13, 1
    %s19 = ssub.s32 %s13, 2
    %s20 = sadd.s32 %s13, 1
    %s21 = ssub.s32 %s13, %s20
    %p22 = scmp.eq.s32.totalorder %s21, 0
    %s24 = sadd.s32 %s23, 1
    %s25 = scalar_select %p22, %s23, %s24
    %p28 = pneg %p22
    %p29 = scmp.eq.s32.totalorder %s13, 1
    %p30 = por %p28, %p29
    %p31 = scmp.ne.s32.totalorder %s23, %s26
    %p32 = scmp.eq.s32.totalorder %s13, 0
    %p33 = por %p31, %p32
    %p34 = scmp.ne.s32.totalorder %s23, %s26
    %p35 = scmp.eq.s32.totalorder %s18, 1
    %p36 = por %p34, %p35
    %p37 = scmp.ne.s32.totalorder %s26, %s27
    %p38 = scmp.eq.s32.totalorder %s18, 0
    %p39 = por %p37, %p38
    %p40 = scmp.ne.s32.totalorder %s26, %s27
    %p41 = scmp.eq.s32.totalorder %s19, 1
    %p42 = por %p40, %p41
    %p44 = scmp.ne.s32.totalorder %s27, %s43
    %p45 = scmp.eq.s32.totalorder %s19, 0
    %p46 = por %p44, %p45
    %s48 = sadd.s32 %s47, 1
    %p51 = scmp.eq.s32.totalorder %s13, 1
    %p52 = scmp.ne.s32.totalorder %s47, %s49
    %p53 = scmp.eq.s32.totalorder %s13, 0
    %p54 = por %p52, %p53
    %p55 = scmp.ne.s32.totalorder %s47, %s49
    %p56 = scmp.eq.s32.totalorder %s18, 1
    %p57 = por %p55, %p56
    %p58 = scmp.ne.s32.totalorder %s49, %s50
    %p59 = scmp.eq.s32.totalorder %s18, 0
    %p60 = por %p58, %p59
    %p61 = scmp.ne.s32.totalorder %s49, %s50
    %p62 = scmp.eq.s32.totalorder %s19, 1
    %p63 = por %p61, %p62
    %p65 = scmp.ne.s32.totalorder %s50, %s64
    %p66 = scmp.eq.s32.totalorder %s19, 0
    %p67 = por %p65, %p66
    %s69 = sadd.s32 %s68, 1
    %p72 = scmp.eq.s32.totalorder %s13, 1
    %p73 = scmp.ne.s32.totalorder %s68, %s70
    %p74 = scmp.eq.s32.totalorder %s13, 0
    %p75 = por %p73, %p74
    %p76 = scmp.ne.s32.totalorder %s68, %s70
    %p77 = scmp.eq.s32.totalorder %s18, 1
    %p78 = por %p76, %p77
    %p79 = scmp.ne.s32.totalorder %s70, %s71
    %p80 = scmp.eq.s32.totalorder %s18, 0
    %p81 = por %p79, %p80
    %p82 = scmp.ne.s32.totalorder %s70, %s71
    %p83 = scmp.eq.s32.totalorder %s19, 1
    %p84 = por %p82, %p83
    %p86 = scmp.ne.s32.totalorder %s71, %s85
    %p87 = scmp.eq.s32.totalorder %s19, 0
    %p88 = por %p86, %p87
    %s90 = sadd.s32 %s89, 1
    %p93 = scmp.eq.s32.totalorder %s13, 1
    %p94 = scmp.ne.s32.totalorder %s89, %s91
    %p95 = scmp.eq.s32.totalorder %s13, 0
    %p96 = por %p94, %p95
    %p97 = scmp.ne.s32.totalorder %s89, %s91
    %p98 = scmp.eq.s32.totalorder %s18, 1
    %p99 = por %p97, %p98
    %p100 = scmp.ne.s32.totalorder %s91, %s92
    %p101 = scmp.eq.s32.totalorder %s18, 0
    %p102 = por %p100, %p101
    %p103 = scmp.ne.s32.totalorder %s91, %s92
    %p104 = scmp.eq.s32.totalorder %s19, 1
    %p105 = por %p103, %p104
    %p107 = scmp.ne.s32.totalorder %s92, %s106
    %p108 = scmp.eq.s32.totalorder %s19, 0
    %p109 = por %p107, %p108
    %s111 = sadd.s32 %s110, 1
    %p114 = scmp.eq.s32.totalorder %s13, 1
    %p115 = scmp.ne.s32.totalorder %s110, %s112
    %p116 = scmp.eq.s32.totalorder %s13, 0
    %p117 = por %p115, %p116
    %p118 = scmp.ne.s32.totalorder %s110, %s112
    %p119 = scmp.eq.s32.totalorder %s18, 1
    %p120 = por %p118, %p119
    %p121 = scmp.ne.s32.totalorder %s112, %s113
    %p122 = scmp.eq.s32.totalorder %s18, 0
    %p123 = por %p121, %p122
    %p124 = scmp.ne.s32.totalorder %s112, %s113
    %p125 = scmp.eq.s32.totalorder %s19, 1
    %p126 = por %p124, %p125
    %p128 = scmp.ne.s32.totalorder %s113, %s127
    %p129 = scmp.eq.s32.totalorder %s19, 0
    %p130 = por %p128, %p129
    %s132 = sadd.s32 %s131, 1
    %p135 = scmp.eq.s32.totalorder %s13, 1
    %p136 = scmp.ne.s32.totalorder %s131, %s133
    %p137 = scmp.eq.s32.totalorder %s13, 0
    %p138 = por %p136, %p137
    %p139 = scmp.ne.s32.totalorder %s131, %s133
    %p140 = scmp.eq.s32.totalorder %s18, 1
    %p141 = por %p139, %p140
    %p142 = scmp.ne.s32.totalorder %s133, %s134
    %p143 = scmp.eq.s32.totalorder %s18, 0
    %p144 = por %p142, %p143
    %p145 = scmp.ne.s32.totalorder %s133, %s134
    %p146 = scmp.eq.s32.totalorder %s19, 1
    %p147 = por %p145, %p146
    %p149 = scmp.ne.s32.totalorder %s134, %s148
    %p150 = scmp.eq.s32.totalorder %s19, 0
    %p151 = por %p149, %p150
    %s153 = sadd.s32 %s152, 1
    %p156 = scmp.eq.s32.totalorder %s13, 1
    %p157 = scmp.ne.s32.totalorder %s152, %s154
    %p158 = scmp.eq.s32.totalorder %s13, 0
    %p159 = por %p157, %p158
    %p160 = scmp.ne.s32.totalorder %s152, %s154
    %p161 = scmp.eq.s32.totalorder %s18, 1
    %p162 = por %p160, %p161
    %p163 = scmp.ne.s32.totalorder %s154, %s155
    %p164 = scmp.eq.s32.totalorder %s18, 0
    %p165 = por %p163, %p164
    %p166 = scmp.ne.s32.totalorder %s154, %s155
    %p167 = scmp.eq.s32.totalorder %s19, 1
    %p168 = por %p166, %p167
    %p170 = scmp.ne.s32.totalorder %s155, %s169
    %p171 = scmp.eq.s32.totalorder %s19, 0
    %p172 = por %p170, %p171
    %s173 = ssub.s32 %s13, %s20
    %p174 = scmp.eq.s32.totalorder %s173, 0
    %s176 = sadd.s32 %s175, 1
    %s177 = scalar_select %p174, %s175, %s176
    %p180 = pneg %p174
    %p181 = scmp.eq.s32.totalorder %s13, 1
    %p182 = por %p180, %p181
    %p183 = scmp.ne.s32.totalorder %s175, %s178
    %p184 = scmp.eq.s32.totalorder %s13, 0
    %p185 = por %p183, %p184
    %p186 = scmp.ne.s32.totalorder %s175, %s178
    %p187 = scmp.eq.s32.totalorder %s18, 1
    %p188 = por %p186, %p187
    %p189 = scmp.ne.s32.totalorder %s178, %s179
    %p190 = scmp.eq.s32.totalorder %s18, 0
    %p191 = por %p189, %p190
    %p192 = scmp.ne.s32.totalorder %s178, %s179
    %p193 = scmp.eq.s32.totalorder %s19, 1
    %p194 = por %p192, %p193
    %p196 = scmp.ne.s32.totalorder %s179, %s195
    %p197 = scmp.eq.s32.totalorder %s19, 0
    %p198 = por %p196, %p197
    %p199 = scmp.le.s32.totalorder 1, %s13
    %p200 = scmp.lt.s32.totalorder %s13, 3
    %p201 = pnand %p199, %p200
    %p202 = pneg %p201
    // Predicated region
    $region9: #{anti_layer_segment.9} parent=5 // pred_check
      _
    $region10: #{anti_layer_segment.9} parent=5 // pred_check_branch
      %204 = sbr.rel (%p201) target = $region12
    $region11: #{anti_layer_segment.9} parent=5 // pred_region
      %s205 = ssub.s32 %s13, 1
      // Predicated region
      $region13: #{anti_layer_segment.9} parent=11 // pred_check
        %p206 = pneg %p60
      $region14: #{anti_layer_segment.9} parent=11 // pred_check_branch
        %208 = sbr.rel (%p206) target = $region16
      $region15: #{anti_layer_segment.9} parent=11 // pred_region
        _
      $region16: #{anti_layer_segment.9} parent=11 // pred_fallthru
        _
      // Predicated region
      $region17: #{anti_layer_segment.9} parent=11 // pred_check
        %p209 = pneg %p81
      $region18: #{anti_layer_segment.9} parent=11 // pred_check_branch
        %211 = sbr.rel (%p209) target = $region20
      $region19: #{anti_layer_segment.9} parent=11 // pred_region
        _
      $region20: #{anti_layer_segment.9} parent=11 // pred_fallthru
        _
      // Predicated region
      $region21: #{anti_layer_segment.9} parent=11 // pred_check
        %p212 = pneg %p102
      $region22: #{anti_layer_segment.9} parent=11 // pred_check_branch
        %214 = sbr.rel (%p212) target = $region24
      $region23: #{anti_layer_segment.9} parent=11 // pred_region
        _
      $region24: #{anti_layer_segment.9} parent=11 // pred_fallthru
        _
      // Predicated region
      $region25: #{anti_layer_segment.9} parent=11 // pred_check
        %p215 = pneg %p123
      $region26: #{anti_layer_segment.9} parent=11 // pred_check_branch
        %217 = sbr.rel (%p215) target = $region28
      $region27: #{anti_layer_segment.9} parent=11 // pred_region
        _
      $region28: #{anti_layer_segment.9} parent=11 // pred_fallthru
        _
      // Predicated region
      $region29: #{anti_layer_segment.9} parent=11 // pred_check
        %p218 = pneg %p144
      $region30: #{anti_layer_segment.9} parent=11 // pred_check_branch
        %220 = sbr.rel (%p218) target = $region32
      $region31: #{anti_layer_segment.9} parent=11 // pred_region
        _
      $region32: #{anti_layer_segment.9} parent=11 // pred_fallthru
        _
      // Predicated region
      $region33: #{anti_layer_segment.9} parent=11 // pred_check
        %p221 = pneg %p165
      $region34: #{anti_layer_segment.9} parent=11 // pred_check_branch
        %223 = sbr.rel (%p221) target = $region36
      $region35: #{anti_layer_segment.9} parent=11 // pred_region
        _
      $region36: #{anti_layer_segment.9} parent=11 // pred_fallthru
        _
    $region12: #{anti_layer_segment.9} parent=5 // pred_fallthru
      _
    %p224 = scmp.lt.s32.totalorder %s13, 2
    // Predicated region
    $region37: #{anti_layer_segment.9} parent=5 // pred_check
      %p225 = pneg %p224
    $region38: #{anti_layer_segment.9} parent=5 // pred_check_branch
      %227 = sbr.rel (%p225) target = $region40
    $region39: #{anti_layer_segment.9} parent=5 // pred_region
      // Predicated region
      $region41: #{anti_layer_segment.9} parent=39 // pred_check
        %p228 = pneg %p33
      $region42: #{anti_layer_segment.9} parent=39 // pred_check_branch
        %230 = sbr.rel (%p228) target = $region44
      $region43: #{anti_layer_segment.9} parent=39 // pred_region
        %p231 = scmp.lt.s32.totalorder %s13, 1
        %s232 = scalar_select %p231, %s13, 1
        %s233 = smul.addr %s232, 3
        %s234 = smul.addr %s233, 8
        %s235 = scalar_lea.vmem %s0, %s234
      $region44: #{anti_layer_segment.9} parent=39 // pred_fallthru
        _
    $region40: #{anti_layer_segment.9} parent=5 // pred_fallthru
      _
    %p236 = scmp.le.s32.totalorder 1, %s13
    %p237 = scmp.lt.s32.totalorder %s13, 3
    %p238 = pnand %p236, %p237
    %p239 = pneg %p238
    // Predicated region
    $region45: #{anti_layer_segment.9} parent=5 // pred_check
      _
    $region46: #{anti_layer_segment.9} parent=5 // pred_check_branch
      %241 = sbr.rel (%p238) target = $region48
    $region47: #{anti_layer_segment.9} parent=5 // pred_region
      %s242 = ssub.s32 %s13, 1
      %p243 = scmp.lt.s32.totalorder %s18, 1
      %s244 = scalar_select %p243, %s18, 1
      %s245 = smul.addr %s244, 3
      %s246 = smul.addr %s245, 8
      %s247 = scalar_lea.vmem %s0, %s246
      %p248 = pneg %p39
      %p249 = pneg %p36
      %p250 = pneg %p60
      %p251 = pneg %p57
      %p252 = pneg %p81
      %p253 = pneg %p78
      %p254 = pneg %p102
      %p255 = pneg %p99
      %p256 = pneg %p123
      %p257 = pneg %p120
      %p258 = pneg %p144
      %p259 = pneg %p141
      %p260 = pneg %p165
      %p261 = pneg %p162
      %p262 = pneg %p191
      %p263 = pneg %p188
      %p264 = scmp.lt.s32.totalorder %s18, 1
      %s265 = scalar_select %p264, %s18, 1
      %s266 = smul.addr %s265, 3
      %s267 = smul.addr %s266, 8
      %s268 = scalar_lea.vmem %s7, %s267
      %p269 = scmp.lt.s32.totalorder %s18, 1
      %s270 = scalar_select %p269, %s18, 1
      %s271 = smul.addr %s270, 3
      %s272 = smul.addr %s271, 8
      %s273 = scalar_lea.vmem %s0, %s272
      %p274 = scmp.lt.s32.totalorder %s18, 1
      %s275 = scalar_select %p274, %s18, 1
      %s276 = smul.addr %s275, 3
      %s277 = smul.addr %s276, 8
      %s278 = scalar_lea.vmem %s7, %s277
      %v279 = vld [vmem:[%s273] sm:$0xff]
      %v280 = vld [vmem:[%s273 + $0x8] sm:$0xff]
      %v281 = vld [vmem:[%s273 + $0x10] sm:$0x1]
      %v282 = vld [vmem:[%s1] sm:$0xff]
      %v283 = vld [vmem:[%s1 + $0x8] sm:$0xff]
      %v284 = vld [vmem:[%s1 + $0x10] sm:$0xff]
      %v285 = vld [vmem:[%s1 + $0x18] sm:$0xff]
      %v286 = vld [vmem:[%s2] sm:$0x1]
      %v288 = vlaneseq
      %v289 = vshrl.u32 %v288, 7
      %v290 = vsub.s32 0, %v289
      %v291 = vrot.slane %v286, %v290
      %vm293 = vcmask 261120
      %v295 = vsel %vm293, %v279, 0
      %v298 = vsel %vm293, %v280, 0
      %v301 = vsel %vm293, %v281, 0
      %303 = vmatprep.subr.mxu0 0.0
      %304 = vmatpush1.msra.mxu0 %v282
      %305 = vmatprep.subr.mxu0 0.0
      %306 = vmatpush1.msra.mxu0 %v283
      %307 = vmatprep.subr.mxu0 0.0
      %308 = vmatpush1.msra.mxu0 %v284
      %309 = vmatprep.subr.mxu0 0.0
      %310 = vmatpush1.msra.mxu0 %v285
      %311 = vmatprep.subr.mxu0 0.0
      %312 = vmatpush1.msra.mxu0 0.0
      %313 = vmatprep.subr.mxu0 0.0
      %314 = vmatpush1.msra.mxu0 0.0
      %315 = vmatprep.subr.mxu0 0.0
      %316 = vmatpush1.msra.mxu0 0.0
      %317 = vmatprep.subr.mxu0 0.0
      %318 = vmatpush1.msra.mxu0 0.0
      %319 = vmatprep.subr.mxu0 0.0
      %320 = vmatpush1.msra.mxu0 0.0
      %321 = vmatprep.subr.mxu0 0.0
      %322 = vmatpush1.msra.mxu0 0.0
      %323 = vmatprep.subr.mxu0 0.0
      %324 = vmatpush1.msra.mxu0 0.0
      %325 = vmatprep.subr.mxu0 0.0
      %326 = vmatpush1.msra.mxu0 0.0
      %327 = vmatprep.subr.mxu0 0.0
      %328 = vmatpush1.msra.mxu0 0.0
      %329 = vmatprep.subr.mxu0 0.0
      %330 = vmatpush1.msra.mxu0 0.0
      %331 = vmatprep.subr.mxu0 0.0
      %332 = vmatpush1.msra.mxu0 0.0
      %333 = vmatprep.subr.mxu0 0.0
      %334 = vmatpush1.msra.mxu0 0.0
      %335 = vmatprep.subr.mxu0 0.0
      %336 = vmatpush1.msra.mxu0 0.0
      %337 = vmatprep.subr.mxu0 0.0
      %338 = vmatpush1.msra.mxu0 0.0
      %339 = vmatprep.subr.mxu0 0.0
      %340 = vmatpush1.msra.mxu0 0.0
      %341 = vmatprep.subr.mxu0 0.0
      %342 = vmatpush1.msra.mxu0 0.0
      %343 = vmatprep.subr.mxu0 0.0
      %344 = vmatpush1.msra.mxu0 0.0
      %345 = vmatprep.subr.mxu0 0.0
      %346 = vmatpush1.msra.mxu0 0.0
      %347 = vmatprep.subr.mxu0 0.0
      %348 = vmatpush1.msra.mxu0 0.0
      %349 = vmatprep.subr.mxu0 0.0
      %350 = vmatpush1.msra.mxu0 0.0
      %351 = vmatprep.subr.mxu0 0.0
      %352 = vmatpush1.msra.mxu0 0.0
      %353 = vmatprep.subr.mxu0 0.0
      %354 = vmatpush1.msra.mxu0 0.0
      %355 = vmatprep.subr.mxu0 0.0
      %356 = vmatpush1.msra.mxu0 0.0
      %357 = vmatprep.subr.mxu0 0.0
      %358 = vmatpush1.msra.mxu0 0.0
      %359 = vmatprep.subr.mxu0 0.0
      %360 = vmatpush1.msra.mxu0 0.0
      %361 = vmatprep.subr.mxu0 0.0
      %362 = vmatpush1.msra.mxu0 0.0
      %363 = vmatprep.subr.mxu0 0.0
      %364 = vmatpush1.msra.mxu0 0.0
      %365 = vmatprep.subr.mxu0 0.0
      %366 = vmatpush1.msra.mxu0 0.0
      %367 = vmatprep.mubr.f32.mxu0 0.0
      %368 = vmatmul.mubr.f32.gmra.mrb[0].mxu0 %v295
      %v369 = vpop.f32.mrb[0].mxu0
      %v370 = vadd.f32 %v291, %v369
      %v371 = vpop.f32.mrb[0].mxu0
      %372 = vmatprep.mubr.f32.mxu0 0.0
      %373 = vmatmul.mubr.f32.gmra.mrb[0].mxu0 %v298
      %v374 = vpop.f32.mrb[0].mxu0
      %v375 = vadd.f32 %v291, %v374
      %v376 = vpop.f32.mrb[0].mxu0
      %377 = vmatprep.mubr.f32.mxu0 0.0
      %378 = vmatmul.mubr.f32.gmra.mrb[0].mxu0 %v301
      %v379 = vpop.f32.mrb[0].mxu0
      %v380 = vadd.f32 %v291, %v379
      %v381 = vpop.f32.mrb[0].mxu0
      %382 = vdwg.mxu0
      %v383 = vmul.f32 %v370, 0.5
      %v384 = vmul.f32 %v375, 0.5
      %v385 = vmul.f32 %v380, 0.5
      %v386 = vmul.f32 %v370, 0.044715
      %v387 = vmul.f32 %v375, 0.044715
      %v388 = vmul.f32 %v380, 0.044715
      %v389 = vmul.f32 %v386, %v370
      %v390 = vmul.f32 %v387, %v375
      %v391 = vmul.f32 %v388, %v380
      %v392 = vmul.f32 %v389, %v370
      %v393 = vmul.f32 %v390, %v375
      %v394 = vmul.f32 %v391, %v380
      %v395 = vadd.f32 %v370, %v392
      %v396 = vadd.f32 %v375, %v393
      %v397 = vadd.f32 %v380, %v394
      %v398 = vmul.f32 %v395, 0.7978846
      %v399 = vmul.f32 %v396, 0.7978846
      %v400 = vmul.f32 %v397, 0.7978846
      %v401 = vtanh.pop %v398
      %v402 = vtanh.pop %v399
      %v403 = vtanh.pop %v400
      %v404 = vadd.f32 %v401, 1.0
      %v405 = vadd.f32 %v402, 1.0
      %v406 = vadd.f32 %v403, 1.0
      %v407 = vmul.f32 %v383, %v404
      %v408 = vmul.f32 %v384, %v405
      %v409 = vmul.f32 %v385, %v406
      %v410 = vld [vmem:[%s3] sm:$0xff]
      %v411 = vld [vmem:[%s3 + $0x8] sm:$0xff]
      %v412 = vld [vmem:[%s3 + $0x10] sm:$0xff]
      %v413 = vld [vmem:[%s3 + $0x18] sm:$0xff]
      %v414 = vld [vmem:[%s3 + $0x20] sm:$0xff]
      %v415 = vld [vmem:[%s3 + $0x28] sm:$0xff]
      %v416 = vld [vmem:[%s3 + $0x30] sm:$0xff]
      %v417 = vld [vmem:[%s3 + $0x38] sm:$0xff]
      %v418 = vld [vmem:[%s3 + $0x40] sm:$0xff]
      %v419 = vld [vmem:[%s3 + $0x48] sm:$0xff]
      %v420 = vld [vmem:[%s3 + $0x50] sm:$0xff]
      %v421 = vld [vmem:[%s3 + $0x58] sm:$0xff]
      %v422 = vld [vmem:[%s3 + $0x60] sm:$0xff]
      %v423 = vld [vmem:[%s3 + $0x68] sm:$0xff]
      %v424 = vld [vmem:[%s3 + $0x70] sm:$0xff]
      %v425 = vld [vmem:[%s3 + $0x78] sm:$0xff]
      %v426 = vld [vmem:[%s4] sm:$0x1]
      %v428 = vlaneseq
      %v429 = vshrl.u32 %v428, 7
      %v430 = vsub.s32 0, %v429
      %v431 = vrot.slane %v426, %v430
      %433 = vmatprep.subr.mxu0 0.0
      %434 = vmatpush1.msra.mxu0 %v410
      %435 = vmatprep.subr.mxu0 0.0
      %436 = vmatpush1.msra.mxu0 %v411
      %437 = vmatprep.subr.mxu0 0.0
      %438 = vmatpush1.msra.mxu0 %v412
      %439 = vmatprep.subr.mxu0 0.0
      %440 = vmatpush1.msra.mxu0 %v413
      %441 = vmatprep.subr.mxu0 0.0
      %442 = vmatpush1.msra.mxu0 %v414
      %443 = vmatprep.subr.mxu0 0.0
      %444 = vmatpush1.msra.mxu0 %v415
      %445 = vmatprep.subr.mxu0 0.0
      %446 = vmatpush1.msra.mxu0 %v416
      %447 = vmatprep.subr.mxu0 0.0
      %448 = vmatpush1.msra.mxu0 %v417
      %449 = vmatprep.subr.mxu0 0.0
      %450 = vmatpush1.msra.mxu0 %v418
      %451 = vmatprep.subr.mxu0 0.0
      %452 = vmatpush1.msra.mxu0 %v419
      %453 = vmatprep.subr.mxu0 0.0
      %454 = vmatpush1.msra.mxu0 %v420
      %455 = vmatprep.subr.mxu0 0.0
      %456 = vmatpush1.msra.mxu0 %v421
      %457 = vmatprep.subr.mxu0 0.0
      %458 = vmatpush1.msra.mxu0 %v422
      %459 = vmatprep.subr.mxu0 0.0
      %460 = vmatpush1.msra.mxu0 %v423
      %461 = vmatprep.subr.mxu0 0.0
      %462 = vmatpush1.msra.mxu0 %v424
      %463 = vmatprep.subr.mxu0 0.0
      %464 = vmatpush1.msra.mxu0 %v425
      %465 = vmatprep.subr.mxu0 0.0
      %466 = vmatpush1.msra.mxu0 0.0
      %467 = vmatprep.subr.mxu0 0.0
      %468 = vmatpush1.msra.mxu0 0.0
      %469 = vmatprep.subr.mxu0 0.0
      %470 = vmatpush1.msra.mxu0 0.0
      %471 = vmatprep.subr.mxu0 0.0
      %472 = vmatpush1.msra.mxu0 0.0
      %473 = vmatprep.subr.mxu0 0.0
      %474 = vmatpush1.msra.mxu0 0.0
      %475 = vmatprep.subr.mxu0 0.0
      %476 = vmatpush1.msra.mxu0 0.0
      %477 = vmatprep.subr.mxu0 0.0
      %478 = vmatpush1.msra.mxu0 0.0
      %479 = vmatprep.subr.mxu0 0.0
      %480 = vmatpush1.msra.mxu0 0.0
      %481 = vmatprep.subr.mxu0 0.0
      %482 = vmatpush1.msra.mxu0 0.0
      %483 = vmatprep.subr.mxu0 0.0
      %484 = vmatpush1.msra.mxu0 0.0
      %485 = vmatprep.subr.mxu0 0.0
      %486 = vmatpush1.msra.mxu0 0.0
      %487 = vmatprep.subr.mxu0 0.0
      %488 = vmatpush1.msra.mxu0 0.0
      %489 = vmatprep.subr.mxu0 0.0
      %490 = vmatpush1.msra.mxu0 0.0
      %491 = vmatprep.subr.mxu0 0.0
      %492 = vmatpush1.msra.mxu0 0.0
      %493 = vmatprep.subr.mxu0 0.0
      %494 = vmatpush1.msra.mxu0 0.0
      %495 = vmatprep.subr.mxu0 0.0
      %496 = vmatpush1.msra.mxu0 0.0
      %497 = vmatprep.mubr.f32.mxu0 0.0
      %498 = vmatmul.mubr.f32.gmra.mrb[0].mxu0 %v407
      %v499 = vpop.f32.mrb[0].mxu0
      %v500 = vadd.f32 %v431, %v499
      %v501 = vpop.f32.mrb[0].mxu0
      %502 = vmatprep.mubr.f32.mxu0 0.0
      %503 = vmatmul.mubr.f32.gmra.mrb[0].mxu0 %v408
      %v504 = vpop.f32.mrb[0].mxu0
      %v505 = vadd.f32 %v431, %v504
      %v506 = vpop.f32.mrb[0].mxu0
      %507 = vmatprep.mubr.f32.mxu0 0.0
      %508 = vmatmul.mubr.f32.gmra.mrb[0].mxu0 %v409
      %v509 = vpop.f32.mrb[0].mxu0
      %v510 = vadd.f32 %v431, %v509
      %v511 = vpop.f32.mrb[0].mxu0
      %512 = vdwg.mxu0
      %v513 = vadd.f32 %v500, %v279
      %v514 = vadd.f32 %v505, %v280
      %v515 = vadd.f32 %v510, %v281
      %v516 = vsel %vm293, %v513, 0.0
      %517 = vadd.xlane.f32.xlu0 %v516
      %v518 = vpop.xlane.xlu0 %517
      %v519 = vsel %vm293, %v514, 0.0
      %520 = vadd.xlane.f32.xlu0 %v519
      %v521 = vpop.xlane.xlu0 %520
      %vm522 = vcmask 253952
      %v523 = vsel %vm522, %v515, 0.0
      %524 = vadd.xlane.f32.xlu0 %v523
      %v525 = vpop.xlane.xlu0 %524
      %v526 = vrcp.pop 32.0
      %v527 = vmul.f32 %v518, %v526
      %v528 = vmul.f32 %v521, %v526
      %v529 = vmul.f32 %v525, %v526
      %v530 = vsub.f32 %v513, %v527
      %v531 = vsub.f32 %v514, %v528
      %v532 = vsub.f32 %v515, %v529
      %v533 = vmul.f32 %v530, %v530
      %v534 = vmul.f32 %v531, %v531
      %v535 = vmul.f32 %v532, %v532
      %v536 = vsel %vm293, %v533, 0.0
      %537 = vadd.xlane.f32.xlu0 %v536
      %v538 = vpop.xlane.xlu0 %537
      %v539 = vsel %vm293, %v534, 0.0
      %540 = vadd.xlane.f32.xlu0 %v539
      %v541 = vpop.xlane.xlu0 %540
      %v542 = vsel %vm522, %v535, 0.0
      %543 = vadd.xlane.f32.xlu0 %v542
      %v544 = vpop.xlane.xlu0 %543
      %v545 = vmul.f32 %v538, %v526
      %v546 = vmul.f32 %v541, %v526
      %v547 = vmul.f32 %v544, %v526
      %v548 = vadd.f32 %v545, 1e-12
      %v549 = vadd.f32 %v546, 1e-12
      %v550 = vadd.f32 %v547, 1e-12
      %v551 = vrsqrt.pop %v548
      %v552 = vrsqrt.pop %v549
      %v553 = vrsqrt.pop %v550
      %v554 = vmul.f32 %v530, %v551
      %v555 = vmul.f32 %v531, %v552
      %v556 = vmul.f32 %v532, %v553
      %v557 = vld [vmem:[%s5] sm:$0x1]
      %v559 = vlaneseq
      %v560 = vshrl.u32 %v559, 7
      %v561 = vsub.s32 0, %v560
      %v562 = vrot.slane %v557, %v561
      %v564 = vmul.f32 %v554, %v562
      %v565 = vmul.f32 %v555, %v562
      %v566 = vmul.f32 %v556, %v562
      %v567 = vld [vmem:[%s6] sm:$0x1]
      %v569 = vlaneseq
      %v570 = vshrl.u32 %v569, 7
      %v571 = vsub.s32 0, %v570
      %v572 = vrot.slane %v567, %v571
      %v574 = vadd.f32 %v564, %v572
      %v575 = vadd.f32 %v565, %v572
      %v576 = vadd.f32 %v566, %v572
      %577 = vst.msk [vmem:[%s278] sm:$0xff] %vm293, %v574
      %578 = vst.msk [vmem:[%s278 + $0x8] sm:$0xff] %vm293, %v575
      %579 = vst.msk [vmem:[%s278 + $0x10] sm:$0x1] %vm522, %v576
      %p580 = scmp.lt.s32.totalorder %s18, 1
      %s581 = scalar_select %p580, %s18, 1
      %s582 = smul.addr %s581, 3
      %s583 = smul.addr %s582, 8
      %s584 = scalar_lea.vmem %s7, %s583
      // Predicated region
      $region49: #{anti_layer_segment.9} parent=47 // pred_check
        %p585 = pneg %p188
      $region50: #{anti_layer_segment.9} parent=47 // pred_check_branch
        %587 = sbr.rel (%p585) target = $region52
      $region51: #{anti_layer_segment.9} parent=47 // pred_region
        _
      $region52: #{anti_layer_segment.9} parent=47 // pred_fallthru
        _
    $region48: #{anti_layer_segment.9} parent=5 // pred_fallthru
      _
    %p588 = scmp.le.s32.totalorder 2, %s13
    // Predicated region
    $region53: #{anti_layer_segment.9} parent=5 // pred_check
      %p589 = pneg %p588
    $region54: #{anti_layer_segment.9} parent=5 // pred_check_branch
      %591 = sbr.rel (%p589) target = $region56
    $region55: #{anti_layer_segment.9} parent=5 // pred_region
      %s592 = ssub.s32 %s13, 2
      // Predicated region
      $region57: #{anti_layer_segment.9} parent=55 // pred_check
        %p593 = pneg %p194
      $region58: #{anti_layer_segment.9} parent=55 // pred_check_branch
        %595 = sbr.rel (%p593) target = $region60
      $region59: #{anti_layer_segment.9} parent=55 // pred_region
        %p596 = scmp.lt.s32.totalorder %s19, 1
        %s597 = scalar_select %p596, %s19, 1
        %s598 = smul.addr %s597, 3
        %s599 = smul.addr %s598, 8
        %s600 = scalar_lea.vmem %s7, %s599
      $region60: #{anti_layer_segment.9} parent=55 // pred_fallthru
        _
    $region56: #{anti_layer_segment.9} parent=5 // pred_fallthru
      _
  $region6: #{anti_layer_segment.9} parent=0 // loop_footer
    %s17 = sadd.s32 1, %s13
  $region7: #{anti_layer_segment.9} parent=0 // loop_footer_branch
    %12 = sbr.rel target = $region3
  $region8: #{anti_layer_segment.9} parent=0 // loop_exit
    _

</llo_original>
